<compile_context>
chip_gen: v7x
topology: tpu7x:2x2x1
jax: 0.10.0
libtpu: 0.0.40
codegen_flags: <defaults>
</compile_context>

<pallas_src>
import functools
from typing import NamedTuple

import numpy as np
import jax
import jax.numpy as jnp
from jax.experimental import pallas as pl
from jax.experimental.pallas import tpu as pltpu

LANE = 128   # every matmul operand is zero-padded to 128 lanes
SUB = 8      # f32 sublane granularity for row padding


class Config(NamedTuple):
    batch: int
    tile_batch: int
    state_dim: int
    action_dim: int
    hidden: int
    img_hw: int


def _round_up(x, m):
    return (x + m - 1) // m * m


def _conv_out(n, k, s):
    return (n - k) // s + 1


# ---------------------------------------------------------------------------
# Fused kernel: whole forward pass for one batch tile, everything VMEM-resident
# ---------------------------------------------------------------------------
def _fused_kernel(patches_ref, state_ref,
                  w1_ref, b1_ref, w2_ref, b2_ref, w3_ref, b3_ref, pool_ref,
                  sew1_ref, seb1_ref, sew2_ref, seb2_ref,
                  dw1a_ref, dw1b_ref, db1_ref, dw2_ref, db2_ref,
                  out_ref, *, rows2, rows3, taps):
    f32, bf16 = jnp.float32, jnp.bfloat16

    # conv1: single GEMM on tap-ordered im2col patch rows (9*9*TB*4 rows, 128 lanes)
    h1 = jnp.dot(patches_ref[...], w1_ref[...], preferred_element_type=f32)
    h1 = jnp.maximum(h1 + b1_ref[...], 0.0).astype(bf16)          # lanes >= 16 are exactly 0

    # conv2: sum over taps of contiguous, 16-row-aligned static slices (no selectors, no gathers)
    acc2 = jnp.dot(h1[0:rows2], w2_ref[0], preferred_element_type=f32)
    for t in range(1, taps):
        acc2 = acc2 + jnp.dot(h1[t * rows2:(t + 1) * rows2], w2_ref[t],
                              preferred_element_type=f32)
    h2 = jnp.maximum(acc2 + b2_ref[...], 0.0).astype(bf16)        # lanes >= 32 are 0

    # conv3: identical structure one level down
    acc3 = jnp.dot(h2[0:rows3], w3_ref[0], preferred_element_type=f32)
    for t in range(1, taps):
        acc3 = acc3 + jnp.dot(h2[t * rows3:(t + 1) * rows3], w3_ref[t],
                              preferred_element_type=f32)
    h3 = jnp.maximum(acc3 + b3_ref[...], 0.0).astype(bf16)        # lanes >= 64 are 0

    # AdaptiveAvgPool2d(1) folded into a tiny averaging matmul
    img = jnp.dot(pool_ref[...], h3, preferred_element_type=f32).astype(bf16)   # (srows, 128)

    # state encoder: Linear -> ReLU -> Linear -> ReLU
    s = state_ref[...].astype(bf16)
    s = jnp.maximum(jnp.dot(s, sew1_ref[...], preferred_element_type=f32) + seb1_ref[...], 0.0).astype(bf16)
    s = jnp.maximum(jnp.dot(s, sew2_ref[...], preferred_element_type=f32) + seb2_ref[...], 0.0).astype(bf16)

    # decoder: concat([s, img]) @ W1 == s @ W1a + img @ W1b (no concat needed)
    d = (jnp.dot(s, dw1a_ref[...], preferred_element_type=f32)
         + jnp.dot(img, dw1b_ref[...], preferred_element_type=f32)
         + db1_ref[...])
    d = jnp.maximum(d, 0.0).astype(bf16)
    out_ref[...] = jnp.dot(d, dw2_ref[...], preferred_element_type=f32) + db2_ref[...]


# ---------------------------------------------------------------------------
# Parameter init (PyTorch-style) and one-time packing into the kernel layout
# ---------------------------------------------------------------------------
def init_params(key, state_dim, action_dim, hidden):
    ks = jax.random.split(key, 14)

    def lin(k, fi, fo):
        s = 1.0 / np.sqrt(fi)
        return jax.random.uniform(k, (fi, fo), jnp.float32, -s, s)

    def conv(k, co, ci, kh, kw):
        s = 1.0 / np.sqrt(ci * kh * kw)
        return jax.random.uniform(k, (co, ci, kh, kw), jnp.float32, -s, s)

    def bias(k, n, fi):
        s = 1.0 / np.sqrt(fi)
        return jax.random.uniform(k, (n,), jnp.float32, -s, s)

    combined = hidden + 64
    return {
        "se_w1": lin(ks[0], state_dim, hidden), "se_b1": bias(ks[1], hidden, state_dim),
        "se_w2": lin(ks[2], hidden, hidden), "se_b2": bias(ks[3], hidden, hidden),
        "conv1_w": conv(ks[4], 16, 3, 5, 5), "conv1_b": bias(ks[5], 16, 3 * 25),
        "conv2_w": conv(ks[6], 32, 16, 3, 3), "conv2_b": bias(ks[7], 32, 16 * 9),
        "conv3_w": conv(ks[8], 64, 32, 3, 3), "conv3_b": bias(ks[9], 64, 32 * 9),
        "dec_w1": lin(ks[10], combined, hidden), "dec_b1": bias(ks[11], hidden, combined),
        "dec_w2": lin(ks[12], hidden, action_dim), "dec_b2": bias(ks[13], action_dim, hidden),
    }


def _pad_mat(x, rows, cols, dtype=jnp.bfloat16):
    x = jnp.asarray(x)
    return jnp.zeros((rows, cols), dtype).at[:x.shape[0], :x.shape[1]].set(x.astype(dtype))


def _pad_bias(b, cols=LANE):
    b = jnp.asarray(b, jnp.float32)
    return jnp.zeros((1, cols), jnp.float32).at[0, :b.shape[0]].set(b)


def _conv_tap_weights(w_oihw):
    """(Cout, Cin, K, K) -> (K*K, LANE, LANE) bf16 stack of per-tap (Cin x Cout) matrices."""
    cout, cin, kh, kw = w_oihw.shape
    taps = [_pad_mat(w_oihw[:, :, ki, kj].T, LANE, LANE)
            for ki in range(kh) for kj in range(kw)]
    return jnp.stack(taps)


def _make_pool(tb, spatial):
    rows = _round_up(tb, SUB)
    p = np.zeros((rows, tb * spatial), np.float32)
    for b in range(tb):
        p[b, b * spatial:(b + 1) * spatial] = 1.0 / spatial
    return jnp.asarray(p, jnp.bfloat16)


def _patch_row_index(cfg):
    """Row index into the standard conv1 im2col (B*H1*W1 rows) that emits, per batch tile,
    rows ordered (conv2 tap, conv3 tap, sample, conv3-out y, conv3-out x). Because a 0/1 row
    selection commutes with bias+ReLU, this ordering makes conv2 and conv3 exact sums over
    contiguous static row blocks — the dense selector GEMMs of v1 disappear entirely."""
    hw1 = _conv_out(cfg.img_hw, 5, 2)
    hw2 = _conv_out(hw1, 3, 2)
    hw3 = _conv_out(hw2, 3, 2)
    tb = cfg.tile_batch
    num_tiles = cfg.batch // tb
    idx = np.empty((num_tiles, 9, 9, tb, hw3, hw3), np.int32)
    for tile in range(num_tiles):
        for ki2 in range(3):
            for kj2 in range(3):
                for ki3 in range(3):
                    for kj3 in range(3):
                        for bb in range(tb):
                            b = tile * tb + bb
                            for y3 in range(hw3):
                                for x3 in range(hw3):
                                    y1 = (y3 * 2 + ki3) * 2 + ki2
                                    x1 = (x3 * 2 + kj3) * 2 + kj2
                                    idx[tile, ki2 * 3 + kj2, ki3 * 3 + kj3, bb, y3, x3] = \
                                        (b * hw1 + y1) * hw1 + x1
    return jnp.asarray(idx.reshape(-1))


def pack_params(raw, cfg):
    assert cfg.batch % cfg.tile_batch == 0, "batch must be a multiple of tile_batch"
    hw1 = _conv_out(cfg.img_hw, 5, 2)
    hw2 = _conv_out(hw1, 3, 2)
    hw3 = _conv_out(hw2, 3, 2)
    rows3 = cfg.tile_batch * hw3 * hw3
    rows1 = 81 * rows3
    # bf16 patch tiles: per-tile row count must be 16-row aligned (sublane packing)
    assert rows1 % 16 == 0, "pick tile_batch so 81*tile_batch*out3*out3 is a multiple of 16"

    # conv1 weight -> (kh*kw*cin, cout) matrix matching im2col feature order (ki, kj, ci)
    w1mat = jnp.transpose(raw["conv1_w"], (2, 3, 1, 0)).reshape(5 * 5 * 3, 16)
    dec_w1 = raw["dec_w1"]          # (hidden + 64, hidden); rows: [state feats | image feats]

    return {
        "row_idx": _patch_row_index(cfg),
        "w1": _pad_mat(w1mat, LANE, LANE), "b1": _pad_bias(raw["conv1_b"]),
        "w2": _conv_tap_weights(raw["conv2_w"]), "b2": _pad_bias(raw["conv2_b"]),
        "w3": _conv_tap_weights(raw["conv3_w"]), "b3": _pad_bias(raw["conv3_b"]),
        "pool": _make_pool(cfg.tile_batch, hw3 * hw3),
        "sew1": _pad_mat(raw["se_w1"], LANE, LANE), "seb1": _pad_bias(raw["se_b1"]),
        "sew2": _pad_mat(raw["se_w2"], LANE, LANE), "seb2": _pad_bias(raw["se_b2"]),
        "dw1a": _pad_mat(dec_w1[:cfg.hidden], LANE, LANE),
        "dw1b": _pad_mat(dec_w1[cfg.hidden:], LANE, LANE),
        "db1": _pad_bias(raw["dec_b1"]),
        "dw2": _pad_mat(raw["dec_w2"], LANE, LANE), "db2": _pad_bias(raw["dec_b2"]),
    }


# ---------------------------------------------------------------------------
# Forward
# ---------------------------------------------------------------------------
def _im2col(x_nhwc, k, stride):
    """Valid conv patches, rows = (b, oy, ox) row-major, features ordered (ki, kj, ci)."""
    b, h, w, c = x_nhwc.shape
    oh, ow = _conv_out(h, k, stride), _conv_out(w, k, stride)
    cols = []
    for ki in range(k):
        for kj in range(k):
            cols.append(x_nhwc[:, ki:ki + oh * stride:stride, kj:kj + ow * stride:stride, :])
    return jnp.stack(cols, axis=3).reshape(b * oh * ow, k * k * c)


@functools.partial(jax.jit, static_argnames=("cfg",))
def multimodal_regnet_forward(packed, state, image_nchw, cfg):
    assert state.shape[0] == cfg.batch and image_nchw.shape[0] == cfg.batch, \
        "pack_params was built for a different batch size"
    tb = cfg.tile_batch
    num_tiles = cfg.batch // tb
    hw1 = _conv_out(cfg.img_hw, 5, 2)
    hw2 = _conv_out(hw1, 3, 2)
    hw3 = _conv_out(hw2, 3, 2)
    rows3 = tb * hw3 * hw3          # conv3-output rows per tile
    rows2 = 9 * rows3               # conv2-output rows per tile (tap-ordered)
    rows1 = 9 * rows2               # conv1-output / patch rows per tile (tap-ordered)
    srows = _round_up(tb, SUB)      # state / output rows per tile

    # XLA-side prep (tiny, scales with batch only): conv1 im2col, reordered so every conv
    # tap downstream is a contiguous row block; lane-dense, zero-padded to 128, bf16.
    x = jnp.transpose(image_nchw, (0, 2, 3, 1))                    # NCHW -> NHWC
    patches = _im2col(x, 5, 2)[packed["row_idx"]]                  # (num_tiles*rows1, 75)
    patches = _pad_mat(patches, num_tiles * rows1, LANE)           # bf16 (.., 128)

    state_pad = jnp.zeros((num_tiles, srows, LANE), jnp.float32)
    state_pad = state_pad.at[:, :tb, :cfg.state_dim].set(
        state.reshape(num_tiles, tb, cfg.state_dim).astype(jnp.float32))
    state_pad = state_pad.reshape(num_tiles * srows, LANE)

    args = (patches, state_pad,
            packed["w1"], packed["b1"], packed["w2"], packed["b2"],
            packed["w3"], packed["b3"], packed["pool"],
            packed["sew1"], packed["seb1"], packed["sew2"], packed["seb2"],
            packed["dw1a"], packed["dw1b"], packed["db1"],
            packed["dw2"], packed["db2"])

    def resident(a):   # weights/biases: same block every grid step -> DMA'd once, VMEM-resident
        return pl.BlockSpec(a.shape, lambda i, _nd=a.ndim: (0,) * _nd)

    in_specs = [
        pl.BlockSpec((rows1, LANE), lambda i: (i, 0)),   # patches: streamed per tile (pipelined)
        pl.BlockSpec((srows, LANE), lambda i: (i, 0)),   # state:   streamed per tile
    ] + [resident(a) for a in args[2:]]

    kern = functools.partial(_fused_kernel, rows2=rows2, rows3=rows3, taps=9)
    out = pl.pallas_call(
        kern,
        grid=(num_tiles,),
        out_shape=jax.ShapeDtypeStruct((num_tiles * srows, LANE), jnp.float32),
        in_specs=in_specs,
        out_specs=pl.BlockSpec((srows, LANE), lambda i: (i, 0)),
        compiler_params=pltpu.CompilerParams(
            dimension_semantics=("parallel",),            # shard batch tiles across v7x's 2 TCs
            vmem_limit_bytes=32 * 1024 * 1024),           # explicit budget (safe on v5e/v6e/v7x)
    )(*args)

    out = out.reshape(num_tiles, srows, LANE)[:, :tb, :cfg.action_dim]
    return out.reshape(cfg.batch, cfg.action_dim)


# ---------------------------------------------------------------------------
# Pure-JAX f32 reference (PyTorch semantics) for a loose-tolerance check
# ---------------------------------------------------------------------------
def _reference_forward(raw, state, image):
    def conv(x, w, b, stride):
        y = jax.lax.conv_general_dilated(x, w, (stride, stride), "VALID",
                                         dimension_numbers=("NCHW", "OIHW", "NCHW"))
        return jnp.maximum(y + b[None, :, None, None], 0.0)
    x = conv(image, raw["conv1_w"], raw["conv1_b"], 2)
    x = conv(x, raw["conv2_w"], raw["conv2_b"], 2)
    x = conv(x, raw["conv3_w"], raw["conv3_b"], 2)
    img = jnp.mean(x, axis=(2, 3))
    s = jnp.maximum(state @ raw["se_w1"] + raw["se_b1"], 0.0)
    s = jnp.maximum(s @ raw["se_w2"] + raw["se_b2"], 0.0)
    comb = jnp.concatenate([s, img], axis=1)
    d = jnp.maximum(comb @ raw["dec_w1"] + raw["dec_b1"], 0.0)
    return d @ raw["dec_w2"] + raw["dec_b2"]


if __name__ == "__main__":
    STATE_DIM, ACTION_DIM, HIDDEN = 8, 4, 32
    BATCH, TILE_BATCH, IMG = 8, 4, 32     # conv chain: 32 -> 14 -> 6 -> 2 spatial, 64 ch -> pool

    cfg = Config(batch=BATCH, tile_batch=TILE_BATCH, state_dim=STATE_DIM,
                 action_dim=ACTION_DIM, hidden=HIDDEN, img_hw=IMG)

    key = jax.random.PRNGKey(0)
    k_params, k_state, k_img = jax.random.split(key, 3)

    raw = init_params(k_params, STATE_DIM, ACTION_DIM, HIDDEN)
    packed = pack_params(raw, cfg)

    state = jax.random.normal(k_state, (BATCH, STATE_DIM), jnp.float32)
    image = jax.random.normal(k_img, (BATCH, 3, IMG, IMG), jnp.float32)

    out = multimodal_regnet_forward(packed, state, image, cfg)
    out = jax.block_until_ready(out)
    assert out.shape == (BATCH, ACTION_DIM), out.shape

    # bf16 MXU path vs f32 reference -> loose tolerance by design
    ref = _reference_forward(raw, state, image)
    np.testing.assert_allclose(np.asarray(out), np.asarray(ref), rtol=5e-2, atol=5e-2)

    print("KERNEL_OK")
</pallas_src>

<mosaic_0001>
module attributes {stable_mosaic.version = 11 : i64} {
  func.func @_fused_kernel(%arg0: i32, %arg1: memref<1296x128xbf16, #tpu.memory_space<vmem>>, %arg2: memref<8x128xf32, #tpu.memory_space<vmem>>, %arg3: memref<128x128xbf16, #tpu.memory_space<vmem>>, %arg4: memref<1x128xf32, #tpu.memory_space<vmem>>, %arg5: memref<9x128x128xbf16, #tpu.memory_space<vmem>>, %arg6: memref<1x128xf32, #tpu.memory_space<vmem>>, %arg7: memref<9x128x128xbf16, #tpu.memory_space<vmem>>, %arg8: memref<1x128xf32, #tpu.memory_space<vmem>>, %arg9: memref<8x16xbf16, #tpu.memory_space<vmem>>, %arg10: memref<128x128xbf16, #tpu.memory_space<vmem>>, %arg11: memref<1x128xf32, #tpu.memory_space<vmem>>, %arg12: memref<128x128xbf16, #tpu.memory_space<vmem>>, %arg13: memref<1x128xf32, #tpu.memory_space<vmem>>, %arg14: memref<128x128xbf16, #tpu.memory_space<vmem>>, %arg15: memref<128x128xbf16, #tpu.memory_space<vmem>>, %arg16: memref<1x128xf32, #tpu.memory_space<vmem>>, %arg17: memref<128x128xbf16, #tpu.memory_space<vmem>>, %arg18: memref<1x128xf32, #tpu.memory_space<vmem>>, %arg19: memref<8x128xf32, #tpu.memory_space<vmem>>) attributes {dimension_semantics = [#tpu.dimension_semantics<parallel>], iteration_bounds = array<i64: 2>, scalar_prefetch = 0 : i64, scratch_operands = 0 : i64, tpu.core_type = #tpu.core_type<tc>, window_params = [{transform_indices = @transform_0, window_bounds = array<i64: 1296, 128>}, {transform_indices = @transform_1, window_bounds = array<i64: 8, 128>}, {pipeline_mode = #tpu.pipeline_mode<synchronous>, transform_indices = @transform_2, window_bounds = array<i64: 128, 128>}, {pipeline_mode = #tpu.pipeline_mode<synchronous>, transform_indices = @transform_3, window_bounds = array<i64: 1, 128>}, {pipeline_mode = #tpu.pipeline_mode<synchronous>, transform_indices = @transform_4, window_bounds = array<i64: 9, 128, 128>}, {pipeline_mode = #tpu.pipeline_mode<synchronous>, transform_indices = @transform_5, window_bounds = array<i64: 1, 128>}, {pipeline_mode = #tpu.pipeline_mode<synchronous>, transform_indices = @transform_6, window_bounds = array<i64: 9, 128, 128>}, {pipeline_mode = #tpu.pipeline_mode<synchronous>, transform_indices = @transform_7, window_bounds = array<i64: 1, 128>}, {pipeline_mode = #tpu.pipeline_mode<synchronous>, transform_indices = @transform_8, window_bounds = array<i64: 8, 16>}, {pipeline_mode = #tpu.pipeline_mode<synchronous>, transform_indices = @transform_9, window_bounds = array<i64: 128, 128>}, {pipeline_mode = #tpu.pipeline_mode<synchronous>, transform_indices = @transform_10, window_bounds = array<i64: 1, 128>}, {pipeline_mode = #tpu.pipeline_mode<synchronous>, transform_indices = @transform_11, window_bounds = array<i64: 128, 128>}, {pipeline_mode = #tpu.pipeline_mode<synchronous>, transform_indices = @transform_12, window_bounds = array<i64: 1, 128>}, {pipeline_mode = #tpu.pipeline_mode<synchronous>, transform_indices = @transform_13, window_bounds = array<i64: 128, 128>}, {pipeline_mode = #tpu.pipeline_mode<synchronous>, transform_indices = @transform_14, window_bounds = array<i64: 128, 128>}, {pipeline_mode = #tpu.pipeline_mode<synchronous>, transform_indices = @transform_15, window_bounds = array<i64: 1, 128>}, {pipeline_mode = #tpu.pipeline_mode<synchronous>, transform_indices = @transform_16, window_bounds = array<i64: 128, 128>}, {pipeline_mode = #tpu.pipeline_mode<synchronous>, transform_indices = @transform_17, window_bounds = array<i64: 1, 128>}, {transform_indices = @transform_18, window_bounds = array<i64: 8, 128>}]} {
    %c0 = arith.constant 0 : index
    %c0_0 = arith.constant 0 : index
    %0 = vector.load %arg1[%c0, %c0_0] : memref<1296x128xbf16, #tpu.memory_space<vmem>>, vector<1296x128xbf16>
    %c0_1 = arith.constant 0 : index
    %c0_2 = arith.constant 0 : index
    %1 = vector.load %arg3[%c0_1, %c0_2] : memref<128x128xbf16, #tpu.memory_space<vmem>>, vector<128x128xbf16>
    %cst = arith.constant dense<0.000000e+00> : vector<1296x128xf32>
    %2 = tpu.matmul %0, %1, %cst {dimension_numbers = #tpu.dot_dimension_numbers<[1], [0], [0], [1], [0, 0, 1, 1], [], []>} : vector<1296x128xbf16>, vector<128x128xbf16>, vector<1296x128xf32> -> vector<1296x128xf32>
    %c0_3 = arith.constant 0 : index
    %c0_4 = arith.constant 0 : index
    %3 = vector.load %arg4[%c0_3, %c0_4] : memref<1x128xf32, #tpu.memory_space<vmem>>, vector<1x128xf32>
    %4 = vector.broadcast %3 : vector<1x128xf32> to vector<1296x128xf32>
    %5 = arith.addf %2, %4 : vector<1296x128xf32>
    %cst_5 = arith.constant 0.000000e+00 : f32
    %6 = vector.broadcast %cst_5 : f32 to vector<1296x128xf32>
    %7 = arith.maximumf %5, %6 : vector<1296x128xf32>
    %8 = arith.truncf %7 : vector<1296x128xf32> to vector<1296x128xbf16>
    %9 = vector.extract_strided_slice %8 {offsets = [0, 0], sizes = [144, 128], strides = [1, 1]} : vector<1296x128xbf16> to vector<144x128xbf16>
    %c0_6 = arith.constant 0 : index
    %c0_7 = arith.constant 0 : index
    %c0_8 = arith.constant 0 : index
    %10 = vector.load %arg5[%c0_6, %c0_7, %c0_8] : memref<9x128x128xbf16, #tpu.memory_space<vmem>>, vector<1x128x128xbf16>
    %11 = vector.shape_cast %10 : vector<1x128x128xbf16> to vector<128x128xbf16>
    %cst_9 = arith.constant dense<0.000000e+00> : vector<144x128xf32>
    %12 = tpu.matmul %9, %11, %cst_9 {dimension_numbers = #tpu.dot_dimension_numbers<[1], [0], [0], [1], [0, 0, 1, 1], [], []>} : vector<144x128xbf16>, vector<128x128xbf16>, vector<144x128xf32> -> vector<144x128xf32>
    %13 = vector.extract_strided_slice %8 {offsets = [144, 0], sizes = [144, 128], strides = [1, 1]} : vector<1296x128xbf16> to vector<144x128xbf16>
    %c1 = arith.constant 1 : index
    %c0_10 = arith.constant 0 : index
    %c0_11 = arith.constant 0 : index
    %14 = vector.load %arg5[%c1, %c0_10, %c0_11] : memref<9x128x128xbf16, #tpu.memory_space<vmem>>, vector<1x128x128xbf16>
    %15 = vector.shape_cast %14 : vector<1x128x128xbf16> to vector<128x128xbf16>
    %cst_12 = arith.constant dense<0.000000e+00> : vector<144x128xf32>
    %16 = tpu.matmul %13, %15, %cst_12 {dimension_numbers = #tpu.dot_dimension_numbers<[1], [0], [0], [1], [0, 0, 1, 1], [], []>} : vector<144x128xbf16>, vector<128x128xbf16>, vector<144x128xf32> -> vector<144x128xf32>
    %17 = arith.addf %12, %16 : vector<144x128xf32>
    %18 = vector.extract_strided_slice %8 {offsets = [288, 0], sizes = [144, 128], strides = [1, 1]} : vector<1296x128xbf16> to vector<144x128xbf16>
    %c2 = arith.constant 2 : index
    %c0_13 = arith.constant 0 : index
    %c0_14 = arith.constant 0 : index
    %19 = vector.load %arg5[%c2, %c0_13, %c0_14] : memref<9x128x128xbf16, #tpu.memory_space<vmem>>, vector<1x128x128xbf16>
    %20 = vector.shape_cast %19 : vector<1x128x128xbf16> to vector<128x128xbf16>
    %cst_15 = arith.constant dense<0.000000e+00> : vector<144x128xf32>
    %21 = tpu.matmul %18, %20, %cst_15 {dimension_numbers = #tpu.dot_dimension_numbers<[1], [0], [0], [1], [0, 0, 1, 1], [], []>} : vector<144x128xbf16>, vector<128x128xbf16>, vector<144x128xf32> -> vector<144x128xf32>
    %22 = arith.addf %17, %21 : vector<144x128xf32>
    %23 = vector.extract_strided_slice %8 {offsets = [432, 0], sizes = [144, 128], strides = [1, 1]} : vector<1296x128xbf16> to vector<144x128xbf16>
    %c3 = arith.constant 3 : index
    %c0_16 = arith.constant 0 : index
    %c0_17 = arith.constant 0 : index
    %24 = vector.load %arg5[%c3, %c0_16, %c0_17] : memref<9x128x128xbf16, #tpu.memory_space<vmem>>, vector<1x128x128xbf16>
    %25 = vector.shape_cast %24 : vector<1x128x128xbf16> to vector<128x128xbf16>
    %cst_18 = arith.constant dense<0.000000e+00> : vector<144x128xf32>
    %26 = tpu.matmul %23, %25, %cst_18 {dimension_numbers = #tpu.dot_dimension_numbers<[1], [0], [0], [1], [0, 0, 1, 1], [], []>} : vector<144x128xbf16>, vector<128x128xbf16>, vector<144x128xf32> -> vector<144x128xf32>
    %27 = arith.addf %22, %26 : vector<144x128xf32>
    %28 = vector.extract_strided_slice %8 {offsets = [576, 0], sizes = [144, 128], strides = [1, 1]} : vector<1296x128xbf16> to vector<144x128xbf16>
    %c4 = arith.constant 4 : index
    %c0_19 = arith.constant 0 : index
    %c0_20 = arith.constant 0 : index
    %29 = vector.load %arg5[%c4, %c0_19, %c0_20] : memref<9x128x128xbf16, #tpu.memory_space<vmem>>, vector<1x128x128xbf16>
    %30 = vector.shape_cast %29 : vector<1x128x128xbf16> to vector<128x128xbf16>
    %cst_21 = arith.constant dense<0.000000e+00> : vector<144x128xf32>
    %31 = tpu.matmul %28, %30, %cst_21 {dimension_numbers = #tpu.dot_dimension_numbers<[1], [0], [0], [1], [0, 0, 1, 1], [], []>} : vector<144x128xbf16>, vector<128x128xbf16>, vector<144x128xf32> -> vector<144x128xf32>
    %32 = arith.addf %27, %31 : vector<144x128xf32>
    %33 = vector.extract_strided_slice %8 {offsets = [720, 0], sizes = [144, 128], strides = [1, 1]} : vector<1296x128xbf16> to vector<144x128xbf16>
    %c5 = arith.constant 5 : index
    %c0_22 = arith.constant 0 : index
    %c0_23 = arith.constant 0 : index
    %34 = vector.load %arg5[%c5, %c0_22, %c0_23] : memref<9x128x128xbf16, #tpu.memory_space<vmem>>, vector<1x128x128xbf16>
    %35 = vector.shape_cast %34 : vector<1x128x128xbf16> to vector<128x128xbf16>
    %cst_24 = arith.constant dense<0.000000e+00> : vector<144x128xf32>
    %36 = tpu.matmul %33, %35, %cst_24 {dimension_numbers = #tpu.dot_dimension_numbers<[1], [0], [0], [1], [0, 0, 1, 1], [], []>} : vector<144x128xbf16>, vector<128x128xbf16>, vector<144x128xf32> -> vector<144x128xf32>
    %37 = arith.addf %32, %36 : vector<144x128xf32>
    %38 = vector.extract_strided_slice %8 {offsets = [864, 0], sizes = [144, 128], strides = [1, 1]} : vector<1296x128xbf16> to vector<144x128xbf16>
    %c6 = arith.constant 6 : index
    %c0_25 = arith.constant 0 : index
    %c0_26 = arith.constant 0 : index
    %39 = vector.load %arg5[%c6, %c0_25, %c0_26] : memref<9x128x128xbf16, #tpu.memory_space<vmem>>, vector<1x128x128xbf16>
    %40 = vector.shape_cast %39 : vector<1x128x128xbf16> to vector<128x128xbf16>
    %cst_27 = arith.constant dense<0.000000e+00> : vector<144x128xf32>
    %41 = tpu.matmul %38, %40, %cst_27 {dimension_numbers = #tpu.dot_dimension_numbers<[1], [0], [0], [1], [0, 0, 1, 1], [], []>} : vector<144x128xbf16>, vector<128x128xbf16>, vector<144x128xf32> -> vector<144x128xf32>
    %42 = arith.addf %37, %41 : vector<144x128xf32>
    %43 = vector.extract_strided_slice %8 {offsets = [1008, 0], sizes = [144, 128], strides = [1, 1]} : vector<1296x128xbf16> to vector<144x128xbf16>
    %c7 = arith.constant 7 : index
    %c0_28 = arith.constant 0 : index
    %c0_29 = arith.constant 0 : index
    %44 = vector.load %arg5[%c7, %c0_28, %c0_29] : memref<9x128x128xbf16, #tpu.memory_space<vmem>>, vector<1x128x128xbf16>
    %45 = vector.shape_cast %44 : vector<1x128x128xbf16> to vector<128x128xbf16>
    %cst_30 = arith.constant dense<0.000000e+00> : vector<144x128xf32>
    %46 = tpu.matmul %43, %45, %cst_30 {dimension_numbers = #tpu.dot_dimension_numbers<[1], [0], [0], [1], [0, 0, 1, 1], [], []>} : vector<144x128xbf16>, vector<128x128xbf16>, vector<144x128xf32> -> vector<144x128xf32>
    %47 = arith.addf %42, %46 : vector<144x128xf32>
    %48 = vector.extract_strided_slice %8 {offsets = [1152, 0], sizes = [144, 128], strides = [1, 1]} : vector<1296x128xbf16> to vector<144x128xbf16>
    %c8 = arith.constant 8 : index
    %c0_31 = arith.constant 0 : index
    %c0_32 = arith.constant 0 : index
    %49 = vector.load %arg5[%c8, %c0_31, %c0_32] : memref<9x128x128xbf16, #tpu.memory_space<vmem>>, vector<1x128x128xbf16>
    %50 = vector.shape_cast %49 : vector<1x128x128xbf16> to vector<128x128xbf16>
    %cst_33 = arith.constant dense<0.000000e+00> : vector<144x128xf32>
    %51 = tpu.matmul %48, %50, %cst_33 {dimension_numbers = #tpu.dot_dimension_numbers<[1], [0], [0], [1], [0, 0, 1, 1], [], []>} : vector<144x128xbf16>, vector<128x128xbf16>, vector<144x128xf32> -> vector<144x128xf32>
    %52 = arith.addf %47, %51 : vector<144x128xf32>
    %c0_34 = arith.constant 0 : index
    %c0_35 = arith.constant 0 : index
    %53 = vector.load %arg6[%c0_34, %c0_35] : memref<1x128xf32, #tpu.memory_space<vmem>>, vector<1x128xf32>
    %54 = vector.broadcast %53 : vector<1x128xf32> to vector<144x128xf32>
    %55 = arith.addf %52, %54 : vector<144x128xf32>
    %cst_36 = arith.constant 0.000000e+00 : f32
    %56 = vector.broadcast %cst_36 : f32 to vector<144x128xf32>
    %57 = arith.maximumf %55, %56 : vector<144x128xf32>
    %58 = arith.truncf %57 : vector<144x128xf32> to vector<144x128xbf16>
    %59 = vector.extract_strided_slice %58 {offsets = [0, 0], sizes = [16, 128], strides = [1, 1]} : vector<144x128xbf16> to vector<16x128xbf16>
    %c0_37 = arith.constant 0 : index
    %c0_38 = arith.constant 0 : index
    %c0_39 = arith.constant 0 : index
    %60 = vector.load %arg7[%c0_37, %c0_38, %c0_39] : memref<9x128x128xbf16, #tpu.memory_space<vmem>>, vector<1x128x128xbf16>
    %61 = vector.shape_cast %60 : vector<1x128x128xbf16> to vector<128x128xbf16>
    %cst_40 = arith.constant dense<0.000000e+00> : vector<16x128xf32>
    %62 = tpu.matmul %59, %61, %cst_40 {dimension_numbers = #tpu.dot_dimension_numbers<[1], [0], [0], [1], [0, 0, 1, 1], [], []>} : vector<16x128xbf16>, vector<128x128xbf16>, vector<16x128xf32> -> vector<16x128xf32>
    %63 = vector.extract_strided_slice %58 {offsets = [16, 0], sizes = [16, 128], strides = [1, 1]} : vector<144x128xbf16> to vector<16x128xbf16>
    %c1_41 = arith.constant 1 : index
    %c0_42 = arith.constant 0 : index
    %c0_43 = arith.constant 0 : index
    %64 = vector.load %arg7[%c1_41, %c0_42, %c0_43] : memref<9x128x128xbf16, #tpu.memory_space<vmem>>, vector<1x128x128xbf16>
    %65 = vector.shape_cast %64 : vector<1x128x128xbf16> to vector<128x128xbf16>
    %cst_44 = arith.constant dense<0.000000e+00> : vector<16x128xf32>
    %66 = tpu.matmul %63, %65, %cst_44 {dimension_numbers = #tpu.dot_dimension_numbers<[1], [0], [0], [1], [0, 0, 1, 1], [], []>} : vector<16x128xbf16>, vector<128x128xbf16>, vector<16x128xf32> -> vector<16x128xf32>
    %67 = arith.addf %62, %66 : vector<16x128xf32>
    %68 = vector.extract_strided_slice %58 {offsets = [32, 0], sizes = [16, 128], strides = [1, 1]} : vector<144x128xbf16> to vector<16x128xbf16>
    %c2_45 = arith.constant 2 : index
    %c0_46 = arith.constant 0 : index
    %c0_47 = arith.constant 0 : index
    %69 = vector.load %arg7[%c2_45, %c0_46, %c0_47] : memref<9x128x128xbf16, #tpu.memory_space<vmem>>, vector<1x128x128xbf16>
    %70 = vector.shape_cast %69 : vector<1x128x128xbf16> to vector<128x128xbf16>
    %cst_48 = arith.constant dense<0.000000e+00> : vector<16x128xf32>
    %71 = tpu.matmul %68, %70, %cst_48 {dimension_numbers = #tpu.dot_dimension_numbers<[1], [0], [0], [1], [0, 0, 1, 1], [], []>} : vector<16x128xbf16>, vector<128x128xbf16>, vector<16x128xf32> -> vector<16x128xf32>
    %72 = arith.addf %67, %71 : vector<16x128xf32>
    %73 = vector.extract_strided_slice %58 {offsets = [48, 0], sizes = [16, 128], strides = [1, 1]} : vector<144x128xbf16> to vector<16x128xbf16>
    %c3_49 = arith.constant 3 : index
    %c0_50 = arith.constant 0 : index
    %c0_51 = arith.constant 0 : index
    %74 = vector.load %arg7[%c3_49, %c0_50, %c0_51] : memref<9x128x128xbf16, #tpu.memory_space<vmem>>, vector<1x128x128xbf16>
    %75 = vector.shape_cast %74 : vector<1x128x128xbf16> to vector<128x128xbf16>
    %cst_52 = arith.constant dense<0.000000e+00> : vector<16x128xf32>
    %76 = tpu.matmul %73, %75, %cst_52 {dimension_numbers = #tpu.dot_dimension_numbers<[1], [0], [0], [1], [0, 0, 1, 1], [], []>} : vector<16x128xbf16>, vector<128x128xbf16>, vector<16x128xf32> -> vector<16x128xf32>
    %77 = arith.addf %72, %76 : vector<16x128xf32>
    %78 = vector.extract_strided_slice %58 {offsets = [64, 0], sizes = [16, 128], strides = [1, 1]} : vector<144x128xbf16> to vector<16x128xbf16>
    %c4_53 = arith.constant 4 : index
    %c0_54 = arith.constant 0 : index
    %c0_55 = arith.constant 0 : index
    %79 = vector.load %arg7[%c4_53, %c0_54, %c0_55] : memref<9x128x128xbf16, #tpu.memory_space<vmem>>, vector<1x128x128xbf16>
    %80 = vector.shape_cast %79 : vector<1x128x128xbf16> to vector<128x128xbf16>
    %cst_56 = arith.constant dense<0.000000e+00> : vector<16x128xf32>
    %81 = tpu.matmul %78, %80, %cst_56 {dimension_numbers = #tpu.dot_dimension_numbers<[1], [0], [0], [1], [0, 0, 1, 1], [], []>} : vector<16x128xbf16>, vector<128x128xbf16>, vector<16x128xf32> -> vector<16x128xf32>
    %82 = arith.addf %77, %81 : vector<16x128xf32>
    %83 = vector.extract_strided_slice %58 {offsets = [80, 0], sizes = [16, 128], strides = [1, 1]} : vector<144x128xbf16> to vector<16x128xbf16>
    %c5_57 = arith.constant 5 : index
    %c0_58 = arith.constant 0 : index
    %c0_59 = arith.constant 0 : index
    %84 = vector.load %arg7[%c5_57, %c0_58, %c0_59] : memref<9x128x128xbf16, #tpu.memory_space<vmem>>, vector<1x128x128xbf16>
    %85 = vector.shape_cast %84 : vector<1x128x128xbf16> to vector<128x128xbf16>
    %cst_60 = arith.constant dense<0.000000e+00> : vector<16x128xf32>
    %86 = tpu.matmul %83, %85, %cst_60 {dimension_numbers = #tpu.dot_dimension_numbers<[1], [0], [0], [1], [0, 0, 1, 1], [], []>} : vector<16x128xbf16>, vector<128x128xbf16>, vector<16x128xf32> -> vector<16x128xf32>
    %87 = arith.addf %82, %86 : vector<16x128xf32>
    %88 = vector.extract_strided_slice %58 {offsets = [96, 0], sizes = [16, 128], strides = [1, 1]} : vector<144x128xbf16> to vector<16x128xbf16>
    %c6_61 = arith.constant 6 : index
    %c0_62 = arith.constant 0 : index
    %c0_63 = arith.constant 0 : index
    %89 = vector.load %arg7[%c6_61, %c0_62, %c0_63] : memref<9x128x128xbf16, #tpu.memory_space<vmem>>, vector<1x128x128xbf16>
    %90 = vector.shape_cast %89 : vector<1x128x128xbf16> to vector<128x128xbf16>
    %cst_64 = arith.constant dense<0.000000e+00> : vector<16x128xf32>
    %91 = tpu.matmul %88, %90, %cst_64 {dimension_numbers = #tpu.dot_dimension_numbers<[1], [0], [0], [1], [0, 0, 1, 1], [], []>} : vector<16x128xbf16>, vector<128x128xbf16>, vector<16x128xf32> -> vector<16x128xf32>
    %92 = arith.addf %87, %91 : vector<16x128xf32>
    %93 = vector.extract_strided_slice %58 {offsets = [112, 0], sizes = [16, 128], strides = [1, 1]} : vector<144x128xbf16> to vector<16x128xbf16>
    %c7_65 = arith.constant 7 : index
    %c0_66 = arith.constant 0 : index
    %c0_67 = arith.constant 0 : index
    %94 = vector.load %arg7[%c7_65, %c0_66, %c0_67] : memref<9x128x128xbf16, #tpu.memory_space<vmem>>, vector<1x128x128xbf16>
    %95 = vector.shape_cast %94 : vector<1x128x128xbf16> to vector<128x128xbf16>
    %cst_68 = arith.constant dense<0.000000e+00> : vector<16x128xf32>
    %96 = tpu.matmul %93, %95, %cst_68 {dimension_numbers = #tpu.dot_dimension_numbers<[1], [0], [0], [1], [0, 0, 1, 1], [], []>} : vector<16x128xbf16>, vector<128x128xbf16>, vector<16x128xf32> -> vector<16x128xf32>
    %97 = arith.addf %92, %96 : vector<16x128xf32>
    %98 = vector.extract_strided_slice %58 {offsets = [128, 0], sizes = [16, 128], strides = [1, 1]} : vector<144x128xbf16> to vector<16x128xbf16>
    %c8_69 = arith.constant 8 : index
    %c0_70 = arith.constant 0 : index
    %c0_71 = arith.constant 0 : index
    %99 = vector.load %arg7[%c8_69, %c0_70, %c0_71] : memref<9x128x128xbf16, #tpu.memory_space<vmem>>, vector<1x128x128xbf16>
    %100 = vector.shape_cast %99 : vector<1x128x128xbf16> to vector<128x128xbf16>
    %cst_72 = arith.constant dense<0.000000e+00> : vector<16x128xf32>
    %101 = tpu.matmul %98, %100, %cst_72 {dimension_numbers = #tpu.dot_dimension_numbers<[1], [0], [0], [1], [0, 0, 1, 1], [], []>} : vector<16x128xbf16>, vector<128x128xbf16>, vector<16x128xf32> -> vector<16x128xf32>
    %102 = arith.addf %97, %101 : vector<16x128xf32>
    %c0_73 = arith.constant 0 : index
    %c0_74 = arith.constant 0 : index
    %103 = vector.load %arg8[%c0_73, %c0_74] : memref<1x128xf32, #tpu.memory_space<vmem>>, vector<1x128xf32>
    %104 = vector.broadcast %103 : vector<1x128xf32> to vector<16x128xf32>
    %105 = arith.addf %102, %104 : vector<16x128xf32>
    %cst_75 = arith.constant 0.000000e+00 : f32
    %106 = vector.broadcast %cst_75 : f32 to vector<16x128xf32>
    %107 = arith.maximumf %105, %106 : vector<16x128xf32>
    %108 = arith.truncf %107 : vector<16x128xf32> to vector<16x128xbf16>
    %c0_76 = arith.constant 0 : index
    %c0_77 = arith.constant 0 : index
    %109 = vector.load %arg9[%c0_76, %c0_77] : memref<8x16xbf16, #tpu.memory_space<vmem>>, vector<8x16xbf16>
    %cst_78 = arith.constant dense<0.000000e+00> : vector<8x128xf32>
    %110 = tpu.matmul %109, %108, %cst_78 {dimension_numbers = #tpu.dot_dimension_numbers<[1], [0], [0], [1], [0, 0, 1, 1], [], []>} : vector<8x16xbf16>, vector<16x128xbf16>, vector<8x128xf32> -> vector<8x128xf32>
    %111 = arith.truncf %110 : vector<8x128xf32> to vector<8x128xbf16>
    %c0_79 = arith.constant 0 : index
    %c0_80 = arith.constant 0 : index
    %112 = vector.load %arg2[%c0_79, %c0_80] : memref<8x128xf32, #tpu.memory_space<vmem>>, vector<8x128xf32>
    %113 = arith.truncf %112 : vector<8x128xf32> to vector<8x128xbf16>
    %c0_81 = arith.constant 0 : index
    %c0_82 = arith.constant 0 : index
    %114 = vector.load %arg10[%c0_81, %c0_82] : memref<128x128xbf16, #tpu.memory_space<vmem>>, vector<128x128xbf16>
    %cst_83 = arith.constant dense<0.000000e+00> : vector<8x128xf32>
    %115 = tpu.matmul %113, %114, %cst_83 {dimension_numbers = #tpu.dot_dimension_numbers<[1], [0], [0], [1], [0, 0, 1, 1], [], []>} : vector<8x128xbf16>, vector<128x128xbf16>, vector<8x128xf32> -> vector<8x128xf32>
    %c0_84 = arith.constant 0 : index
    %c0_85 = arith.constant 0 : index
    %116 = vector.load %arg11[%c0_84, %c0_85] : memref<1x128xf32, #tpu.memory_space<vmem>>, vector<1x128xf32>
    %117 = vector.broadcast %116 : vector<1x128xf32> to vector<8x128xf32>
    %118 = arith.addf %115, %117 : vector<8x128xf32>
    %cst_86 = arith.constant 0.000000e+00 : f32
    %119 = vector.broadcast %cst_86 : f32 to vector<8x128xf32>
    %120 = arith.maximumf %118, %119 : vector<8x128xf32>
    %121 = arith.truncf %120 : vector<8x128xf32> to vector<8x128xbf16>
    %c0_87 = arith.constant 0 : index
    %c0_88 = arith.constant 0 : index
    %122 = vector.load %arg12[%c0_87, %c0_88] : memref<128x128xbf16, #tpu.memory_space<vmem>>, vector<128x128xbf16>
    %cst_89 = arith.constant dense<0.000000e+00> : vector<8x128xf32>
    %123 = tpu.matmul %121, %122, %cst_89 {dimension_numbers = #tpu.dot_dimension_numbers<[1], [0], [0], [1], [0, 0, 1, 1], [], []>} : vector<8x128xbf16>, vector<128x128xbf16>, vector<8x128xf32> -> vector<8x128xf32>
    %c0_90 = arith.constant 0 : index
    %c0_91 = arith.constant 0 : index
    %124 = vector.load %arg13[%c0_90, %c0_91] : memref<1x128xf32, #tpu.memory_space<vmem>>, vector<1x128xf32>
    %125 = vector.broadcast %124 : vector<1x128xf32> to vector<8x128xf32>
    %126 = arith.addf %123, %125 : vector<8x128xf32>
    %cst_92 = arith.constant 0.000000e+00 : f32
    %127 = vector.broadcast %cst_92 : f32 to vector<8x128xf32>
    %128 = arith.maximumf %126, %127 : vector<8x128xf32>
    %129 = arith.truncf %128 : vector<8x128xf32> to vector<8x128xbf16>
    %c0_93 = arith.constant 0 : index
    %c0_94 = arith.constant 0 : index
    %130 = vector.load %arg14[%c0_93, %c0_94] : memref<128x128xbf16, #tpu.memory_space<vmem>>, vector<128x128xbf16>
    %cst_95 = arith.constant dense<0.000000e+00> : vector<8x128xf32>
    %131 = tpu.matmul %129, %130, %cst_95 {dimension_numbers = #tpu.dot_dimension_numbers<[1], [0], [0], [1], [0, 0, 1, 1], [], []>} : vector<8x128xbf16>, vector<128x128xbf16>, vector<8x128xf32> -> vector<8x128xf32>
    %c0_96 = arith.constant 0 : index
    %c0_97 = arith.constant 0 : index
    %132 = vector.load %arg15[%c0_96, %c0_97] : memref<128x128xbf16, #tpu.memory_space<vmem>>, vector<128x128xbf16>
    %cst_98 = arith.constant dense<0.000000e+00> : vector<8x128xf32>
    %133 = tpu.matmul %111, %132, %cst_98 {dimension_numbers = #tpu.dot_dimension_numbers<[1], [0], [0], [1], [0, 0, 1, 1], [], []>} : vector<8x128xbf16>, vector<128x128xbf16>, vector<8x128xf32> -> vector<8x128xf32>
    %134 = arith.addf %131, %133 : vector<8x128xf32>
    %c0_99 = arith.constant 0 : index
    %c0_100 = arith.constant 0 : index
    %135 = vector.load %arg16[%c0_99, %c0_100] : memref<1x128xf32, #tpu.memory_space<vmem>>, vector<1x128xf32>
    %136 = vector.broadcast %135 : vector<1x128xf32> to vector<8x128xf32>
    %137 = arith.addf %134, %136 : vector<8x128xf32>
    %cst_101 = arith.constant 0.000000e+00 : f32
    %138 = vector.broadcast %cst_101 : f32 to vector<8x128xf32>
    %139 = arith.maximumf %137, %138 : vector<8x128xf32>
    %140 = arith.truncf %139 : vector<8x128xf32> to vector<8x128xbf16>
    %c0_102 = arith.constant 0 : index
    %c0_103 = arith.constant 0 : index
    %141 = vector.load %arg17[%c0_102, %c0_103] : memref<128x128xbf16, #tpu.memory_space<vmem>>, vector<128x128xbf16>
    %cst_104 = arith.constant dense<0.000000e+00> : vector<8x128xf32>
    %142 = tpu.matmul %140, %141, %cst_104 {dimension_numbers = #tpu.dot_dimension_numbers<[1], [0], [0], [1], [0, 0, 1, 1], [], []>} : vector<8x128xbf16>, vector<128x128xbf16>, vector<8x128xf32> -> vector<8x128xf32>
    %c0_105 = arith.constant 0 : index
    %c0_106 = arith.constant 0 : index
    %143 = vector.load %arg18[%c0_105, %c0_106] : memref<1x128xf32, #tpu.memory_space<vmem>>, vector<1x128xf32>
    %144 = vector.broadcast %143 : vector<1x128xf32> to vector<8x128xf32>
    %145 = arith.addf %142, %144 : vector<8x128xf32>
    %c0_107 = arith.constant 0 : index
    %c0_108 = arith.constant 0 : index
    %146 = vector.load %arg19[%c0_107, %c0_108] : memref<8x128xf32, #tpu.memory_space<vmem>>, vector<8x128xf32>
    tpu.vector_store %arg19[%c0_107, %c0_108], %145 {strides = array<i32>} : memref<8x128xf32, #tpu.memory_space<vmem>>, vector<8x128xf32>,
    return
  }
  func.func @transform_0(%arg0: i32) -> (i32, i32) {
    %c0_i32 = arith.constant 0 : i32
    %c0_i32_0 = arith.constant 0 : i32
    return %arg0, %c0_i32 : i32, i32
  }
  func.func @transform_1(%arg0: i32) -> (i32, i32) {
    %c0_i32 = arith.constant 0 : i32
    %c0_i32_0 = arith.constant 0 : i32
    return %arg0, %c0_i32 : i32, i32
  }
  func.func @transform_2(%arg0: i32) -> (i32, i32) {
    %c0_i32 = arith.constant 0 : i32
    %c0_i32_0 = arith.constant 0 : i32
    %c0_i32_1 = arith.constant 0 : i32
    return %c0_i32, %c0_i32_0 : i32, i32
  }
  func.func @transform_3(%arg0: i32) -> (i32, i32) {
    %c0_i32 = arith.constant 0 : i32
    %c0_i32_0 = arith.constant 0 : i32
    %c0_i32_1 = arith.constant 0 : i32
    return %c0_i32, %c0_i32_0 : i32, i32
  }
  func.func @transform_4(%arg0: i32) -> (i32, i32, i32) {
    %c0_i32 = arith.constant 0 : i32
    %c0_i32_0 = arith.constant 0 : i32
    %c0_i32_1 = arith.constant 0 : i32
    %c0_i32_2 = arith.constant 0 : i32
    return %c0_i32, %c0_i32_0, %c0_i32_1 : i32, i32, i32
  }
  func.func @transform_5(%arg0: i32) -> (i32, i32) {
    %c0_i32 = arith.constant 0 : i32
    %c0_i32_0 = arith.constant 0 : i32
    %c0_i32_1 = arith.constant 0 : i32
    return %c0_i32, %c0_i32_0 : i32, i32
  }
  func.func @transform_6(%arg0: i32) -> (i32, i32, i32) {
    %c0_i32 = arith.constant 0 : i32
    %c0_i32_0 = arith.constant 0 : i32
    %c0_i32_1 = arith.constant 0 : i32
    %c0_i32_2 = arith.constant 0 : i32
    return %c0_i32, %c0_i32_0, %c0_i32_1 : i32, i32, i32
  }
  func.func @transform_7(%arg0: i32) -> (i32, i32) {
    %c0_i32 = arith.constant 0 : i32
    %c0_i32_0 = arith.constant 0 : i32
    %c0_i32_1 = arith.constant 0 : i32
    return %c0_i32, %c0_i32_0 : i32, i32
  }
  func.func @transform_8(%arg0: i32) -> (i32, i32) {
    %c0_i32 = arith.constant 0 : i32
    %c0_i32_0 = arith.constant 0 : i32
    %c0_i32_1 = arith.constant 0 : i32
    return %c0_i32, %c0_i32_0 : i32, i32
  }
  func.func @transform_9(%arg0: i32) -> (i32, i32) {
    %c0_i32 = arith.constant 0 : i32
    %c0_i32_0 = arith.constant 0 : i32
    %c0_i32_1 = arith.constant 0 : i32
    return %c0_i32, %c0_i32_0 : i32, i32
  }
  func.func @transform_10(%arg0: i32) -> (i32, i32) {
    %c0_i32 = arith.constant 0 : i32
    %c0_i32_0 = arith.constant 0 : i32
    %c0_i32_1 = arith.constant 0 : i32
    return %c0_i32, %c0_i32_0 : i32, i32
  }
  func.func @transform_11(%arg0: i32) -> (i32, i32) {
    %c0_i32 = arith.constant 0 : i32
    %c0_i32_0 = arith.constant 0 : i32
    %c0_i32_1 = arith.constant 0 : i32
    return %c0_i32, %c0_i32_0 : i32, i32
  }
  func.func @transform_12(%arg0: i32) -> (i32, i32) {
    %c0_i32 = arith.constant 0 : i32
    %c0_i32_0 = arith.constant 0 : i32
    %c0_i32_1 = arith.constant 0 : i32
    return %c0_i32, %c0_i32_0 : i32, i32
  }
  func.func @transform_13(%arg0: i32) -> (i32, i32) {
    %c0_i32 = arith.constant 0 : i32
    %c0_i32_0 = arith.constant 0 : i32
    %c0_i32_1 = arith.constant 0 : i32
    return %c0_i32, %c0_i32_0 : i32, i32
  }
  func.func @transform_14(%arg0: i32) -> (i32, i32) {
    %c0_i32 = arith.constant 0 : i32
    %c0_i32_0 = arith.constant 0 : i32
    %c0_i32_1 = arith.constant 0 : i32
    return %c0_i32, %c0_i32_0 : i32, i32
  }
  func.func @transform_15(%arg0: i32) -> (i32, i32) {
    %c0_i32 = arith.constant 0 : i32
    %c0_i32_0 = arith.constant 0 : i32
    %c0_i32_1 = arith.constant 0 : i32
    return %c0_i32, %c0_i32_0 : i32, i32
  }
  func.func @transform_16(%arg0: i32) -> (i32, i32) {
    %c0_i32 = arith.constant 0 : i32
    %c0_i32_0 = arith.constant 0 : i32
    %c0_i32_1 = arith.constant 0 : i32
    return %c0_i32, %c0_i32_0 : i32, i32
  }
  func.func @transform_17(%arg0: i32) -> (i32, i32) {
    %c0_i32 = arith.constant 0 : i32
    %c0_i32_0 = arith.constant 0 : i32
    %c0_i32_1 = arith.constant 0 : i32
    return %c0_i32, %c0_i32_0 : i32, i32
  }
  func.func @transform_18(%arg0: i32) -> (i32, i32) {
    %c0_i32 = arith.constant 0 : i32
    %c0_i32_0 = arith.constant 0 : i32
    return %arg0, %c0_i32 : i32, i32
  }
}

</mosaic_0001>

<llo_original>
// kernel: multimodal_regnet_forward.1
$region0: #{multimodal_regnet_forward.1}
  #allocation0 [shape = 'u32[]', space=smem, size = 0x4, offset = 0x4, fixed_abs, tag = 'smem constant byte address 0x4 - core index']
  #allocation1 [shape = 'u32[144,128]{1,0:T(1,128)}', space=vmem, size = 0x12000, scoped, tag = 'internal scratch']
  %s0 = inlined_call_operand.vmem [shape: bf16[2592,128], index: 0, kind: input, shape index: {}]
  %s1 = inlined_call_operand.vmem [shape: f32[16,128], index: 1, kind: input, shape index: {}]
  %s2 = inlined_call_operand.vmem [shape: bf16[128,128], index: 2, kind: input, shape index: {}]
  %s3 = inlined_call_operand.vmem [shape: f32[1,128], index: 3, kind: input, shape index: {}]
  %s4 = inlined_call_operand.vmem [shape: bf16[9,128,128], index: 4, kind: input, shape index: {}]
  %s5 = inlined_call_operand.vmem [shape: f32[1,128], index: 5, kind: input, shape index: {}]
  %s6 = inlined_call_operand.vmem [shape: bf16[9,128,128], index: 6, kind: input, shape index: {}]
  %s7 = inlined_call_operand.vmem [shape: f32[1,128], index: 7, kind: input, shape index: {}]
  %s8 = inlined_call_operand.vmem [shape: bf16[8,16], index: 8, kind: input, shape index: {}]
  %s9 = inlined_call_operand.vmem [shape: bf16[128,128], index: 9, kind: input, shape index: {}]
  %s10 = inlined_call_operand.vmem [shape: f32[1,128], index: 10, kind: input, shape index: {}]
  %s11 = inlined_call_operand.vmem [shape: bf16[128,128], index: 11, kind: input, shape index: {}]
  %s12 = inlined_call_operand.vmem [shape: f32[1,128], index: 12, kind: input, shape index: {}]
  %s13 = inlined_call_operand.vmem [shape: bf16[128,128], index: 13, kind: input, shape index: {}]
  %s14 = inlined_call_operand.vmem [shape: bf16[128,128], index: 14, kind: input, shape index: {}]
  %s15 = inlined_call_operand.vmem [shape: f32[1,128], index: 15, kind: input, shape index: {}]
  %s16 = inlined_call_operand.vmem [shape: bf16[128,128], index: 16, kind: input, shape index: {}]
  %s17 = inlined_call_operand.vmem [shape: f32[1,128], index: 17, kind: input, shape index: {}]
  %s18 = inlined_call_operand.vmem [shape: f32[16,128], index: 18, kind: output, shape index: {}]
  %s19 = sld [smem:[#allocation0]]
  $region105: #{multimodal_regnet_forward.1} parent=0
    _
  %s21 = ssub.s32 1, %s19
  %s22 = scalar_select 0, %s21, %s19
  loop: start=0, step=1, limit=4
  $region2: #{multimodal_regnet_forward.1} parent=0 // loop_pre_header
    _
  $region3: #{multimodal_regnet_forward.1} parent=0 // loop_header
    %s24 = sphi 0, %s28
    %p25 = scmp.ge.s32.totalorder %s24, 4
    %s34 = sphi 0, %s36
    %s37 = sphi 0, %s34
    %s38 = sphi 0, %s37
    %s54 = sphi 0, %s38
    %s60 = sphi 0, %s62
    %s63 = sphi 0, %s60
    %s64 = sphi 0, %s63
    %s80 = sphi 0, %s64
    %s84 = sphi 0, %s84
    %s86 = sphi 0, %s84
    %s87 = sphi 0, %s86
    %s101 = sphi 0, %s87
    %s105 = sphi 0, %s105
    %s107 = sphi 0, %s105
    %s108 = sphi 0, %s107
    %s122 = sphi 0, %s108
    %s126 = sphi 0, %s126
    %s128 = sphi 0, %s126
    %s129 = sphi 0, %s128
    %s143 = sphi 0, %s129
    %s147 = sphi 0, %s147
    %s149 = sphi 0, %s147
    %s150 = sphi 0, %s149
    %s164 = sphi 0, %s150
    %s168 = sphi 0, %s168
    %s170 = sphi 0, %s168
    %s171 = sphi 0, %s170
    %s185 = sphi 0, %s171
    %s189 = sphi 0, %s189
    %s191 = sphi 0, %s189
    %s192 = sphi 0, %s191
    %s206 = sphi 0, %s192
    %s210 = sphi 0, %s210
    %s212 = sphi 0, %s210
    %s213 = sphi 0, %s212
    %s227 = sphi 0, %s213
    %s231 = sphi 0, %s231
    %s233 = sphi 0, %s231
    %s234 = sphi 0, %s233
    %s248 = sphi 0, %s234
    %s252 = sphi 0, %s252
    %s254 = sphi 0, %s252
    %s255 = sphi 0, %s254
    %s269 = sphi 0, %s255
    %s273 = sphi 0, %s273
    %s275 = sphi 0, %s273
    %s276 = sphi 0, %s275
    %s290 = sphi 0, %s276
    %s294 = sphi 0, %s294
    %s296 = sphi 0, %s294
    %s297 = sphi 0, %s296
    %s311 = sphi 0, %s297
    %s315 = sphi 0, %s315
    %s317 = sphi 0, %s315
    %s318 = sphi 0, %s317
    %s332 = sphi 0, %s318
    %s336 = sphi 0, %s336
    %s338 = sphi 0, %s336
    %s339 = sphi 0, %s338
    %s353 = sphi 0, %s339
    %s357 = sphi 0, %s357
    %s359 = sphi 0, %s357
    %s360 = sphi 0, %s359
    %s374 = sphi 0, %s360
    %s378 = sphi 0, %s378
    %s380 = sphi 0, %s378
    %s381 = sphi 0, %s380
    %s395 = sphi 0, %s381
    %s399 = sphi 0, %s399
    %s401 = sphi 0, %s399
    %s402 = sphi 0, %s401
    %s416 = sphi 0, %s402
    %s422 = sphi 0, %s424
    %s425 = sphi 0, %s422
    %s426 = sphi 0, %s425
    %s442 = sphi 0, %s426
  $region4: #{multimodal_regnet_forward.1} parent=0 // loop_header_branch
    %27 = sbr.rel (%p25) target = $region8
  $region5: #{multimodal_regnet_forward.1} parent=0 // loop_body
    %s29 = ssub.s32 %s24, 1
    %s30 = ssub.s32 %s24, 2
    %s31 = sadd.s32 %s24, 1
    %s32 = ssub.s32 %s24, %s31
    %p33 = scmp.eq.s32.totalorder %s32, 0
    %s35 = sadd.s32 %s34, 1
    %s36 = scalar_select %p33, %s34, %s35
    %p39 = pneg %p33
    %p40 = scmp.eq.s32.totalorder %s24, 1
    %p41 = por %p39, %p40
    %p42 = scmp.ne.s32.totalorder %s34, %s37
    %p43 = scmp.eq.s32.totalorder %s24, 0
    %p44 = por %p42, %p43
    %p45 = scmp.ne.s32.totalorder %s34, %s37
    %p46 = scmp.eq.s32.totalorder %s29, 1
    %p47 = por %p45, %p46
    %p48 = scmp.ne.s32.totalorder %s37, %s38
    %p49 = scmp.eq.s32.totalorder %s29, 0
    %p50 = por %p48, %p49
    %p51 = scmp.ne.s32.totalorder %s37, %s38
    %p52 = scmp.eq.s32.totalorder %s30, 1
    %p53 = por %p51, %p52
    %p55 = scmp.ne.s32.totalorder %s38, %s54
    %p56 = scmp.eq.s32.totalorder %s30, 0
    %p57 = por %p55, %p56
    %s58 = ssub.s32 %s24, %s31
    %p59 = scmp.eq.s32.totalorder %s58, 0
    %s61 = sadd.s32 %s60, 1
    %s62 = scalar_select %p59, %s60, %s61
    %p65 = pneg %p59
    %p66 = scmp.eq.s32.totalorder %s24, 1
    %p67 = por %p65, %p66
    %p68 = scmp.ne.s32.totalorder %s60, %s63
    %p69 = scmp.eq.s32.totalorder %s24, 0
    %p70 = por %p68, %p69
    %p71 = scmp.ne.s32.totalorder %s60, %s63
    %p72 = scmp.eq.s32.totalorder %s29, 1
    %p73 = por %p71, %p72
    %p74 = scmp.ne.s32.totalorder %s63, %s64
    %p75 = scmp.eq.s32.totalorder %s29, 0
    %p76 = por %p74, %p75
    %p77 = scmp.ne.s32.totalorder %s63, %s64
    %p78 = scmp.eq.s32.totalorder %s30, 1
    %p79 = por %p77, %p78
    %p81 = scmp.ne.s32.totalorder %s64, %s80
    %p82 = scmp.eq.s32.totalorder %s30, 0
    %p83 = por %p81, %p82
    %s85 = sadd.s32 %s84, 1
    %p88 = scmp.eq.s32.totalorder %s24, 1
    %p89 = scmp.ne.s32.totalorder %s84, %s86
    %p90 = scmp.eq.s32.totalorder %s24, 0
    %p91 = por %p89, %p90
    %p92 = scmp.ne.s32.totalorder %s84, %s86
    %p93 = scmp.eq.s32.totalorder %s29, 1
    %p94 = por %p92, %p93
    %p95 = scmp.ne.s32.totalorder %s86, %s87
    %p96 = scmp.eq.s32.totalorder %s29, 0
    %p97 = por %p95, %p96
    %p98 = scmp.ne.s32.totalorder %s86, %s87
    %p99 = scmp.eq.s32.totalorder %s30, 1
    %p100 = por %p98, %p99
    %p102 = scmp.ne.s32.totalorder %s87, %s101
    %p103 = scmp.eq.s32.totalorder %s30, 0
    %p104 = por %p102, %p103
    %s106 = sadd.s32 %s105, 1
    %p109 = scmp.eq.s32.totalorder %s24, 1
    %p110 = scmp.ne.s32.totalorder %s105, %s107
    %p111 = scmp.eq.s32.totalorder %s24, 0
    %p112 = por %p110, %p111
    %p113 = scmp.ne.s32.totalorder %s105, %s107
    %p114 = scmp.eq.s32.totalorder %s29, 1
    %p115 = por %p113, %p114
    %p116 = scmp.ne.s32.totalorder %s107, %s108
    %p117 = scmp.eq.s32.totalorder %s29, 0
    %p118 = por %p116, %p117
    %p119 = scmp.ne.s32.totalorder %s107, %s108
    %p120 = scmp.eq.s32.totalorder %s30, 1
    %p121 = por %p119, %p120
    %p123 = scmp.ne.s32.totalorder %s108, %s122
    %p124 = scmp.eq.s32.totalorder %s30, 0
    %p125 = por %p123, %p124
    %s127 = sadd.s32 %s126, 1
    %p130 = scmp.eq.s32.totalorder %s24, 1
    %p131 = scmp.ne.s32.totalorder %s126, %s128
    %p132 = scmp.eq.s32.totalorder %s24, 0
    %p133 = por %p131, %p132
    %p134 = scmp.ne.s32.totalorder %s126, %s128
    %p135 = scmp.eq.s32.totalorder %s29, 1
    %p136 = por %p134, %p135
    %p137 = scmp.ne.s32.totalorder %s128, %s129
    %p138 = scmp.eq.s32.totalorder %s29, 0
    %p139 = por %p137, %p138
    %p140 = scmp.ne.s32.totalorder %s128, %s129
    %p141 = scmp.eq.s32.totalorder %s30, 1
    %p142 = por %p140, %p141
    %p144 = scmp.ne.s32.totalorder %s129, %s143
    %p145 = scmp.eq.s32.totalorder %s30, 0
    %p146 = por %p144, %p145
    %s148 = sadd.s32 %s147, 1
    %p151 = scmp.eq.s32.totalorder %s24, 1
    %p152 = scmp.ne.s32.totalorder %s147, %s149
    %p153 = scmp.eq.s32.totalorder %s24, 0
    %p154 = por %p152, %p153
    %p155 = scmp.ne.s32.totalorder %s147, %s149
    %p156 = scmp.eq.s32.totalorder %s29, 1
    %p157 = por %p155, %p156
    %p158 = scmp.ne.s32.totalorder %s149, %s150
    %p159 = scmp.eq.s32.totalorder %s29, 0
    %p160 = por %p158, %p159
    %p161 = scmp.ne.s32.totalorder %s149, %s150
    %p162 = scmp.eq.s32.totalorder %s30, 1
    %p163 = por %p161, %p162
    %p165 = scmp.ne.s32.totalorder %s150, %s164
    %p166 = scmp.eq.s32.totalorder %s30, 0
    %p167 = por %p165, %p166
    %s169 = sadd.s32 %s168, 1
    %p172 = scmp.eq.s32.totalorder %s24, 1
    %p173 = scmp.ne.s32.totalorder %s168, %s170
    %p174 = scmp.eq.s32.totalorder %s24, 0
    %p175 = por %p173, %p174
    %p176 = scmp.ne.s32.totalorder %s168, %s170
    %p177 = scmp.eq.s32.totalorder %s29, 1
    %p178 = por %p176, %p177
    %p179 = scmp.ne.s32.totalorder %s170, %s171
    %p180 = scmp.eq.s32.totalorder %s29, 0
    %p181 = por %p179, %p180
    %p182 = scmp.ne.s32.totalorder %s170, %s171
    %p183 = scmp.eq.s32.totalorder %s30, 1
    %p184 = por %p182, %p183
    %p186 = scmp.ne.s32.totalorder %s171, %s185
    %p187 = scmp.eq.s32.totalorder %s30, 0
    %p188 = por %p186, %p187
    %s190 = sadd.s32 %s189, 1
    %p193 = scmp.eq.s32.totalorder %s24, 1
    %p194 = scmp.ne.s32.totalorder %s189, %s191
    %p195 = scmp.eq.s32.totalorder %s24, 0
    %p196 = por %p194, %p195
    %p197 = scmp.ne.s32.totalorder %s189, %s191
    %p198 = scmp.eq.s32.totalorder %s29, 1
    %p199 = por %p197, %p198
    %p200 = scmp.ne.s32.totalorder %s191, %s192
    %p201 = scmp.eq.s32.totalorder %s29, 0
    %p202 = por %p200, %p201
    %p203 = scmp.ne.s32.totalorder %s191, %s192
    %p204 = scmp.eq.s32.totalorder %s30, 1
    %p205 = por %p203, %p204
    %p207 = scmp.ne.s32.totalorder %s192, %s206
    %p208 = scmp.eq.s32.totalorder %s30, 0
    %p209 = por %p207, %p208
    %s211 = sadd.s32 %s210, 1
    %p214 = scmp.eq.s32.totalorder %s24, 1
    %p215 = scmp.ne.s32.totalorder %s210, %s212
    %p216 = scmp.eq.s32.totalorder %s24, 0
    %p217 = por %p215, %p216
    %p218 = scmp.ne.s32.totalorder %s210, %s212
    %p219 = scmp.eq.s32.totalorder %s29, 1
    %p220 = por %p218, %p219
    %p221 = scmp.ne.s32.totalorder %s212, %s213
    %p222 = scmp.eq.s32.totalorder %s29, 0
    %p223 = por %p221, %p222
    %p224 = scmp.ne.s32.totalorder %s212, %s213
    %p225 = scmp.eq.s32.totalorder %s30, 1
    %p226 = por %p224, %p225
    %p228 = scmp.ne.s32.totalorder %s213, %s227
    %p229 = scmp.eq.s32.totalorder %s30, 0
    %p230 = por %p228, %p229
    %s232 = sadd.s32 %s231, 1
    %p235 = scmp.eq.s32.totalorder %s24, 1
    %p236 = scmp.ne.s32.totalorder %s231, %s233
    %p237 = scmp.eq.s32.totalorder %s24, 0
    %p238 = por %p236, %p237
    %p239 = scmp.ne.s32.totalorder %s231, %s233
    %p240 = scmp.eq.s32.totalorder %s29, 1
    %p241 = por %p239, %p240
    %p242 = scmp.ne.s32.totalorder %s233, %s234
    %p243 = scmp.eq.s32.totalorder %s29, 0
    %p244 = por %p242, %p243
    %p245 = scmp.ne.s32.totalorder %s233, %s234
    %p246 = scmp.eq.s32.totalorder %s30, 1
    %p247 = por %p245, %p246
    %p249 = scmp.ne.s32.totalorder %s234, %s248
    %p250 = scmp.eq.s32.totalorder %s30, 0
    %p251 = por %p249, %p250
    %s253 = sadd.s32 %s252, 1
    %p256 = scmp.eq.s32.totalorder %s24, 1
    %p257 = scmp.ne.s32.totalorder %s252, %s254
    %p258 = scmp.eq.s32.totalorder %s24, 0
    %p259 = por %p257, %p258
    %p260 = scmp.ne.s32.totalorder %s252, %s254
    %p261 = scmp.eq.s32.totalorder %s29, 1
    %p262 = por %p260, %p261
    %p263 = scmp.ne.s32.totalorder %s254, %s255
    %p264 = scmp.eq.s32.totalorder %s29, 0
    %p265 = por %p263, %p264
    %p266 = scmp.ne.s32.totalorder %s254, %s255
    %p267 = scmp.eq.s32.totalorder %s30, 1
    %p268 = por %p266, %p267
    %p270 = scmp.ne.s32.totalorder %s255, %s269
    %p271 = scmp.eq.s32.totalorder %s30, 0
    %p272 = por %p270, %p271
    %s274 = sadd.s32 %s273, 1
    %p277 = scmp.eq.s32.totalorder %s24, 1
    %p278 = scmp.ne.s32.totalorder %s273, %s275
    %p279 = scmp.eq.s32.totalorder %s24, 0
    %p280 = por %p278, %p279
    %p281 = scmp.ne.s32.totalorder %s273, %s275
    %p282 = scmp.eq.s32.totalorder %s29, 1
    %p283 = por %p281, %p282
    %p284 = scmp.ne.s32.totalorder %s275, %s276
    %p285 = scmp.eq.s32.totalorder %s29, 0
    %p286 = por %p284, %p285
    %p287 = scmp.ne.s32.totalorder %s275, %s276
    %p288 = scmp.eq.s32.totalorder %s30, 1
    %p289 = por %p287, %p288
    %p291 = scmp.ne.s32.totalorder %s276, %s290
    %p292 = scmp.eq.s32.totalorder %s30, 0
    %p293 = por %p291, %p292
    %s295 = sadd.s32 %s294, 1
    %p298 = scmp.eq.s32.totalorder %s24, 1
    %p299 = scmp.ne.s32.totalorder %s294, %s296
    %p300 = scmp.eq.s32.totalorder %s24, 0
    %p301 = por %p299, %p300
    %p302 = scmp.ne.s32.totalorder %s294, %s296
    %p303 = scmp.eq.s32.totalorder %s29, 1
    %p304 = por %p302, %p303
    %p305 = scmp.ne.s32.totalorder %s296, %s297
    %p306 = scmp.eq.s32.totalorder %s29, 0
    %p307 = por %p305, %p306
    %p308 = scmp.ne.s32.totalorder %s296, %s297
    %p309 = scmp.eq.s32.totalorder %s30, 1
    %p310 = por %p308, %p309
    %p312 = scmp.ne.s32.totalorder %s297, %s311
    %p313 = scmp.eq.s32.totalorder %s30, 0
    %p314 = por %p312, %p313
    %s316 = sadd.s32 %s315, 1
    %p319 = scmp.eq.s32.totalorder %s24, 1
    %p320 = scmp.ne.s32.totalorder %s315, %s317
    %p321 = scmp.eq.s32.totalorder %s24, 0
    %p322 = por %p320, %p321
    %p323 = scmp.ne.s32.totalorder %s315, %s317
    %p324 = scmp.eq.s32.totalorder %s29, 1
    %p325 = por %p323, %p324
    %p326 = scmp.ne.s32.totalorder %s317, %s318
    %p327 = scmp.eq.s32.totalorder %s29, 0
    %p328 = por %p326, %p327
    %p329 = scmp.ne.s32.totalorder %s317, %s318
    %p330 = scmp.eq.s32.totalorder %s30, 1
    %p331 = por %p329, %p330
    %p333 = scmp.ne.s32.totalorder %s318, %s332
    %p334 = scmp.eq.s32.totalorder %s30, 0
    %p335 = por %p333, %p334
    %s337 = sadd.s32 %s336, 1
    %p340 = scmp.eq.s32.totalorder %s24, 1
    %p341 = scmp.ne.s32.totalorder %s336, %s338
    %p342 = scmp.eq.s32.totalorder %s24, 0
    %p343 = por %p341, %p342
    %p344 = scmp.ne.s32.totalorder %s336, %s338
    %p345 = scmp.eq.s32.totalorder %s29, 1
    %p346 = por %p344, %p345
    %p347 = scmp.ne.s32.totalorder %s338, %s339
    %p348 = scmp.eq.s32.totalorder %s29, 0
    %p349 = por %p347, %p348
    %p350 = scmp.ne.s32.totalorder %s338, %s339
    %p351 = scmp.eq.s32.totalorder %s30, 1
    %p352 = por %p350, %p351
    %p354 = scmp.ne.s32.totalorder %s339, %s353
    %p355 = scmp.eq.s32.totalorder %s30, 0
    %p356 = por %p354, %p355
    %s358 = sadd.s32 %s357, 1
    %p361 = scmp.eq.s32.totalorder %s24, 1
    %p362 = scmp.ne.s32.totalorder %s357, %s359
    %p363 = scmp.eq.s32.totalorder %s24, 0
    %p364 = por %p362, %p363
    %p365 = scmp.ne.s32.totalorder %s357, %s359
    %p366 = scmp.eq.s32.totalorder %s29, 1
    %p367 = por %p365, %p366
    %p368 = scmp.ne.s32.totalorder %s359, %s360
    %p369 = scmp.eq.s32.totalorder %s29, 0
    %p370 = por %p368, %p369
    %p371 = scmp.ne.s32.totalorder %s359, %s360
    %p372 = scmp.eq.s32.totalorder %s30, 1
    %p373 = por %p371, %p372
    %p375 = scmp.ne.s32.totalorder %s360, %s374
    %p376 = scmp.eq.s32.totalorder %s30, 0
    %p377 = por %p375, %p376
    %s379 = sadd.s32 %s378, 1
    %p382 = scmp.eq.s32.totalorder %s24, 1
    %p383 = scmp.ne.s32.totalorder %s378, %s380
    %p384 = scmp.eq.s32.totalorder %s24, 0
    %p385 = por %p383, %p384
    %p386 = scmp.ne.s32.totalorder %s378, %s380
    %p387 = scmp.eq.s32.totalorder %s29, 1
    %p388 = por %p386, %p387
    %p389 = scmp.ne.s32.totalorder %s380, %s381
    %p390 = scmp.eq.s32.totalorder %s29, 0
    %p391 = por %p389, %p390
    %p392 = scmp.ne.s32.totalorder %s380, %s381
    %p393 = scmp.eq.s32.totalorder %s30, 1
    %p394 = por %p392, %p393
    %p396 = scmp.ne.s32.totalorder %s381, %s395
    %p397 = scmp.eq.s32.totalorder %s30, 0
    %p398 = por %p396, %p397
    %s400 = sadd.s32 %s399, 1
    %p403 = scmp.eq.s32.totalorder %s24, 1
    %p404 = scmp.ne.s32.totalorder %s399, %s401
    %p405 = scmp.eq.s32.totalorder %s24, 0
    %p406 = por %p404, %p405
    %p407 = scmp.ne.s32.totalorder %s399, %s401
    %p408 = scmp.eq.s32.totalorder %s29, 1
    %p409 = por %p407, %p408
    %p410 = scmp.ne.s32.totalorder %s401, %s402
    %p411 = scmp.eq.s32.totalorder %s29, 0
    %p412 = por %p410, %p411
    %p413 = scmp.ne.s32.totalorder %s401, %s402
    %p414 = scmp.eq.s32.totalorder %s30, 1
    %p415 = por %p413, %p414
    %p417 = scmp.ne.s32.totalorder %s402, %s416
    %p418 = scmp.eq.s32.totalorder %s30, 0
    %p419 = por %p417, %p418
    %s420 = ssub.s32 %s24, %s31
    %p421 = scmp.eq.s32.totalorder %s420, 0
    %s423 = sadd.s32 %s422, 1
    %s424 = scalar_select %p421, %s422, %s423
    %p427 = pneg %p421
    %p428 = scmp.eq.s32.totalorder %s24, 1
    %p429 = por %p427, %p428
    %p430 = scmp.ne.s32.totalorder %s422, %s425
    %p431 = scmp.eq.s32.totalorder %s24, 0
    %p432 = por %p430, %p431
    %p433 = scmp.ne.s32.totalorder %s422, %s425
    %p434 = scmp.eq.s32.totalorder %s29, 1
    %p435 = por %p433, %p434
    %p436 = scmp.ne.s32.totalorder %s425, %s426
    %p437 = scmp.eq.s32.totalorder %s29, 0
    %p438 = por %p436, %p437
    %p439 = scmp.ne.s32.totalorder %s425, %s426
    %p440 = scmp.eq.s32.totalorder %s30, 1
    %p441 = por %p439, %p440
    %p443 = scmp.ne.s32.totalorder %s426, %s442
    %p444 = scmp.eq.s32.totalorder %s30, 0
    %p445 = por %p443, %p444
    %p446 = scmp.le.s32.totalorder 1, %s24
    %p447 = scmp.lt.s32.totalorder %s24, 3
    %p448 = pnand %p446, %p447
    %p449 = pneg %p448
    // Predicated region
    $region9: #{multimodal_regnet_forward.1} parent=5 // pred_check
      _
    $region10: #{multimodal_regnet_forward.1} parent=5 // pred_check_branch
      %451 = sbr.rel (%p448) target = $region12
    $region11: #{multimodal_regnet_forward.1} parent=5 // pred_region
      %s452 = ssub.s32 %s24, 1
      // Predicated region
      $region13: #{multimodal_regnet_forward.1} parent=11 // pred_check
        %p453 = pneg %p97
      $region14: #{multimodal_regnet_forward.1} parent=11 // pred_check_branch
        %455 = sbr.rel (%p453) target = $region16
      $region15: #{multimodal_regnet_forward.1} parent=11 // pred_region
        _
      $region16: #{multimodal_regnet_forward.1} parent=11 // pred_fallthru
        _
      // Predicated region
      $region17: #{multimodal_regnet_forward.1} parent=11 // pred_check
        %p456 = pneg %p118
      $region18: #{multimodal_regnet_forward.1} parent=11 // pred_check_branch
        %458 = sbr.rel (%p456) target = $region20
      $region19: #{multimodal_regnet_forward.1} parent=11 // pred_region
        _
      $region20: #{multimodal_regnet_forward.1} parent=11 // pred_fallthru
        _
      // Predicated region
      $region21: #{multimodal_regnet_forward.1} parent=11 // pred_check
        %p459 = pneg %p139
      $region22: #{multimodal_regnet_forward.1} parent=11 // pred_check_branch
        %461 = sbr.rel (%p459) target = $region24
      $region23: #{multimodal_regnet_forward.1} parent=11 // pred_region
        _
      $region24: #{multimodal_regnet_forward.1} parent=11 // pred_fallthru
        _
      // Predicated region
      $region25: #{multimodal_regnet_forward.1} parent=11 // pred_check
        %p462 = pneg %p160
      $region26: #{multimodal_regnet_forward.1} parent=11 // pred_check_branch
        %464 = sbr.rel (%p462) target = $region28
      $region27: #{multimodal_regnet_forward.1} parent=11 // pred_region
        _
      $region28: #{multimodal_regnet_forward.1} parent=11 // pred_fallthru
        _
      // Predicated region
      $region29: #{multimodal_regnet_forward.1} parent=11 // pred_check
        %p465 = pneg %p181
      $region30: #{multimodal_regnet_forward.1} parent=11 // pred_check_branch
        %467 = sbr.rel (%p465) target = $region32
      $region31: #{multimodal_regnet_forward.1} parent=11 // pred_region
        _
      $region32: #{multimodal_regnet_forward.1} parent=11 // pred_fallthru
        _
      // Predicated region
      $region33: #{multimodal_regnet_forward.1} parent=11 // pred_check
        %p468 = pneg %p202
      $region34: #{multimodal_regnet_forward.1} parent=11 // pred_check_branch
        %470 = sbr.rel (%p468) target = $region36
      $region35: #{multimodal_regnet_forward.1} parent=11 // pred_region
        _
      $region36: #{multimodal_regnet_forward.1} parent=11 // pred_fallthru
        _
      // Predicated region
      $region37: #{multimodal_regnet_forward.1} parent=11 // pred_check
        %p471 = pneg %p223
      $region38: #{multimodal_regnet_forward.1} parent=11 // pred_check_branch
        %473 = sbr.rel (%p471) target = $region40
      $region39: #{multimodal_regnet_forward.1} parent=11 // pred_region
        _
      $region40: #{multimodal_regnet_forward.1} parent=11 // pred_fallthru
        _
      // Predicated region
      $region41: #{multimodal_regnet_forward.1} parent=11 // pred_check
        %p474 = pneg %p244
      $region42: #{multimodal_regnet_forward.1} parent=11 // pred_check_branch
        %476 = sbr.rel (%p474) target = $region44
      $region43: #{multimodal_regnet_forward.1} parent=11 // pred_region
        _
      $region44: #{multimodal_regnet_forward.1} parent=11 // pred_fallthru
        _
      // Predicated region
      $region45: #{multimodal_regnet_forward.1} parent=11 // pred_check
        %p477 = pneg %p265
      $region46: #{multimodal_regnet_forward.1} parent=11 // pred_check_branch
        %479 = sbr.rel (%p477) target = $region48
      $region47: #{multimodal_regnet_forward.1} parent=11 // pred_region
        _
      $region48: #{multimodal_regnet_forward.1} parent=11 // pred_fallthru
        _
      // Predicated region
      $region49: #{multimodal_regnet_forward.1} parent=11 // pred_check
        %p480 = pneg %p286
      $region50: #{multimodal_regnet_forward.1} parent=11 // pred_check_branch
        %482 = sbr.rel (%p480) target = $region52
      $region51: #{multimodal_regnet_forward.1} parent=11 // pred_region
        _
      $region52: #{multimodal_regnet_forward.1} parent=11 // pred_fallthru
        _
      // Predicated region
      $region53: #{multimodal_regnet_forward.1} parent=11 // pred_check
        %p483 = pneg %p307
      $region54: #{multimodal_regnet_forward.1} parent=11 // pred_check_branch
        %485 = sbr.rel (%p483) target = $region56
      $region55: #{multimodal_regnet_forward.1} parent=11 // pred_region
        _
      $region56: #{multimodal_regnet_forward.1} parent=11 // pred_fallthru
        _
      // Predicated region
      $region57: #{multimodal_regnet_forward.1} parent=11 // pred_check
        %p486 = pneg %p328
      $region58: #{multimodal_regnet_forward.1} parent=11 // pred_check_branch
        %488 = sbr.rel (%p486) target = $region60
      $region59: #{multimodal_regnet_forward.1} parent=11 // pred_region
        _
      $region60: #{multimodal_regnet_forward.1} parent=11 // pred_fallthru
        _
      // Predicated region
      $region61: #{multimodal_regnet_forward.1} parent=11 // pred_check
        %p489 = pneg %p349
      $region62: #{multimodal_regnet_forward.1} parent=11 // pred_check_branch
        %491 = sbr.rel (%p489) target = $region64
      $region63: #{multimodal_regnet_forward.1} parent=11 // pred_region
        _
      $region64: #{multimodal_regnet_forward.1} parent=11 // pred_fallthru
        _
      // Predicated region
      $region65: #{multimodal_regnet_forward.1} parent=11 // pred_check
        %p492 = pneg %p370
      $region66: #{multimodal_regnet_forward.1} parent=11 // pred_check_branch
        %494 = sbr.rel (%p492) target = $region68
      $region67: #{multimodal_regnet_forward.1} parent=11 // pred_region
        _
      $region68: #{multimodal_regnet_forward.1} parent=11 // pred_fallthru
        _
      // Predicated region
      $region69: #{multimodal_regnet_forward.1} parent=11 // pred_check
        %p495 = pneg %p391
      $region70: #{multimodal_regnet_forward.1} parent=11 // pred_check_branch
        %497 = sbr.rel (%p495) target = $region72
      $region71: #{multimodal_regnet_forward.1} parent=11 // pred_region
        _
      $region72: #{multimodal_regnet_forward.1} parent=11 // pred_fallthru
        _
      // Predicated region
      $region73: #{multimodal_regnet_forward.1} parent=11 // pred_check
        %p498 = pneg %p412
      $region74: #{multimodal_regnet_forward.1} parent=11 // pred_check_branch
        %500 = sbr.rel (%p498) target = $region76
      $region75: #{multimodal_regnet_forward.1} parent=11 // pred_region
        _
      $region76: #{multimodal_regnet_forward.1} parent=11 // pred_fallthru
        _
    $region12: #{multimodal_regnet_forward.1} parent=5 // pred_fallthru
      _
    %p501 = scmp.lt.s32.totalorder %s24, 2
    // Predicated region
    $region77: #{multimodal_regnet_forward.1} parent=5 // pred_check
      %p502 = pneg %p501
    $region78: #{multimodal_regnet_forward.1} parent=5 // pred_check_branch
      %504 = sbr.rel (%p502) target = $region80
    $region79: #{multimodal_regnet_forward.1} parent=5 // pred_region
      // Predicated region
      $region81: #{multimodal_regnet_forward.1} parent=79 // pred_check
        %p505 = pneg %p44
      $region82: #{multimodal_regnet_forward.1} parent=79 // pred_check_branch
        %507 = sbr.rel (%p505) target = $region84
      $region83: #{multimodal_regnet_forward.1} parent=79 // pred_region
        %s508 = smul.u32 162, %s24
        %p509 = scmp.lt.s32.totalorder %s508, 323
        %s510 = scalar_select %p509, %s508, 323
        %s511 = smul.addr %s510, 4
        %s512 = scalar_lea.vmem %s0, %s511
        %s513 = smul.u32 162, %s24
      $region84: #{multimodal_regnet_forward.1} parent=79 // pred_fallthru
        _
      // Predicated region
      $region85: #{multimodal_regnet_forward.1} parent=79 // pred_check
        %p514 = pneg %p70
      $region86: #{multimodal_regnet_forward.1} parent=79 // pred_check_branch
        %516 = sbr.rel (%p514) target = $region88
      $region87: #{multimodal_regnet_forward.1} parent=79 // pred_region
        %p517 = scmp.lt.s32.totalorder %s24, 1
        %s518 = scalar_select %p517, %s24, 1
        %s519 = smul.addr %s518, 8
        %s520 = scalar_lea.vmem %s1, %s519
      $region88: #{multimodal_regnet_forward.1} parent=79 // pred_fallthru
        _
    $region80: #{multimodal_regnet_forward.1} parent=5 // pred_fallthru
      _
    %p521 = scmp.le.s32.totalorder 1, %s24
    %p522 = scmp.lt.s32.totalorder %s24, 3
    %p523 = pnand %p521, %p522
    %p524 = pneg %p523
    // Predicated region
    $region89: #{multimodal_regnet_forward.1} parent=5 // pred_check
      _
    $region90: #{multimodal_regnet_forward.1} parent=5 // pred_check_branch
      %526 = sbr.rel (%p523) target = $region92
    $region91: #{multimodal_regnet_forward.1} parent=5 // pred_region
      %s527 = ssub.s32 %s24, 1
      %s528 = smul.u32 162, %s29
      %p529 = scmp.lt.s32.totalorder %s528, 323
      %s530 = scalar_select %p529, %s528, 323
      %s531 = smul.addr %s530, 4
      %s532 = scalar_lea.vmem %s0, %s531
      %p533 = pneg %p50
      %p534 = pneg %p47
      %p535 = scmp.lt.s32.totalorder %s29, 1
      %s536 = scalar_select %p535, %s29, 1
      %s537 = smul.addr %s536, 8
      %s538 = scalar_lea.vmem %s1, %s537
      %p539 = pneg %p76
      %p540 = pneg %p73
      %p541 = pneg %p97
      %p542 = pneg %p94
      %p543 = pneg %p118
      %p544 = pneg %p115
      %p545 = pneg %p139
      %p546 = pneg %p136
      %p547 = pneg %p160
      %p548 = pneg %p157
      %p549 = pneg %p181
      %p550 = pneg %p178
      %p551 = pneg %p202
      %p552 = pneg %p199
      %p553 = pneg %p223
      %p554 = pneg %p220
      %p555 = pneg %p244
      %p556 = pneg %p241
      %p557 = pneg %p265
      %p558 = pneg %p262
      %p559 = pneg %p286
      %p560 = pneg %p283
      %p561 = pneg %p307
      %p562 = pneg %p304
      %p563 = pneg %p328
      %p564 = pneg %p325
      %p565 = pneg %p349
      %p566 = pneg %p346
      %p567 = pneg %p370
      %p568 = pneg %p367
      %p569 = pneg %p391
      %p570 = pneg %p388
      %p571 = pneg %p412
      %p572 = pneg %p409
      %p573 = pneg %p438
      %p574 = pneg %p435
      %p575 = scmp.lt.s32.totalorder %s29, 1
      %s576 = scalar_select %p575, %s29, 1
      %s577 = smul.addr %s576, 8
      %s578 = scalar_lea.vmem %s18, %s577
      %s579 = smul.u32 162, %s29
      %p580 = scmp.lt.s32.totalorder %s579, 323
      %s581 = scalar_select %p580, %s579, 323
      %s582 = smul.addr %s581, 4
      %s583 = scalar_lea.vmem %s0, %s582
      %s584 = smul.u32 162, %s29
      %p585 = scmp.lt.s32.totalorder %s29, 1
      %s586 = scalar_select %p585, %s29, 1
      %s587 = smul.addr %s586, 8
      %s588 = scalar_lea.vmem %s1, %s587
      %p589 = scmp.lt.s32.totalorder %s29, 1
      %s590 = scalar_select %p589, %s29, 1
      %s591 = smul.addr %s590, 8
      %s592 = scalar_lea.vmem %s18, %s591
      %v594 = vld [vmem:[%s583] sm:$0xf]
      %v595 = vld [vmem:[%s583 + $0x4] sm:$0xf]
      %v596 = vld [vmem:[%s583 + $0x8] sm:$0xf]
      %v597 = vld [vmem:[%s583 + $0xc] sm:$0xf]
      %v598 = vld [vmem:[%s583 + $0x10] sm:$0xf]
      %v599 = vld [vmem:[%s583 + $0x14] sm:$0xf]
      %v600 = vld [vmem:[%s583 + $0x18] sm:$0xf]
      %v601 = vld [vmem:[%s583 + $0x1c] sm:$0xf]
      %v602 = vld [vmem:[%s583 + $0x20] sm:$0xf]
      %v603 = vld [vmem:[%s583 + $0x24] sm:$0xf]
      %v604 = vld [vmem:[%s583 + $0x28] sm:$0xf]
      %v605 = vld [vmem:[%s583 + $0x2c] sm:$0xf]
      %v606 = vld [vmem:[%s583 + $0x30] sm:$0xf]
      %v607 = vld [vmem:[%s583 + $0x34] sm:$0xf]
      %v608 = vld [vmem:[%s583 + $0x38] sm:$0xf]
      %v609 = vld [vmem:[%s583 + $0x3c] sm:$0xf]
      %v610 = vld [vmem:[%s583 + $0x40] sm:$0xf]
      %v611 = vld [vmem:[%s583 + $0x44] sm:$0xf]
      %v612 = vld [vmem:[%s583 + $0x48] sm:$0xf]
      %v613 = vld [vmem:[%s583 + $0x4c] sm:$0xf]
      %v614 = vld [vmem:[%s583 + $0x50] sm:$0xf]
      %v615 = vld [vmem:[%s583 + $0x54] sm:$0xf]
      %v616 = vld [vmem:[%s583 + $0x58] sm:$0xf]
      %v617 = vld [vmem:[%s583 + $0x5c] sm:$0xf]
      %v618 = vld [vmem:[%s583 + $0x60] sm:$0xf]
      %v619 = vld [vmem:[%s583 + $0x64] sm:$0xf]
      %v620 = vld [vmem:[%s583 + $0x68] sm:$0xf]
      %v621 = vld [vmem:[%s583 + $0x6c] sm:$0xf]
      %v622 = vld [vmem:[%s583 + $0x70] sm:$0xf]
      %v623 = vld [vmem:[%s583 + $0x74] sm:$0xf]
      %v624 = vld [vmem:[%s583 + $0x78] sm:$0xf]
      %v625 = vld [vmem:[%s583 + $0x7c] sm:$0xf]
      %v626 = vld [vmem:[%s583 + $0x80] sm:$0xf]
      %v627 = vld [vmem:[%s583 + $0x84] sm:$0xf]
      %v628 = vld [vmem:[%s583 + $0x88] sm:$0xf]
      %v629 = vld [vmem:[%s583 + $0x8c] sm:$0xf]
      %v630 = vld [vmem:[%s583 + $0x90] sm:$0xf]
      %v631 = vld [vmem:[%s583 + $0x94] sm:$0xf]
      %v632 = vld [vmem:[%s583 + $0x98] sm:$0xf]
      %v633 = vld [vmem:[%s583 + $0x9c] sm:$0xf]
      %v634 = vld [vmem:[%s583 + $0xa0] sm:$0xf]
      %v635 = vld [vmem:[%s583 + $0xa4] sm:$0xf]
      %v636 = vld [vmem:[%s583 + $0xa8] sm:$0xf]
      %v637 = vld [vmem:[%s583 + $0xac] sm:$0xf]
      %v638 = vld [vmem:[%s583 + $0xb0] sm:$0xf]
      %v639 = vld [vmem:[%s583 + $0xb4] sm:$0xf]
      %v640 = vld [vmem:[%s583 + $0xb8] sm:$0xf]
      %v641 = vld [vmem:[%s583 + $0xbc] sm:$0xf]
      %v642 = vld [vmem:[%s583 + $0xc0] sm:$0xf]
      %v643 = vld [vmem:[%s583 + $0xc4] sm:$0xf]
      %v644 = vld [vmem:[%s583 + $0xc8] sm:$0xf]
      %v645 = vld [vmem:[%s583 + $0xcc] sm:$0xf]
      %v646 = vld [vmem:[%s583 + $0xd0] sm:$0xf]
      %v647 = vld [vmem:[%s583 + $0xd4] sm:$0xf]
      %v648 = vld [vmem:[%s583 + $0xd8] sm:$0xf]
      %v649 = vld [vmem:[%s583 + $0xdc] sm:$0xf]
      %v650 = vld [vmem:[%s583 + $0xe0] sm:$0xf]
      %v651 = vld [vmem:[%s583 + $0xe4] sm:$0xf]
      %v652 = vld [vmem:[%s583 + $0xe8] sm:$0xf]
      %v653 = vld [vmem:[%s583 + $0xec] sm:$0xf]
      %v654 = vld [vmem:[%s583 + $0xf0] sm:$0xf]
      %v655 = vld [vmem:[%s583 + $0xf4] sm:$0xf]
      %v656 = vld [vmem:[%s583 + $0xf8] sm:$0xf]
      %v657 = vld [vmem:[%s583 + $0xfc] sm:$0xf]
      %v658 = vld [vmem:[%s583 + $0x100] sm:$0xf]
      %v659 = vld [vmem:[%s583 + $0x104] sm:$0xf]
      %v660 = vld [vmem:[%s583 + $0x108] sm:$0xf]
      %v661 = vld [vmem:[%s583 + $0x10c] sm:$0xf]
      %v662 = vld [vmem:[%s583 + $0x110] sm:$0xf]
      %v663 = vld [vmem:[%s583 + $0x114] sm:$0xf]
      %v664 = vld [vmem:[%s583 + $0x118] sm:$0xf]
      %v665 = vld [vmem:[%s583 + $0x11c] sm:$0xf]
      %v666 = vld [vmem:[%s583 + $0x120] sm:$0xf]
      %v667 = vld [vmem:[%s583 + $0x124] sm:$0xf]
      %v668 = vld [vmem:[%s583 + $0x128] sm:$0xf]
      %v669 = vld [vmem:[%s583 + $0x12c] sm:$0xf]
      %v670 = vld [vmem:[%s583 + $0x130] sm:$0xf]
      %v671 = vld [vmem:[%s583 + $0x134] sm:$0xf]
      %v672 = vld [vmem:[%s583 + $0x138] sm:$0xf]
      %v673 = vld [vmem:[%s583 + $0x13c] sm:$0xf]
      %v674 = vld [vmem:[%s583 + $0x140] sm:$0xf]
      %v675 = vld [vmem:[%s583 + $0x144] sm:$0xf]
      %v676 = vld [vmem:[%s583 + $0x148] sm:$0xf]
      %v677 = vld [vmem:[%s583 + $0x14c] sm:$0xf]
      %v678 = vld [vmem:[%s583 + $0x150] sm:$0xf]
      %v679 = vld [vmem:[%s583 + $0x154] sm:$0xf]
      %v680 = vld [vmem:[%s583 + $0x158] sm:$0xf]
      %v681 = vld [vmem:[%s583 + $0x15c] sm:$0xf]
      %v682 = vld [vmem:[%s583 + $0x160] sm:$0xf]
      %v683 = vld [vmem:[%s583 + $0x164] sm:$0xf]
      %v684 = vld [vmem:[%s583 + $0x168] sm:$0xf]
      %v685 = vld [vmem:[%s583 + $0x16c] sm:$0xf]
      %v686 = vld [vmem:[%s583 + $0x170] sm:$0xf]
      %v687 = vld [vmem:[%s583 + $0x174] sm:$0xf]
      %v688 = vld [vmem:[%s583 + $0x178] sm:$0xf]
      %v689 = vld [vmem:[%s583 + $0x17c] sm:$0xf]
      %v690 = vld [vmem:[%s583 + $0x180] sm:$0xf]
      %v691 = vld [vmem:[%s583 + $0x184] sm:$0xf]
      %v692 = vld [vmem:[%s583 + $0x188] sm:$0xf]
      %v693 = vld [vmem:[%s583 + $0x18c] sm:$0xf]
      %v694 = vld [vmem:[%s583 + $0x190] sm:$0xf]
      %v695 = vld [vmem:[%s583 + $0x194] sm:$0xf]
      %v696 = vld [vmem:[%s583 + $0x198] sm:$0xf]
      %v697 = vld [vmem:[%s583 + $0x19c] sm:$0xf]
      %v698 = vld [vmem:[%s583 + $0x1a0] sm:$0xf]
      %v699 = vld [vmem:[%s583 + $0x1a4] sm:$0xf]
      %v700 = vld [vmem:[%s583 + $0x1a8] sm:$0xf]
      %v701 = vld [vmem:[%s583 + $0x1ac] sm:$0xf]
      %v702 = vld [vmem:[%s583 + $0x1b0] sm:$0xf]
      %v703 = vld [vmem:[%s583 + $0x1b4] sm:$0xf]
      %v704 = vld [vmem:[%s583 + $0x1b8] sm:$0xf]
      %v705 = vld [vmem:[%s583 + $0x1bc] sm:$0xf]
      %v706 = vld [vmem:[%s583 + $0x1c0] sm:$0xf]
      %v707 = vld [vmem:[%s583 + $0x1c4] sm:$0xf]
      %v708 = vld [vmem:[%s583 + $0x1c8] sm:$0xf]
      %v709 = vld [vmem:[%s583 + $0x1cc] sm:$0xf]
      %v710 = vld [vmem:[%s583 + $0x1d0] sm:$0xf]
      %v711 = vld [vmem:[%s583 + $0x1d4] sm:$0xf]
      %v712 = vld [vmem:[%s583 + $0x1d8] sm:$0xf]
      %v713 = vld [vmem:[%s583 + $0x1dc] sm:$0xf]
      %v714 = vld [vmem:[%s583 + $0x1e0] sm:$0xf]
      %v715 = vld [vmem:[%s583 + $0x1e4] sm:$0xf]
      %v716 = vld [vmem:[%s583 + $0x1e8] sm:$0xf]
      %v717 = vld [vmem:[%s583 + $0x1ec] sm:$0xf]
      %v718 = vld [vmem:[%s583 + $0x1f0] sm:$0xf]
      %v719 = vld [vmem:[%s583 + $0x1f4] sm:$0xf]
      %v720 = vld [vmem:[%s583 + $0x1f8] sm:$0xf]
      %v721 = vld [vmem:[%s583 + $0x1fc] sm:$0xf]
      %v722 = vld [vmem:[%s583 + $0x200] sm:$0xf]
      %v723 = vld [vmem:[%s583 + $0x204] sm:$0xf]
      %v724 = vld [vmem:[%s583 + $0x208] sm:$0xf]
      %v725 = vld [vmem:[%s583 + $0x20c] sm:$0xf]
      %v726 = vld [vmem:[%s583 + $0x210] sm:$0xf]
      %v727 = vld [vmem:[%s583 + $0x214] sm:$0xf]
      %v728 = vld [vmem:[%s583 + $0x218] sm:$0xf]
      %v729 = vld [vmem:[%s583 + $0x21c] sm:$0xf]
      %v730 = vld [vmem:[%s583 + $0x220] sm:$0xf]
      %v731 = vld [vmem:[%s583 + $0x224] sm:$0xf]
      %v732 = vld [vmem:[%s583 + $0x228] sm:$0xf]
      %v733 = vld [vmem:[%s583 + $0x22c] sm:$0xf]
      %v734 = vld [vmem:[%s583 + $0x230] sm:$0xf]
      %v735 = vld [vmem:[%s583 + $0x234] sm:$0xf]
      %v736 = vld [vmem:[%s583 + $0x238] sm:$0xf]
      %v737 = vld [vmem:[%s583 + $0x23c] sm:$0xf]
      %v738 = vld [vmem:[%s583 + $0x240] sm:$0xf]
      %v739 = vld [vmem:[%s583 + $0x244] sm:$0xf]
      %v740 = vld [vmem:[%s583 + $0x248] sm:$0xf]
      %v741 = vld [vmem:[%s583 + $0x24c] sm:$0xf]
      %v742 = vld [vmem:[%s583 + $0x250] sm:$0xf]
      %v743 = vld [vmem:[%s583 + $0x254] sm:$0xf]
      %v744 = vld [vmem:[%s583 + $0x258] sm:$0xf]
      %v745 = vld [vmem:[%s583 + $0x25c] sm:$0xf]
      %v746 = vld [vmem:[%s583 + $0x260] sm:$0xf]
      %v747 = vld [vmem:[%s583 + $0x264] sm:$0xf]
      %v748 = vld [vmem:[%s583 + $0x268] sm:$0xf]
      %v749 = vld [vmem:[%s583 + $0x26c] sm:$0xf]
      %v750 = vld [vmem:[%s583 + $0x270] sm:$0xf]
      %v751 = vld [vmem:[%s583 + $0x274] sm:$0xf]
      %v752 = vld [vmem:[%s583 + $0x278] sm:$0xf]
      %v753 = vld [vmem:[%s583 + $0x27c] sm:$0xf]
      %v754 = vld [vmem:[%s583 + $0x280] sm:$0xf]
      %v755 = vld [vmem:[%s583 + $0x284] sm:$0xf]
      %v756 = vld [vmem:[%s2] sm:$0xf]
      %v757 = vld [vmem:[%s2 + $0x4] sm:$0xf]
      %v758 = vld [vmem:[%s2 + $0x8] sm:$0xf]
      %v759 = vld [vmem:[%s2 + $0xc] sm:$0xf]
      %v760 = vld [vmem:[%s2 + $0x10] sm:$0xf]
      %v761 = vld [vmem:[%s2 + $0x14] sm:$0xf]
      %v762 = vld [vmem:[%s2 + $0x18] sm:$0xf]
      %v763 = vld [vmem:[%s2 + $0x1c] sm:$0xf]
      %v764 = vld [vmem:[%s2 + $0x20] sm:$0xf]
      %v765 = vld [vmem:[%s2 + $0x24] sm:$0xf]
      %v766 = vld [vmem:[%s2 + $0x28] sm:$0xf]
      %v767 = vld [vmem:[%s2 + $0x2c] sm:$0xf]
      %v768 = vld [vmem:[%s2 + $0x30] sm:$0xf]
      %v769 = vld [vmem:[%s2 + $0x34] sm:$0xf]
      %v770 = vld [vmem:[%s2 + $0x38] sm:$0xf]
      %v771 = vld [vmem:[%s2 + $0x3c] sm:$0xf]
      %v772 = vld [vmem:[%s3] sm:$0x1]
      %v774 = vlaneseq
      %v775 = vshrl.u32 %v774, 7
      %v776 = vsub.s32 0, %v775
      %v777 = vrot.slane %v772, %v776
      %v941 = vunpack.c.l.b16 %v594
      %v942 = vunpack.c.l.b16 %v595
      %v943 = vunpack.c.l.b16 %v596
      %v944 = vunpack.c.l.b16 %v597
      %v945 = vunpack.c.l.b16 %v598
      %v946 = vunpack.c.l.b16 %v599
      %v947 = vunpack.c.l.b16 %v600
      %v948 = vunpack.c.l.b16 %v601
      %v949 = vunpack.c.l.b16 %v602
      %v950 = vunpack.c.l.b16 %v603
      %v951 = vunpack.c.l.b16 %v604
      %v952 = vunpack.c.l.b16 %v605
      %v953 = vunpack.c.l.b16 %v606
      %v954 = vunpack.c.l.b16 %v607
      %v955 = vunpack.c.l.b16 %v608
      %v956 = vunpack.c.l.b16 %v609
      %v957 = vunpack.c.l.b16 %v610
      %v958 = vunpack.c.l.b16 %v611
      %v959 = vunpack.c.l.b16 %v612
      %v960 = vunpack.c.l.b16 %v613
      %v961 = vunpack.c.l.b16 %v614
      %v962 = vunpack.c.l.b16 %v615
      %v963 = vunpack.c.l.b16 %v616
      %v964 = vunpack.c.l.b16 %v617
      %v965 = vunpack.c.l.b16 %v618
      %v966 = vunpack.c.l.b16 %v619
      %v967 = vunpack.c.l.b16 %v620
      %v968 = vunpack.c.l.b16 %v621
      %v969 = vunpack.c.l.b16 %v622
      %v970 = vunpack.c.l.b16 %v623
      %v971 = vunpack.c.l.b16 %v624
      %v972 = vunpack.c.l.b16 %v625
      %v973 = vunpack.c.l.b16 %v626
      %v974 = vunpack.c.l.b16 %v627
      %v975 = vunpack.c.l.b16 %v628
      %v976 = vunpack.c.l.b16 %v629
      %v977 = vunpack.c.l.b16 %v630
      %v978 = vunpack.c.l.b16 %v631
      %v979 = vunpack.c.l.b16 %v632
      %v980 = vunpack.c.l.b16 %v633
      %v981 = vunpack.c.l.b16 %v634
      %v982 = vunpack.c.l.b16 %v635
      %v983 = vunpack.c.l.b16 %v636
      %v984 = vunpack.c.l.b16 %v637
      %v985 = vunpack.c.l.b16 %v638
      %v986 = vunpack.c.l.b16 %v639
      %v987 = vunpack.c.l.b16 %v640
      %v988 = vunpack.c.l.b16 %v641
      %v989 = vunpack.c.l.b16 %v642
      %v990 = vunpack.c.l.b16 %v643
      %v991 = vunpack.c.l.b16 %v644
      %v992 = vunpack.c.l.b16 %v645
      %v993 = vunpack.c.l.b16 %v646
      %v994 = vunpack.c.l.b16 %v647
      %v995 = vunpack.c.l.b16 %v648
      %v996 = vunpack.c.l.b16 %v649
      %v997 = vunpack.c.l.b16 %v650
      %v998 = vunpack.c.l.b16 %v651
      %v999 = vunpack.c.l.b16 %v652
      %v1000 = vunpack.c.l.b16 %v653
      %v1001 = vunpack.c.l.b16 %v654
      %v1002 = vunpack.c.l.b16 %v655
      %v1003 = vunpack.c.l.b16 %v656
      %v1004 = vunpack.c.l.b16 %v657
      %v1005 = vunpack.c.l.b16 %v658
      %v1006 = vunpack.c.l.b16 %v659
      %v1007 = vunpack.c.l.b16 %v660
      %v1008 = vunpack.c.l.b16 %v661
      %v1009 = vunpack.c.l.b16 %v662
      %v1010 = vunpack.c.l.b16 %v663
      %v1011 = vunpack.c.l.b16 %v664
      %v1012 = vunpack.c.l.b16 %v665
      %v1013 = vunpack.c.l.b16 %v666
      %v1014 = vunpack.c.l.b16 %v667
      %v1015 = vunpack.c.l.b16 %v668
      %v1016 = vunpack.c.l.b16 %v669
      %v1017 = vunpack.c.l.b16 %v670
      %v1018 = vunpack.c.l.b16 %v671
      %v1019 = vunpack.c.l.b16 %v672
      %v1020 = vunpack.c.l.b16 %v673
      %v1021 = vunpack.c.l.b16 %v674
      %v1022 = vunpack.c.l.b16 %v675
      %v1023 = vunpack.c.l.b16 %v676
      %v1024 = vunpack.c.l.b16 %v677
      %v1025 = vunpack.c.l.b16 %v678
      %v1026 = vunpack.c.l.b16 %v679
      %v1027 = vunpack.c.l.b16 %v680
      %v1028 = vunpack.c.l.b16 %v681
      %v1029 = vunpack.c.l.b16 %v682
      %v1030 = vunpack.c.l.b16 %v683
      %v1031 = vunpack.c.l.b16 %v684
      %v1032 = vunpack.c.l.b16 %v685
      %v1033 = vunpack.c.l.b16 %v686
      %v1034 = vunpack.c.l.b16 %v687
      %v1035 = vunpack.c.l.b16 %v688
      %v1036 = vunpack.c.l.b16 %v689
      %v1037 = vunpack.c.l.b16 %v690
      %v1038 = vunpack.c.l.b16 %v691
      %v1039 = vunpack.c.l.b16 %v692
      %v1040 = vunpack.c.l.b16 %v693
      %v1041 = vunpack.c.l.b16 %v694
      %v1042 = vunpack.c.l.b16 %v695
      %v1043 = vunpack.c.l.b16 %v696
      %v1044 = vunpack.c.l.b16 %v697
      %v1045 = vunpack.c.l.b16 %v698
      %v1046 = vunpack.c.l.b16 %v699
      %v1047 = vunpack.c.l.b16 %v700
      %v1048 = vunpack.c.l.b16 %v701
      %v1049 = vunpack.c.l.b16 %v702
      %v1050 = vunpack.c.l.b16 %v703
      %v1051 = vunpack.c.l.b16 %v704
      %v1052 = vunpack.c.l.b16 %v705
      %v1053 = vunpack.c.l.b16 %v706
      %v1054 = vunpack.c.l.b16 %v707
      %v1055 = vunpack.c.l.b16 %v708
      %v1056 = vunpack.c.l.b16 %v709
      %v1057 = vunpack.c.l.b16 %v710
      %v1058 = vunpack.c.l.b16 %v711
      %v1059 = vunpack.c.l.b16 %v712
      %v1060 = vunpack.c.l.b16 %v713
      %v1061 = vunpack.c.l.b16 %v714
      %v1062 = vunpack.c.l.b16 %v715
      %v1063 = vunpack.c.l.b16 %v716
      %v1064 = vunpack.c.l.b16 %v717
      %v1065 = vunpack.c.l.b16 %v718
      %v1066 = vunpack.c.l.b16 %v719
      %v1067 = vunpack.c.l.b16 %v720
      %v1068 = vunpack.c.l.b16 %v721
      %v1069 = vunpack.c.l.b16 %v722
      %v1070 = vunpack.c.l.b16 %v723
      %v1071 = vunpack.c.l.b16 %v724
      %v1072 = vunpack.c.l.b16 %v725
      %v1073 = vunpack.c.l.b16 %v726
      %v1074 = vunpack.c.l.b16 %v727
      %v1075 = vunpack.c.l.b16 %v728
      %v1076 = vunpack.c.l.b16 %v729
      %v1077 = vunpack.c.l.b16 %v730
      %v1078 = vunpack.c.l.b16 %v731
      %v1079 = vunpack.c.l.b16 %v732
      %v1080 = vunpack.c.l.b16 %v733
      %v1081 = vunpack.c.l.b16 %v734
      %v1082 = vunpack.c.l.b16 %v735
      %v1083 = vunpack.c.l.b16 %v736
      %v1084 = vunpack.c.l.b16 %v737
      %v1085 = vunpack.c.l.b16 %v738
      %v1086 = vunpack.c.l.b16 %v739
      %v1087 = vunpack.c.l.b16 %v740
      %v1088 = vunpack.c.l.b16 %v741
      %v1089 = vunpack.c.l.b16 %v742
      %v1090 = vunpack.c.l.b16 %v743
      %v1091 = vunpack.c.l.b16 %v744
      %v1092 = vunpack.c.l.b16 %v745
      %v1093 = vunpack.c.l.b16 %v746
      %v1094 = vunpack.c.l.b16 %v747
      %v1095 = vunpack.c.l.b16 %v748
      %v1096 = vunpack.c.l.b16 %v749
      %v1097 = vunpack.c.l.b16 %v750
      %v1098 = vunpack.c.l.b16 %v751
      %v1099 = vunpack.c.l.b16 %v752
      %v1100 = vunpack.c.l.b16 %v753
      %v1101 = vunpack.c.l.b16 %v754
      %v1102 = vunpack.c.l.b16 %v755
      %v1103 = vpack.c.b16 %v942, %v941
      %v1104 = vpack.c.b16 %v944, %v943
      %v1105 = vpack.c.b16 %v946, %v945
      %v1106 = vpack.c.b16 %v948, %v947
      %v1107 = vpack.c.b16 %v950, %v949
      %v1108 = vpack.c.b16 %v952, %v951
      %v1109 = vpack.c.b16 %v954, %v953
      %v1110 = vpack.c.b16 %v956, %v955
      %v1111 = vpack.c.b16 %v958, %v957
      %v1112 = vpack.c.b16 %v960, %v959
      %v1113 = vpack.c.b16 %v962, %v961
      %v1114 = vpack.c.b16 %v964, %v963
      %v1115 = vpack.c.b16 %v966, %v965
      %v1116 = vpack.c.b16 %v968, %v967
      %v1117 = vpack.c.b16 %v970, %v969
      %v1118 = vpack.c.b16 %v972, %v971
      %v1119 = vpack.c.b16 %v974, %v973
      %v1120 = vpack.c.b16 %v976, %v975
      %v1121 = vpack.c.b16 %v978, %v977
      %v1122 = vpack.c.b16 %v980, %v979
      %v1123 = vpack.c.b16 %v982, %v981
      %v1124 = vpack.c.b16 %v984, %v983
      %v1125 = vpack.c.b16 %v986, %v985
      %v1126 = vpack.c.b16 %v988, %v987
      %v1127 = vpack.c.b16 %v990, %v989
      %v1128 = vpack.c.b16 %v992, %v991
      %v1129 = vpack.c.b16 %v994, %v993
      %v1130 = vpack.c.b16 %v996, %v995
      %v1131 = vpack.c.b16 %v998, %v997
      %v1132 = vpack.c.b16 %v1000, %v999
      %v1133 = vpack.c.b16 %v1002, %v1001
      %v1134 = vpack.c.b16 %v1004, %v1003
      %v1135 = vpack.c.b16 %v1006, %v1005
      %v1136 = vpack.c.b16 %v1008, %v1007
      %v1137 = vpack.c.b16 %v1010, %v1009
      %v1138 = vpack.c.b16 %v1012, %v1011
      %v1139 = vpack.c.b16 %v1014, %v1013
      %v1140 = vpack.c.b16 %v1016, %v1015
      %v1141 = vpack.c.b16 %v1018, %v1017
      %v1142 = vpack.c.b16 %v1020, %v1019
      %v1143 = vpack.c.b16 %v1022, %v1021
      %v1144 = vpack.c.b16 %v1024, %v1023
      %v1145 = vpack.c.b16 %v1026, %v1025
      %v1146 = vpack.c.b16 %v1028, %v1027
      %v1147 = vpack.c.b16 %v1030, %v1029
      %v1148 = vpack.c.b16 %v1032, %v1031
      %v1149 = vpack.c.b16 %v1034, %v1033
      %v1150 = vpack.c.b16 %v1036, %v1035
      %v1151 = vpack.c.b16 %v1038, %v1037
      %v1152 = vpack.c.b16 %v1040, %v1039
      %v1153 = vpack.c.b16 %v1042, %v1041
      %v1154 = vpack.c.b16 %v1044, %v1043
      %v1155 = vpack.c.b16 %v1046, %v1045
      %v1156 = vpack.c.b16 %v1048, %v1047
      %v1157 = vpack.c.b16 %v1050, %v1049
      %v1158 = vpack.c.b16 %v1052, %v1051
      %v1159 = vpack.c.b16 %v1054, %v1053
      %v1160 = vpack.c.b16 %v1056, %v1055
      %v1161 = vpack.c.b16 %v1058, %v1057
      %v1162 = vpack.c.b16 %v1060, %v1059
      %v1163 = vpack.c.b16 %v1062, %v1061
      %v1164 = vpack.c.b16 %v1064, %v1063
      %v1165 = vpack.c.b16 %v1066, %v1065
      %v1166 = vpack.c.b16 %v1068, %v1067
      %v1167 = vpack.c.b16 %v1070, %v1069
      %v1168 = vpack.c.b16 %v1072, %v1071
      %v1169 = vpack.c.b16 %v1074, %v1073
      %v1170 = vpack.c.b16 %v1076, %v1075
      %v1171 = vpack.c.b16 %v1078, %v1077
      %v1172 = vpack.c.b16 %v1080, %v1079
      %v1173 = vpack.c.b16 %v1082, %v1081
      %v1174 = vpack.c.b16 %v1084, %v1083
      %v1175 = vpack.c.b16 %v1086, %v1085
      %v1176 = vpack.c.b16 %v1088, %v1087
      %v1177 = vpack.c.b16 %v1090, %v1089
      %v1178 = vpack.c.b16 %v1092, %v1091
      %v1179 = vpack.c.b16 %v1094, %v1093
      %v1180 = vpack.c.b16 %v1096, %v1095
      %v1181 = vpack.c.b16 %v1098, %v1097
      %v1182 = vpack.c.b16 %v1100, %v1099
      %v1183 = vpack.c.b16 %v1102, %v1101
      %v1281 = vunpack.c.l.b16 %v756
      %v1282 = vunpack.c.l.b16 %v757
      %v1283 = vunpack.c.l.b16 %v758
      %v1284 = vunpack.c.l.b16 %v759
      %v1285 = vunpack.c.l.b16 %v760
      %v1286 = vunpack.c.l.b16 %v761
      %v1287 = vunpack.c.l.b16 %v762
      %v1288 = vunpack.c.l.b16 %v763
      %v1289 = vunpack.c.l.b16 %v764
      %v1290 = vunpack.c.l.b16 %v765
      %v1291 = vunpack.c.l.b16 %v766
      %v1292 = vunpack.c.l.b16 %v767
      %v1293 = vunpack.c.l.b16 %v768
      %v1294 = vunpack.c.l.b16 %v769
      %v1295 = vunpack.c.l.b16 %v770
      %v1296 = vunpack.c.l.b16 %v771
      %v1297 = vpack.c.b16 %v1282, %v1281
      %v1298 = vpack.c.b16 %v1284, %v1283
      %v1299 = vpack.c.b16 %v1286, %v1285
      %v1300 = vpack.c.b16 %v1288, %v1287
      %v1301 = vpack.c.b16 %v1290, %v1289
      %v1302 = vpack.c.b16 %v1292, %v1291
      %v1303 = vpack.c.b16 %v1294, %v1293
      %v1304 = vpack.c.b16 %v1296, %v1295
      %1313 = vmatprep.subr.bf16.mxu0 0
      %1314 = vmatpush1.bf16.msra.mxu0 %v1297
      %1315 = vmatprep.subr.bf16.mxu0 0
      %1316 = vmatpush1.bf16.msra.mxu0 %v1298
      %1317 = vmatprep.subr.bf16.mxu0 0
      %1318 = vmatpush1.bf16.msra.mxu0 %v1299
      %1319 = vmatprep.subr.bf16.mxu0 0
      %1320 = vmatpush1.bf16.msra.mxu0 %v1300
      %1321 = vmatprep.subr.bf16.mxu0 0
      %1322 = vmatpush1.bf16.msra.mxu0 %v1301
      %1323 = vmatprep.subr.bf16.mxu0 0
      %1324 = vmatpush1.bf16.msra.mxu0 %v1302
      %1325 = vmatprep.subr.bf16.mxu0 0
      %1326 = vmatpush1.bf16.msra.mxu0 %v1303
      %1327 = vmatprep.subr.bf16.mxu0 0
      %1328 = vmatpush1.bf16.msra.mxu0 %v1304
      %1329 = vmatprep.subr.bf16.mxu0 0
      %1330 = vmatpush1.bf16.msra.mxu0 0
      %1331 = vmatprep.subr.bf16.mxu0 0
      %1332 = vmatpush1.bf16.msra.mxu0 0
      %1333 = vmatprep.subr.bf16.mxu0 0
      %1334 = vmatpush1.bf16.msra.mxu0 0
      %1335 = vmatprep.subr.bf16.mxu0 0
      %1336 = vmatpush1.bf16.msra.mxu0 0
      %1337 = vmatprep.subr.bf16.mxu0 0
      %1338 = vmatpush1.bf16.msra.mxu0 0
      %1339 = vmatprep.subr.bf16.mxu0 0
      %1340 = vmatpush1.bf16.msra.mxu0 0
      %1341 = vmatprep.subr.bf16.mxu0 0
      %1342 = vmatpush1.bf16.msra.mxu0 0
      %1343 = vmatprep.subr.bf16.mxu0 0
      %1344 = vmatpush1.bf16.msra.mxu0 0
      %1345 = vmatprep.mubr.bf16.mxu0 0
      %1346 = vmatmul.mubr.bf16.gmra.mrb[0].mxu0 %v1103
      %v1347 = vpop.f32.mrb[0].mxu0
      %v1348 = vadd.f32 %v777, %v1347
      %v1349 = vpop.f32.mrb[0].mxu0
      %v1350 = vpop.f32.mrb[0].mxu0
      %v1351 = vadd.f32 %v777, %v1350
      %v1352 = vpop.f32.mrb[0].mxu0
      %1353 = vmatprep.mubr.bf16.mxu0 0
      %1354 = vmatmul.mubr.bf16.gmra.mrb[0].mxu0 %v1104
      %v1355 = vpop.f32.mrb[0].mxu0
      %v1356 = vadd.f32 %v777, %v1355
      %v1357 = vpop.f32.mrb[0].mxu0
      %v1358 = vpop.f32.mrb[0].mxu0
      %v1359 = vadd.f32 %v777, %v1358
      %v1360 = vpop.f32.mrb[0].mxu0
      %1361 = vmatprep.mubr.bf16.mxu0 0
      %1362 = vmatmul.mubr.bf16.gmra.mrb[0].mxu0 %v1105
      %v1363 = vpop.f32.mrb[0].mxu0
      %v1364 = vadd.f32 %v777, %v1363
      %v1365 = vpop.f32.mrb[0].mxu0
      %v1366 = vpop.f32.mrb[0].mxu0
      %v1367 = vadd.f32 %v777, %v1366
      %v1368 = vpop.f32.mrb[0].mxu0
      %1369 = vmatprep.mubr.bf16.mxu0 0
      %1370 = vmatmul.mubr.bf16.gmra.mrb[0].mxu0 %v1106
      %v1371 = vpop.f32.mrb[0].mxu0
      %v1372 = vadd.f32 %v777, %v1371
      %v1373 = vpop.f32.mrb[0].mxu0
      %v1374 = vpop.f32.mrb[0].mxu0
      %v1375 = vadd.f32 %v777, %v1374
      %v1376 = vpop.f32.mrb[0].mxu0
      %1377 = vmatprep.mubr.bf16.mxu0 0
      %1378 = vmatmul.mubr.bf16.gmra.mrb[0].mxu0 %v1107
      %v1379 = vpop.f32.mrb[0].mxu0
      %v1380 = vadd.f32 %v777, %v1379
      %v1381 = vpop.f32.mrb[0].mxu0
      %v1382 = vpop.f32.mrb[0].mxu0
      %v1383 = vadd.f32 %v777, %v1382
      %v1384 = vpop.f32.mrb[0].mxu0
      %1385 = vmatprep.mubr.bf16.mxu0 0
      %1386 = vmatmul.mubr.bf16.gmra.mrb[0].mxu0 %v1108
      %v1387 = vpop.f32.mrb[0].mxu0
      %v1388 = vadd.f32 %v777, %v1387
      %v1389 = vpop.f32.mrb[0].mxu0
      %v1390 = vpop.f32.mrb[0].mxu0
      %v1391 = vadd.f32 %v777, %v1390
      %v1392 = vpop.f32.mrb[0].mxu0
      %1393 = vmatprep.mubr.bf16.mxu0 0
      %1394 = vmatmul.mubr.bf16.gmra.mrb[0].mxu0 %v1109
      %v1395 = vpop.f32.mrb[0].mxu0
      %v1396 = vadd.f32 %v777, %v1395
      %v1397 = vpop.f32.mrb[0].mxu0
      %v1398 = vpop.f32.mrb[0].mxu0
      %v1399 = vadd.f32 %v777, %v1398
      %v1400 = vpop.f32.mrb[0].mxu0
      %1401 = vmatprep.mubr.bf16.mxu0 0
      %1402 = vmatmul.mubr.bf16.gmra.mrb[0].mxu0 %v1110
      %v1403 = vpop.f32.mrb[0].mxu0
      %v1404 = vadd.f32 %v777, %v1403
      %v1405 = vpop.f32.mrb[0].mxu0
      %v1406 = vpop.f32.mrb[0].mxu0
      %v1407 = vadd.f32 %v777, %v1406
      %v1408 = vpop.f32.mrb[0].mxu0
      %1409 = vmatprep.mubr.bf16.mxu0 0
      %1410 = vmatmul.mubr.bf16.gmra.mrb[0].mxu0 %v1111
      %v1411 = vpop.f32.mrb[0].mxu0
      %v1412 = vadd.f32 %v777, %v1411
      %v1413 = vpop.f32.mrb[0].mxu0
      %v1414 = vpop.f32.mrb[0].mxu0
      %v1415 = vadd.f32 %v777, %v1414
      %v1416 = vpop.f32.mrb[0].mxu0
      %1417 = vmatprep.mubr.bf16.mxu0 0
      %1418 = vmatmul.mubr.bf16.gmra.mrb[0].mxu0 %v1112
      %v1419 = vpop.f32.mrb[0].mxu0
      %v1420 = vadd.f32 %v777, %v1419
      %v1421 = vpop.f32.mrb[0].mxu0
      %v1422 = vpop.f32.mrb[0].mxu0
      %v1423 = vadd.f32 %v777, %v1422
      %v1424 = vpop.f32.mrb[0].mxu0
      %1425 = vmatprep.mubr.bf16.mxu0 0
      %1426 = vmatmul.mubr.bf16.gmra.mrb[0].mxu0 %v1113
      %v1427 = vpop.f32.mrb[0].mxu0
      %v1428 = vadd.f32 %v777, %v1427
      %v1429 = vpop.f32.mrb[0].mxu0
      %v1430 = vpop.f32.mrb[0].mxu0
      %v1431 = vadd.f32 %v777, %v1430
      %v1432 = vpop.f32.mrb[0].mxu0
      %1433 = vmatprep.mubr.bf16.mxu0 0
      %1434 = vmatmul.mubr.bf16.gmra.mrb[0].mxu0 %v1114
      %v1435 = vpop.f32.mrb[0].mxu0
      %v1436 = vadd.f32 %v777, %v1435
      %v1437 = vpop.f32.mrb[0].mxu0
      %v1438 = vpop.f32.mrb[0].mxu0
      %v1439 = vadd.f32 %v777, %v1438
      %v1440 = vpop.f32.mrb[0].mxu0
      %1441 = vmatprep.mubr.bf16.mxu0 0
      %1442 = vmatmul.mubr.bf16.gmra.mrb[0].mxu0 %v1115
      %v1443 = vpop.f32.mrb[0].mxu0
      %v1444 = vadd.f32 %v777, %v1443
      %v1445 = vpop.f32.mrb[0].mxu0
      %v1446 = vpop.f32.mrb[0].mxu0
      %v1447 = vadd.f32 %v777, %v1446
      %v1448 = vpop.f32.mrb[0].mxu0
      %1449 = vmatprep.mubr.bf16.mxu0 0
      %1450 = vmatmul.mubr.bf16.gmra.mrb[0].mxu0 %v1116
      %v1451 = vpop.f32.mrb[0].mxu0
      %v1452 = vadd.f32 %v777, %v1451
      %v1453 = vpop.f32.mrb[0].mxu0
      %v1454 = vpop.f32.mrb[0].mxu0
      %v1455 = vadd.f32 %v777, %v1454
      %v1456 = vpop.f32.mrb[0].mxu0
      %1457 = vmatprep.mubr.bf16.mxu0 0
      %1458 = vmatmul.mubr.bf16.gmra.mrb[0].mxu0 %v1117
      %v1459 = vpop.f32.mrb[0].mxu0
      %v1460 = vadd.f32 %v777, %v1459
      %v1461 = vpop.f32.mrb[0].mxu0
      %v1462 = vpop.f32.mrb[0].mxu0
      %v1463 = vadd.f32 %v777, %v1462
      %v1464 = vpop.f32.mrb[0].mxu0
      %1465 = vmatprep.mubr.bf16.mxu0 0
      %1466 = vmatmul.mubr.bf16.gmra.mrb[0].mxu0 %v1118
      %v1467 = vpop.f32.mrb[0].mxu0
      %v1468 = vadd.f32 %v777, %v1467
      %v1469 = vpop.f32.mrb[0].mxu0
      %v1470 = vpop.f32.mrb[0].mxu0
      %v1471 = vadd.f32 %v777, %v1470
      %v1472 = vpop.f32.mrb[0].mxu0
      %1473 = vmatprep.mubr.bf16.mxu0 0
      %1474 = vmatmul.mubr.bf16.gmra.mrb[0].mxu0 %v1119
      %v1475 = vpop.f32.mrb[0].mxu0
      %v1476 = vadd.f32 %v777, %v1475
      %v1477 = vpop.f32.mrb[0].mxu0
      %v1478 = vpop.f32.mrb[0].mxu0
      %v1479 = vadd.f32 %v777, %v1478
      %v1480 = vpop.f32.mrb[0].mxu0
      %1481 = vmatprep.mubr.bf16.mxu0 0
      %1482 = vmatmul.mubr.bf16.gmra.mrb[0].mxu0 %v1120
      %v1483 = vpop.f32.mrb[0].mxu0
      %v1484 = vadd.f32 %v777, %v1483
      %v1485 = vpop.f32.mrb[0].mxu0
      %v1486 = vpop.f32.mrb[0].mxu0
      %v1487 = vadd.f32 %v777, %v1486
      %v1488 = vpop.f32.mrb[0].mxu0
      %1489 = vmatprep.mubr.bf16.mxu0 0
      %1490 = vmatmul.mubr.bf16.gmra.mrb[0].mxu0 %v1121
      %v1491 = vpop.f32.mrb[0].mxu0
      %v1492 = vadd.f32 %v777, %v1491
      %v1493 = vpop.f32.mrb[0].mxu0
      %v1494 = vpop.f32.mrb[0].mxu0
      %v1495 = vadd.f32 %v777, %v1494
      %v1496 = vpop.f32.mrb[0].mxu0
      %1497 = vmatprep.mubr.bf16.mxu0 0
      %1498 = vmatmul.mubr.bf16.gmra.mrb[0].mxu0 %v1122
      %v1499 = vpop.f32.mrb[0].mxu0
      %v1500 = vadd.f32 %v777, %v1499
      %v1501 = vpop.f32.mrb[0].mxu0
      %v1502 = vpop.f32.mrb[0].mxu0
      %v1503 = vadd.f32 %v777, %v1502
      %v1504 = vpop.f32.mrb[0].mxu0
      %1505 = vmatprep.mubr.bf16.mxu0 0
      %1506 = vmatmul.mubr.bf16.gmra.mrb[0].mxu0 %v1123
      %v1507 = vpop.f32.mrb[0].mxu0
      %v1508 = vadd.f32 %v777, %v1507
      %v1509 = vpop.f32.mrb[0].mxu0
      %v1510 = vpop.f32.mrb[0].mxu0
      %v1511 = vadd.f32 %v777, %v1510
      %v1512 = vpop.f32.mrb[0].mxu0
      %1513 = vmatprep.mubr.bf16.mxu0 0
      %1514 = vmatmul.mubr.bf16.gmra.mrb[0].mxu0 %v1124
      %v1515 = vpop.f32.mrb[0].mxu0
      %v1516 = vadd.f32 %v777, %v1515
      %v1517 = vpop.f32.mrb[0].mxu0
      %v1518 = vpop.f32.mrb[0].mxu0
      %v1519 = vadd.f32 %v777, %v1518
      %v1520 = vpop.f32.mrb[0].mxu0
      %1521 = vmatprep.mubr.bf16.mxu0 0
      %1522 = vmatmul.mubr.bf16.gmra.mrb[0].mxu0 %v1125
      %v1523 = vpop.f32.mrb[0].mxu0
      %v1524 = vadd.f32 %v777, %v1523
      %v1525 = vpop.f32.mrb[0].mxu0
      %v1526 = vpop.f32.mrb[0].mxu0
      %v1527 = vadd.f32 %v777, %v1526
      %v1528 = vpop.f32.mrb[0].mxu0
      %1529 = vmatprep.mubr.bf16.mxu0 0
      %1530 = vmatmul.mubr.bf16.gmra.mrb[0].mxu0 %v1126
      %v1531 = vpop.f32.mrb[0].mxu0
      %v1532 = vadd.f32 %v777, %v1531
      %v1533 = vpop.f32.mrb[0].mxu0
      %v1534 = vpop.f32.mrb[0].mxu0
      %v1535 = vadd.f32 %v777, %v1534
      %v1536 = vpop.f32.mrb[0].mxu0
      %1537 = vmatprep.mubr.bf16.mxu0 0
      %1538 = vmatmul.mubr.bf16.gmra.mrb[0].mxu0 %v1127
      %v1539 = vpop.f32.mrb[0].mxu0
      %v1540 = vadd.f32 %v777, %v1539
      %v1541 = vpop.f32.mrb[0].mxu0
      %v1542 = vpop.f32.mrb[0].mxu0
      %v1543 = vadd.f32 %v777, %v1542
      %v1544 = vpop.f32.mrb[0].mxu0
      %1545 = vmatprep.mubr.bf16.mxu0 0
      %1546 = vmatmul.mubr.bf16.gmra.mrb[0].mxu0 %v1128
      %v1547 = vpop.f32.mrb[0].mxu0
      %v1548 = vadd.f32 %v777, %v1547
      %v1549 = vpop.f32.mrb[0].mxu0
      %v1550 = vpop.f32.mrb[0].mxu0
      %v1551 = vadd.f32 %v777, %v1550
      %v1552 = vpop.f32.mrb[0].mxu0
      %1553 = vmatprep.mubr.bf16.mxu0 0
      %1554 = vmatmul.mubr.bf16.gmra.mrb[0].mxu0 %v1129
      %v1555 = vpop.f32.mrb[0].mxu0
      %v1556 = vadd.f32 %v777, %v1555
      %v1557 = vpop.f32.mrb[0].mxu0
      %v1558 = vpop.f32.mrb[0].mxu0
      %v1559 = vadd.f32 %v777, %v1558
      %v1560 = vpop.f32.mrb[0].mxu0
      %1561 = vmatprep.mubr.bf16.mxu0 0
      %1562 = vmatmul.mubr.bf16.gmra.mrb[0].mxu0 %v1130
      %v1563 = vpop.f32.mrb[0].mxu0
      %v1564 = vadd.f32 %v777, %v1563
      %v1565 = vpop.f32.mrb[0].mxu0
      %v1566 = vpop.f32.mrb[0].mxu0
      %v1567 = vadd.f32 %v777, %v1566
      %v1568 = vpop.f32.mrb[0].mxu0
      %1569 = vmatprep.mubr.bf16.mxu0 0
      %1570 = vmatmul.mubr.bf16.gmra.mrb[0].mxu0 %v1131
      %v1571 = vpop.f32.mrb[0].mxu0
      %v1572 = vadd.f32 %v777, %v1571
      %v1573 = vpop.f32.mrb[0].mxu0
      %v1574 = vpop.f32.mrb[0].mxu0
      %v1575 = vadd.f32 %v777, %v1574
      %v1576 = vpop.f32.mrb[0].mxu0
      %1577 = vmatprep.mubr.bf16.mxu0 0
      %1578 = vmatmul.mubr.bf16.gmra.mrb[0].mxu0 %v1132
      %v1579 = vpop.f32.mrb[0].mxu0
      %v1580 = vadd.f32 %v777, %v1579
      %v1581 = vpop.f32.mrb[0].mxu0
      %v1582 = vpop.f32.mrb[0].mxu0
      %v1583 = vadd.f32 %v777, %v1582
      %v1584 = vpop.f32.mrb[0].mxu0
      %1585 = vmatprep.mubr.bf16.mxu0 0
      %1586 = vmatmul.mubr.bf16.gmra.mrb[0].mxu0 %v1133
      %v1587 = vpop.f32.mrb[0].mxu0
      %v1588 = vadd.f32 %v777, %v1587
      %v1589 = vpop.f32.mrb[0].mxu0
      %v1590 = vpop.f32.mrb[0].mxu0
      %v1591 = vadd.f32 %v777, %v1590
      %v1592 = vpop.f32.mrb[0].mxu0
      %1593 = vmatprep.mubr.bf16.mxu0 0
      %1594 = vmatmul.mubr.bf16.gmra.mrb[0].mxu0 %v1134
      %v1595 = vpop.f32.mrb[0].mxu0
      %v1596 = vadd.f32 %v777, %v1595
      %v1597 = vpop.f32.mrb[0].mxu0
      %v1598 = vpop.f32.mrb[0].mxu0
      %v1599 = vadd.f32 %v777, %v1598
      %v1600 = vpop.f32.mrb[0].mxu0
      %1601 = vmatprep.mubr.bf16.mxu0 0
      %1602 = vmatmul.mubr.bf16.gmra.mrb[0].mxu0 %v1135
      %v1603 = vpop.f32.mrb[0].mxu0
      %v1604 = vadd.f32 %v777, %v1603
      %v1605 = vpop.f32.mrb[0].mxu0
      %v1606 = vpop.f32.mrb[0].mxu0
      %v1607 = vadd.f32 %v777, %v1606
      %v1608 = vpop.f32.mrb[0].mxu0
      %1609 = vmatprep.mubr.bf16.mxu0 0
      %1610 = vmatmul.mubr.bf16.gmra.mrb[0].mxu0 %v1136
      %v1611 = vpop.f32.mrb[0].mxu0
      %v1612 = vadd.f32 %v777, %v1611
      %v1613 = vpop.f32.mrb[0].mxu0
      %v1614 = vpop.f32.mrb[0].mxu0
      %v1615 = vadd.f32 %v777, %v1614
      %v1616 = vpop.f32.mrb[0].mxu0
      %1617 = vmatprep.mubr.bf16.mxu0 0
      %1618 = vmatmul.mubr.bf16.gmra.mrb[0].mxu0 %v1137
      %v1619 = vpop.f32.mrb[0].mxu0
      %v1620 = vadd.f32 %v777, %v1619
      %v1621 = vpop.f32.mrb[0].mxu0
      %v1622 = vpop.f32.mrb[0].mxu0
      %v1623 = vadd.f32 %v777, %v1622
      %v1624 = vpop.f32.mrb[0].mxu0
      %1625 = vmatprep.mubr.bf16.mxu0 0
      %1626 = vmatmul.mubr.bf16.gmra.mrb[0].mxu0 %v1138
      %v1627 = vpop.f32.mrb[0].mxu0
      %v1628 = vadd.f32 %v777, %v1627
      %v1629 = vpop.f32.mrb[0].mxu0
      %v1630 = vpop.f32.mrb[0].mxu0
      %v1631 = vadd.f32 %v777, %v1630
      %v1632 = vpop.f32.mrb[0].mxu0
      %1633 = vmatprep.mubr.bf16.mxu0 0
      %1634 = vmatmul.mubr.bf16.gmra.mrb[0].mxu0 %v1139
      %v1635 = vpop.f32.mrb[0].mxu0
      %v1636 = vadd.f32 %v777, %v1635
      %v1637 = vpop.f32.mrb[0].mxu0
      %v1638 = vpop.f32.mrb[0].mxu0
      %v1639 = vadd.f32 %v777, %v1638
      %v1640 = vpop.f32.mrb[0].mxu0
      %1641 = vmatprep.mubr.bf16.mxu0 0
      %1642 = vmatmul.mubr.bf16.gmra.mrb[0].mxu0 %v1140
      %v1643 = vpop.f32.mrb[0].mxu0
      %v1644 = vadd.f32 %v777, %v1643
      %v1645 = vpop.f32.mrb[0].mxu0
      %v1646 = vpop.f32.mrb[0].mxu0
      %v1647 = vadd.f32 %v777, %v1646
      %v1648 = vpop.f32.mrb[0].mxu0
      %1649 = vmatprep.mubr.bf16.mxu0 0
      %1650 = vmatmul.mubr.bf16.gmra.mrb[0].mxu0 %v1141
      %v1651 = vpop.f32.mrb[0].mxu0
      %v1652 = vadd.f32 %v777, %v1651
      %v1653 = vpop.f32.mrb[0].mxu0
      %v1654 = vpop.f32.mrb[0].mxu0
      %v1655 = vadd.f32 %v777, %v1654
      %v1656 = vpop.f32.mrb[0].mxu0
      %1657 = vmatprep.mubr.bf16.mxu0 0
      %1658 = vmatmul.mubr.bf16.gmra.mrb[0].mxu0 %v1142
      %v1659 = vpop.f32.mrb[0].mxu0
      %v1660 = vadd.f32 %v777, %v1659
      %v1661 = vpop.f32.mrb[0].mxu0
      %v1662 = vpop.f32.mrb[0].mxu0
      %v1663 = vadd.f32 %v777, %v1662
      %v1664 = vpop.f32.mrb[0].mxu0
      %1665 = vmatprep.mubr.bf16.mxu0 0
      %1666 = vmatmul.mubr.bf16.gmra.mrb[0].mxu0 %v1143
      %v1667 = vpop.f32.mrb[0].mxu0
      %v1668 = vadd.f32 %v777, %v1667
      %v1669 = vpop.f32.mrb[0].mxu0
      %v1670 = vpop.f32.mrb[0].mxu0
      %v1671 = vadd.f32 %v777, %v1670
      %v1672 = vpop.f32.mrb[0].mxu0
      %1673 = vmatprep.mubr.bf16.mxu0 0
      %1674 = vmatmul.mubr.bf16.gmra.mrb[0].mxu0 %v1144
      %v1675 = vpop.f32.mrb[0].mxu0
      %v1676 = vadd.f32 %v777, %v1675
      %v1677 = vpop.f32.mrb[0].mxu0
      %v1678 = vpop.f32.mrb[0].mxu0
      %v1679 = vadd.f32 %v777, %v1678
      %v1680 = vpop.f32.mrb[0].mxu0
      %1681 = vmatprep.mubr.bf16.mxu0 0
      %1682 = vmatmul.mubr.bf16.gmra.mrb[0].mxu0 %v1145
      %v1683 = vpop.f32.mrb[0].mxu0
      %v1684 = vadd.f32 %v777, %v1683
      %v1685 = vpop.f32.mrb[0].mxu0
      %v1686 = vpop.f32.mrb[0].mxu0
      %v1687 = vadd.f32 %v777, %v1686
      %v1688 = vpop.f32.mrb[0].mxu0
      %1689 = vmatprep.mubr.bf16.mxu0 0
      %1690 = vmatmul.mubr.bf16.gmra.mrb[0].mxu0 %v1146
      %v1691 = vpop.f32.mrb[0].mxu0
      %v1692 = vadd.f32 %v777, %v1691
      %v1693 = vpop.f32.mrb[0].mxu0
      %v1694 = vpop.f32.mrb[0].mxu0
      %v1695 = vadd.f32 %v777, %v1694
      %v1696 = vpop.f32.mrb[0].mxu0
      %1697 = vmatprep.mubr.bf16.mxu0 0
      %1698 = vmatmul.mubr.bf16.gmra.mrb[0].mxu0 %v1147
      %v1699 = vpop.f32.mrb[0].mxu0
      %v1700 = vadd.f32 %v777, %v1699
      %v1701 = vpop.f32.mrb[0].mxu0
      %v1702 = vpop.f32.mrb[0].mxu0
      %v1703 = vadd.f32 %v777, %v1702
      %v1704 = vpop.f32.mrb[0].mxu0
      %1705 = vmatprep.mubr.bf16.mxu0 0
      %1706 = vmatmul.mubr.bf16.gmra.mrb[0].mxu0 %v1148
      %v1707 = vpop.f32.mrb[0].mxu0
      %v1708 = vadd.f32 %v777, %v1707
      %v1709 = vpop.f32.mrb[0].mxu0
      %v1710 = vpop.f32.mrb[0].mxu0
      %v1711 = vadd.f32 %v777, %v1710
      %v1712 = vpop.f32.mrb[0].mxu0
      %1713 = vmatprep.mubr.bf16.mxu0 0
      %1714 = vmatmul.mubr.bf16.gmra.mrb[0].mxu0 %v1149
      %v1715 = vpop.f32.mrb[0].mxu0
      %v1716 = vadd.f32 %v777, %v1715
      %v1717 = vpop.f32.mrb[0].mxu0
      %v1718 = vpop.f32.mrb[0].mxu0
      %v1719 = vadd.f32 %v777, %v1718
      %v1720 = vpop.f32.mrb[0].mxu0
      %1721 = vmatprep.mubr.bf16.mxu0 0
      %1722 = vmatmul.mubr.bf16.gmra.mrb[0].mxu0 %v1150
      %v1723 = vpop.f32.mrb[0].mxu0
      %v1724 = vadd.f32 %v777, %v1723
      %v1725 = vpop.f32.mrb[0].mxu0
      %v1726 = vpop.f32.mrb[0].mxu0
      %v1727 = vadd.f32 %v777, %v1726
      %v1728 = vpop.f32.mrb[0].mxu0
      %1729 = vmatprep.mubr.bf16.mxu0 0
      %1730 = vmatmul.mubr.bf16.gmra.mrb[0].mxu0 %v1151
      %v1731 = vpop.f32.mrb[0].mxu0
      %v1732 = vadd.f32 %v777, %v1731
      %v1733 = vpop.f32.mrb[0].mxu0
      %v1734 = vpop.f32.mrb[0].mxu0
      %v1735 = vadd.f32 %v777, %v1734
      %v1736 = vpop.f32.mrb[0].mxu0
      %1737 = vmatprep.mubr.bf16.mxu0 0
      %1738 = vmatmul.mubr.bf16.gmra.mrb[0].mxu0 %v1152
      %v1739 = vpop.f32.mrb[0].mxu0
      %v1740 = vadd.f32 %v777, %v1739
      %v1741 = vpop.f32.mrb[0].mxu0
      %v1742 = vpop.f32.mrb[0].mxu0
      %v1743 = vadd.f32 %v777, %v1742
      %v1744 = vpop.f32.mrb[0].mxu0
      %1745 = vmatprep.mubr.bf16.mxu0 0
      %1746 = vmatmul.mubr.bf16.gmra.mrb[0].mxu0 %v1153
      %v1747 = vpop.f32.mrb[0].mxu0
      %v1748 = vadd.f32 %v777, %v1747
      %v1749 = vpop.f32.mrb[0].mxu0
      %v1750 = vpop.f32.mrb[0].mxu0
      %v1751 = vadd.f32 %v777, %v1750
      %v1752 = vpop.f32.mrb[0].mxu0
      %1753 = vmatprep.mubr.bf16.mxu0 0
      %1754 = vmatmul.mubr.bf16.gmra.mrb[0].mxu0 %v1154
      %v1755 = vpop.f32.mrb[0].mxu0
      %v1756 = vadd.f32 %v777, %v1755
      %v1757 = vpop.f32.mrb[0].mxu0
      %v1758 = vpop.f32.mrb[0].mxu0
      %v1759 = vadd.f32 %v777, %v1758
      %v1760 = vpop.f32.mrb[0].mxu0
      %1761 = vmatprep.mubr.bf16.mxu0 0
      %1762 = vmatmul.mubr.bf16.gmra.mrb[0].mxu0 %v1155
      %v1763 = vpop.f32.mrb[0].mxu0
      %v1764 = vadd.f32 %v777, %v1763
      %v1765 = vpop.f32.mrb[0].mxu0
      %v1766 = vpop.f32.mrb[0].mxu0
      %v1767 = vadd.f32 %v777, %v1766
      %v1768 = vpop.f32.mrb[0].mxu0
      %1769 = vmatprep.mubr.bf16.mxu0 0
      %1770 = vmatmul.mubr.bf16.gmra.mrb[0].mxu0 %v1156
      %v1771 = vpop.f32.mrb[0].mxu0
      %v1772 = vadd.f32 %v777, %v1771
      %v1773 = vpop.f32.mrb[0].mxu0
      %v1774 = vpop.f32.mrb[0].mxu0
      %v1775 = vadd.f32 %v777, %v1774
      %v1776 = vpop.f32.mrb[0].mxu0
      %1777 = vmatprep.mubr.bf16.mxu0 0
      %1778 = vmatmul.mubr.bf16.gmra.mrb[0].mxu0 %v1157
      %v1779 = vpop.f32.mrb[0].mxu0
      %v1780 = vadd.f32 %v777, %v1779
      %v1781 = vpop.f32.mrb[0].mxu0
      %v1782 = vpop.f32.mrb[0].mxu0
      %v1783 = vadd.f32 %v777, %v1782
      %v1784 = vpop.f32.mrb[0].mxu0
      %1785 = vmatprep.mubr.bf16.mxu0 0
      %1786 = vmatmul.mubr.bf16.gmra.mrb[0].mxu0 %v1158
      %v1787 = vpop.f32.mrb[0].mxu0
      %v1788 = vadd.f32 %v777, %v1787
      %v1789 = vpop.f32.mrb[0].mxu0
      %v1790 = vpop.f32.mrb[0].mxu0
      %v1791 = vadd.f32 %v777, %v1790
      %v1792 = vpop.f32.mrb[0].mxu0
      %1793 = vmatprep.mubr.bf16.mxu0 0
      %1794 = vmatmul.mubr.bf16.gmra.mrb[0].mxu0 %v1159
      %v1795 = vpop.f32.mrb[0].mxu0
      %v1796 = vadd.f32 %v777, %v1795
      %v1797 = vpop.f32.mrb[0].mxu0
      %v1798 = vpop.f32.mrb[0].mxu0
      %v1799 = vadd.f32 %v777, %v1798
      %v1800 = vpop.f32.mrb[0].mxu0
      %1801 = vmatprep.mubr.bf16.mxu0 0
      %1802 = vmatmul.mubr.bf16.gmra.mrb[0].mxu0 %v1160
      %v1803 = vpop.f32.mrb[0].mxu0
      %v1804 = vadd.f32 %v777, %v1803
      %v1805 = vpop.f32.mrb[0].mxu0
      %v1806 = vpop.f32.mrb[0].mxu0
      %v1807 = vadd.f32 %v777, %v1806
      %v1808 = vpop.f32.mrb[0].mxu0
      %1809 = vmatprep.mubr.bf16.mxu0 0
      %1810 = vmatmul.mubr.bf16.gmra.mrb[0].mxu0 %v1161
      %v1811 = vpop.f32.mrb[0].mxu0
      %v1812 = vadd.f32 %v777, %v1811
      %v1813 = vpop.f32.mrb[0].mxu0
      %v1814 = vpop.f32.mrb[0].mxu0
      %v1815 = vadd.f32 %v777, %v1814
      %v1816 = vpop.f32.mrb[0].mxu0
      %1817 = vmatprep.mubr.bf16.mxu0 0
      %1818 = vmatmul.mubr.bf16.gmra.mrb[0].mxu0 %v1162
      %v1819 = vpop.f32.mrb[0].mxu0
      %v1820 = vadd.f32 %v777, %v1819
      %v1821 = vpop.f32.mrb[0].mxu0
      %v1822 = vpop.f32.mrb[0].mxu0
      %v1823 = vadd.f32 %v777, %v1822
      %v1824 = vpop.f32.mrb[0].mxu0
      %1825 = vmatprep.mubr.bf16.mxu0 0
      %1826 = vmatmul.mubr.bf16.gmra.mrb[0].mxu0 %v1163
      %v1827 = vpop.f32.mrb[0].mxu0
      %v1828 = vadd.f32 %v777, %v1827
      %v1829 = vpop.f32.mrb[0].mxu0
      %v1830 = vpop.f32.mrb[0].mxu0
      %v1831 = vadd.f32 %v777, %v1830
      %v1832 = vpop.f32.mrb[0].mxu0
      %1833 = vmatprep.mubr.bf16.mxu0 0
      %1834 = vmatmul.mubr.bf16.gmra.mrb[0].mxu0 %v1164
      %v1835 = vpop.f32.mrb[0].mxu0
      %v1836 = vadd.f32 %v777, %v1835
      %v1837 = vpop.f32.mrb[0].mxu0
      %v1838 = vpop.f32.mrb[0].mxu0
      %v1839 = vadd.f32 %v777, %v1838
      %v1840 = vpop.f32.mrb[0].mxu0
      %1841 = vmatprep.mubr.bf16.mxu0 0
      %1842 = vmatmul.mubr.bf16.gmra.mrb[0].mxu0 %v1165
      %v1843 = vpop.f32.mrb[0].mxu0
      %v1844 = vadd.f32 %v777, %v1843
      %v1845 = vpop.f32.mrb[0].mxu0
      %v1846 = vpop.f32.mrb[0].mxu0
      %v1847 = vadd.f32 %v777, %v1846
      %v1848 = vpop.f32.mrb[0].mxu0
      %1849 = vmatprep.mubr.bf16.mxu0 0
      %1850 = vmatmul.mubr.bf16.gmra.mrb[0].mxu0 %v1166
      %v1851 = vpop.f32.mrb[0].mxu0
      %v1852 = vadd.f32 %v777, %v1851
      %v1853 = vpop.f32.mrb[0].mxu0
      %v1854 = vpop.f32.mrb[0].mxu0
      %v1855 = vadd.f32 %v777, %v1854
      %v1856 = vpop.f32.mrb[0].mxu0
      %1857 = vmatprep.mubr.bf16.mxu0 0
      %1858 = vmatmul.mubr.bf16.gmra.mrb[0].mxu0 %v1167
      %v1859 = vpop.f32.mrb[0].mxu0
      %v1860 = vadd.f32 %v777, %v1859
      %v1861 = vpop.f32.mrb[0].mxu0
      %v1862 = vpop.f32.mrb[0].mxu0
      %v1863 = vadd.f32 %v777, %v1862
      %v1864 = vpop.f32.mrb[0].mxu0
      %1865 = vmatprep.mubr.bf16.mxu0 0
      %1866 = vmatmul.mubr.bf16.gmra.mrb[0].mxu0 %v1168
      %v1867 = vpop.f32.mrb[0].mxu0
      %v1868 = vadd.f32 %v777, %v1867
      %v1869 = vpop.f32.mrb[0].mxu0
      %v1870 = vpop.f32.mrb[0].mxu0
      %v1871 = vadd.f32 %v777, %v1870
      %v1872 = vpop.f32.mrb[0].mxu0
      %1873 = vmatprep.mubr.bf16.mxu0 0
      %1874 = vmatmul.mubr.bf16.gmra.mrb[0].mxu0 %v1169
      %v1875 = vpop.f32.mrb[0].mxu0
      %v1876 = vadd.f32 %v777, %v1875
      %v1877 = vpop.f32.mrb[0].mxu0
      %v1878 = vpop.f32.mrb[0].mxu0
      %v1879 = vadd.f32 %v777, %v1878
      %v1880 = vpop.f32.mrb[0].mxu0
      %1881 = vmatprep.mubr.bf16.mxu0 0
      %1882 = vmatmul.mubr.bf16.gmra.mrb[0].mxu0 %v1170
      %v1883 = vpop.f32.mrb[0].mxu0
      %v1884 = vadd.f32 %v777, %v1883
      %v1885 = vpop.f32.mrb[0].mxu0
      %v1886 = vpop.f32.mrb[0].mxu0
      %v1887 = vadd.f32 %v777, %v1886
      %v1888 = vpop.f32.mrb[0].mxu0
      %1889 = vmatprep.mubr.bf16.mxu0 0
      %1890 = vmatmul.mubr.bf16.gmra.mrb[0].mxu0 %v1171
      %v1891 = vpop.f32.mrb[0].mxu0
      %v1892 = vadd.f32 %v777, %v1891
      %v1893 = vpop.f32.mrb[0].mxu0
      %v1894 = vpop.f32.mrb[0].mxu0
      %v1895 = vadd.f32 %v777, %v1894
      %v1896 = vpop.f32.mrb[0].mxu0
      %1897 = vmatprep.mubr.bf16.mxu0 0
      %1898 = vmatmul.mubr.bf16.gmra.mrb[0].mxu0 %v1172
      %v1899 = vpop.f32.mrb[0].mxu0
      %v1900 = vadd.f32 %v777, %v1899
      %v1901 = vpop.f32.mrb[0].mxu0
      %v1902 = vpop.f32.mrb[0].mxu0
      %v1903 = vadd.f32 %v777, %v1902
      %v1904 = vpop.f32.mrb[0].mxu0
      %1905 = vmatprep.mubr.bf16.mxu0 0
      %1906 = vmatmul.mubr.bf16.gmra.mrb[0].mxu0 %v1173
      %v1907 = vpop.f32.mrb[0].mxu0
      %v1908 = vadd.f32 %v777, %v1907
      %v1909 = vpop.f32.mrb[0].mxu0
      %v1910 = vpop.f32.mrb[0].mxu0
      %v1911 = vadd.f32 %v777, %v1910
      %v1912 = vpop.f32.mrb[0].mxu0
      %1913 = vmatprep.mubr.bf16.mxu0 0
      %1914 = vmatmul.mubr.bf16.gmra.mrb[0].mxu0 %v1174
      %v1915 = vpop.f32.mrb[0].mxu0
      %v1916 = vadd.f32 %v777, %v1915
      %v1917 = vpop.f32.mrb[0].mxu0
      %v1918 = vpop.f32.mrb[0].mxu0
      %v1919 = vadd.f32 %v777, %v1918
      %v1920 = vpop.f32.mrb[0].mxu0
      %1921 = vmatprep.mubr.bf16.mxu0 0
      %1922 = vmatmul.mubr.bf16.gmra.mrb[0].mxu0 %v1175
      %v1923 = vpop.f32.mrb[0].mxu0
      %v1924 = vadd.f32 %v777, %v1923
      %v1925 = vpop.f32.mrb[0].mxu0
      %v1926 = vpop.f32.mrb[0].mxu0
      %v1927 = vadd.f32 %v777, %v1926
      %v1928 = vpop.f32.mrb[0].mxu0
      %1929 = vmatprep.mubr.bf16.mxu0 0
      %1930 = vmatmul.mubr.bf16.gmra.mrb[0].mxu0 %v1176
      %v1931 = vpop.f32.mrb[0].mxu0
      %v1932 = vadd.f32 %v777, %v1931
      %v1933 = vpop.f32.mrb[0].mxu0
      %v1934 = vpop.f32.mrb[0].mxu0
      %v1935 = vadd.f32 %v777, %v1934
      %v1936 = vpop.f32.mrb[0].mxu0
      %1937 = vmatprep.mubr.bf16.mxu0 0
      %1938 = vmatmul.mubr.bf16.gmra.mrb[0].mxu0 %v1177
      %v1939 = vpop.f32.mrb[0].mxu0
      %v1940 = vadd.f32 %v777, %v1939
      %v1941 = vpop.f32.mrb[0].mxu0
      %v1942 = vpop.f32.mrb[0].mxu0
      %v1943 = vadd.f32 %v777, %v1942
      %v1944 = vpop.f32.mrb[0].mxu0
      %1945 = vmatprep.mubr.bf16.mxu0 0
      %1946 = vmatmul.mubr.bf16.gmra.mrb[0].mxu0 %v1178
      %v1947 = vpop.f32.mrb[0].mxu0
      %v1948 = vadd.f32 %v777, %v1947
      %v1949 = vpop.f32.mrb[0].mxu0
      %v1950 = vpop.f32.mrb[0].mxu0
      %v1951 = vadd.f32 %v777, %v1950
      %v1952 = vpop.f32.mrb[0].mxu0
      %1953 = vmatprep.mubr.bf16.mxu0 0
      %1954 = vmatmul.mubr.bf16.gmra.mrb[0].mxu0 %v1179
      %v1955 = vpop.f32.mrb[0].mxu0
      %v1956 = vadd.f32 %v777, %v1955
      %v1957 = vpop.f32.mrb[0].mxu0
      %v1958 = vpop.f32.mrb[0].mxu0
      %v1959 = vadd.f32 %v777, %v1958
      %v1960 = vpop.f32.mrb[0].mxu0
      %1961 = vmatprep.mubr.bf16.mxu0 0
      %1962 = vmatmul.mubr.bf16.gmra.mrb[0].mxu0 %v1180
      %v1963 = vpop.f32.mrb[0].mxu0
      %v1964 = vadd.f32 %v777, %v1963
      %v1965 = vpop.f32.mrb[0].mxu0
      %v1966 = vpop.f32.mrb[0].mxu0
      %v1967 = vadd.f32 %v777, %v1966
      %v1968 = vpop.f32.mrb[0].mxu0
      %1969 = vmatprep.mubr.bf16.mxu0 0
      %1970 = vmatmul.mubr.bf16.gmra.mrb[0].mxu0 %v1181
      %v1971 = vpop.f32.mrb[0].mxu0
      %v1972 = vadd.f32 %v777, %v1971
      %v1973 = vpop.f32.mrb[0].mxu0
      %v1974 = vpop.f32.mrb[0].mxu0
      %v1975 = vadd.f32 %v777, %v1974
      %v1976 = vpop.f32.mrb[0].mxu0
      %1977 = vmatprep.mubr.bf16.mxu0 0
      %1978 = vmatmul.mubr.bf16.gmra.mrb[0].mxu0 %v1182
      %v1979 = vpop.f32.mrb[0].mxu0
      %v1980 = vadd.f32 %v777, %v1979
      %v1981 = vpop.f32.mrb[0].mxu0
      %v1982 = vpop.f32.mrb[0].mxu0
      %v1983 = vadd.f32 %v777, %v1982
      %v1984 = vpop.f32.mrb[0].mxu0
      %1985 = vmatprep.mubr.bf16.mxu0 0
      %1986 = vmatmul.mubr.bf16.gmra.mrb[0].mxu0 %v1183
      %v1987 = vpop.f32.mrb[0].mxu0
      %v1988 = vadd.f32 %v777, %v1987
      %v1989 = vpop.f32.mrb[0].mxu0
      %v1990 = vpop.f32.mrb[0].mxu0
      %v1991 = vadd.f32 %v777, %v1990
      %v1992 = vpop.f32.mrb[0].mxu0
      %1993 = vdwg.mxu0
      %v1994 = vmax.f32 %v1348, 0.0
      %v1995 = vmax.f32 %v1351, 0.0
      %v1996 = vmax.f32 %v1356, 0.0
      %v1997 = vmax.f32 %v1359, 0.0
      %v1998 = vmax.f32 %v1364, 0.0
      %v1999 = vmax.f32 %v1367, 0.0
      %v2000 = vmax.f32 %v1372, 0.0
      %v2001 = vmax.f32 %v1375, 0.0
      %v2002 = vmax.f32 %v1380, 0.0
      %v2003 = vmax.f32 %v1383, 0.0
      %v2004 = vmax.f32 %v1388, 0.0
      %v2005 = vmax.f32 %v1391, 0.0
      %v2006 = vmax.f32 %v1396, 0.0
      %v2007 = vmax.f32 %v1399, 0.0
      %v2008 = vmax.f32 %v1404, 0.0
      %v2009 = vmax.f32 %v1407, 0.0
      %v2010 = vmax.f32 %v1412, 0.0
      %v2011 = vmax.f32 %v1415, 0.0
      %v2012 = vmax.f32 %v1420, 0.0
      %v2013 = vmax.f32 %v1423, 0.0
      %v2014 = vmax.f32 %v1428, 0.0
      %v2015 = vmax.f32 %v1431, 0.0
      %v2016 = vmax.f32 %v1436, 0.0
      %v2017 = vmax.f32 %v1439, 0.0
      %v2018 = vmax.f32 %v1444, 0.0
      %v2019 = vmax.f32 %v1447, 0.0
      %v2020 = vmax.f32 %v1452, 0.0
      %v2021 = vmax.f32 %v1455, 0.0
      %v2022 = vmax.f32 %v1460, 0.0
      %v2023 = vmax.f32 %v1463, 0.0
      %v2024 = vmax.f32 %v1468, 0.0
      %v2025 = vmax.f32 %v1471, 0.0
      %v2026 = vmax.f32 %v1476, 0.0
      %v2027 = vmax.f32 %v1479, 0.0
      %v2028 = vmax.f32 %v1484, 0.0
      %v2029 = vmax.f32 %v1487, 0.0
      %v2030 = vmax.f32 %v1492, 0.0
      %v2031 = vmax.f32 %v1495, 0.0
      %v2032 = vmax.f32 %v1500, 0.0
      %v2033 = vmax.f32 %v1503, 0.0
      %v2034 = vmax.f32 %v1508, 0.0
      %v2035 = vmax.f32 %v1511, 0.0
      %v2036 = vmax.f32 %v1516, 0.0
      %v2037 = vmax.f32 %v1519, 0.0
      %v2038 = vmax.f32 %v1524, 0.0
      %v2039 = vmax.f32 %v1527, 0.0
      %v2040 = vmax.f32 %v1532, 0.0
      %v2041 = vmax.f32 %v1535, 0.0
      %v2042 = vmax.f32 %v1540, 0.0
      %v2043 = vmax.f32 %v1543, 0.0
      %v2044 = vmax.f32 %v1548, 0.0
      %v2045 = vmax.f32 %v1551, 0.0
      %v2046 = vmax.f32 %v1556, 0.0
      %v2047 = vmax.f32 %v1559, 0.0
      %v2048 = vmax.f32 %v1564, 0.0
      %v2049 = vmax.f32 %v1567, 0.0
      %v2050 = vmax.f32 %v1572, 0.0
      %v2051 = vmax.f32 %v1575, 0.0
      %v2052 = vmax.f32 %v1580, 0.0
      %v2053 = vmax.f32 %v1583, 0.0
      %v2054 = vmax.f32 %v1588, 0.0
      %v2055 = vmax.f32 %v1591, 0.0
      %v2056 = vmax.f32 %v1596, 0.0
      %v2057 = vmax.f32 %v1599, 0.0
      %v2058 = vmax.f32 %v1604, 0.0
      %v2059 = vmax.f32 %v1607, 0.0
      %v2060 = vmax.f32 %v1612, 0.0
      %v2061 = vmax.f32 %v1615, 0.0
      %v2062 = vmax.f32 %v1620, 0.0
      %v2063 = vmax.f32 %v1623, 0.0
      %v2064 = vmax.f32 %v1628, 0.0
      %v2065 = vmax.f32 %v1631, 0.0
      %v2066 = vmax.f32 %v1636, 0.0
      %v2067 = vmax.f32 %v1639, 0.0
      %v2068 = vmax.f32 %v1644, 0.0
      %v2069 = vmax.f32 %v1647, 0.0
      %v2070 = vmax.f32 %v1652, 0.0
      %v2071 = vmax.f32 %v1655, 0.0
      %v2072 = vmax.f32 %v1660, 0.0
      %v2073 = vmax.f32 %v1663, 0.0
      %v2074 = vmax.f32 %v1668, 0.0
      %v2075 = vmax.f32 %v1671, 0.0
      %v2076 = vmax.f32 %v1676, 0.0
      %v2077 = vmax.f32 %v1679, 0.0
      %v2078 = vmax.f32 %v1684, 0.0
      %v2079 = vmax.f32 %v1687, 0.0
      %v2080 = vmax.f32 %v1692, 0.0
      %v2081 = vmax.f32 %v1695, 0.0
      %v2082 = vmax.f32 %v1700, 0.0
      %v2083 = vmax.f32 %v1703, 0.0
      %v2084 = vmax.f32 %v1708, 0.0
      %v2085 = vmax.f32 %v1711, 0.0
      %v2086 = vmax.f32 %v1716, 0.0
      %v2087 = vmax.f32 %v1719, 0.0
      %v2088 = vmax.f32 %v1724, 0.0
      %v2089 = vmax.f32 %v1727, 0.0
      %v2090 = vmax.f32 %v1732, 0.0
      %v2091 = vmax.f32 %v1735, 0.0
      %v2092 = vmax.f32 %v1740, 0.0
      %v2093 = vmax.f32 %v1743, 0.0
      %v2094 = vmax.f32 %v1748, 0.0
      %v2095 = vmax.f32 %v1751, 0.0
      %v2096 = vmax.f32 %v1756, 0.0
      %v2097 = vmax.f32 %v1759, 0.0
      %v2098 = vmax.f32 %v1764, 0.0
      %v2099 = vmax.f32 %v1767, 0.0
      %v2100 = vmax.f32 %v1772, 0.0
      %v2101 = vmax.f32 %v1775, 0.0
      %v2102 = vmax.f32 %v1780, 0.0
      %v2103 = vmax.f32 %v1783, 0.0
      %v2104 = vmax.f32 %v1788, 0.0
      %v2105 = vmax.f32 %v1791, 0.0
      %v2106 = vmax.f32 %v1796, 0.0
      %v2107 = vmax.f32 %v1799, 0.0
      %v2108 = vmax.f32 %v1804, 0.0
      %v2109 = vmax.f32 %v1807, 0.0
      %v2110 = vmax.f32 %v1812, 0.0
      %v2111 = vmax.f32 %v1815, 0.0
      %v2112 = vmax.f32 %v1820, 0.0
      %v2113 = vmax.f32 %v1823, 0.0
      %v2114 = vmax.f32 %v1828, 0.0
      %v2115 = vmax.f32 %v1831, 0.0
      %v2116 = vmax.f32 %v1836, 0.0
      %v2117 = vmax.f32 %v1839, 0.0
      %v2118 = vmax.f32 %v1844, 0.0
      %v2119 = vmax.f32 %v1847, 0.0
      %v2120 = vmax.f32 %v1852, 0.0
      %v2121 = vmax.f32 %v1855, 0.0
      %v2122 = vmax.f32 %v1860, 0.0
      %v2123 = vmax.f32 %v1863, 0.0
      %v2124 = vmax.f32 %v1868, 0.0
      %v2125 = vmax.f32 %v1871, 0.0
      %v2126 = vmax.f32 %v1876, 0.0
      %v2127 = vmax.f32 %v1879, 0.0
      %v2128 = vmax.f32 %v1884, 0.0
      %v2129 = vmax.f32 %v1887, 0.0
      %v2130 = vmax.f32 %v1892, 0.0
      %v2131 = vmax.f32 %v1895, 0.0
      %v2132 = vmax.f32 %v1900, 0.0
      %v2133 = vmax.f32 %v1903, 0.0
      %v2134 = vmax.f32 %v1908, 0.0
      %v2135 = vmax.f32 %v1911, 0.0
      %v2136 = vmax.f32 %v1916, 0.0
      %v2137 = vmax.f32 %v1919, 0.0
      %v2138 = vmax.f32 %v1924, 0.0
      %v2139 = vmax.f32 %v1927, 0.0
      %v2140 = vmax.f32 %v1932, 0.0
      %v2141 = vmax.f32 %v1935, 0.0
      %v2142 = vmax.f32 %v1940, 0.0
      %v2143 = vmax.f32 %v1943, 0.0
      %v2144 = vmax.f32 %v1948, 0.0
      %v2145 = vmax.f32 %v1951, 0.0
      %v2146 = vmax.f32 %v1956, 0.0
      %v2147 = vmax.f32 %v1959, 0.0
      %v2148 = vmax.f32 %v1964, 0.0
      %v2149 = vmax.f32 %v1967, 0.0
      %v2150 = vmax.f32 %v1972, 0.0
      %v2151 = vmax.f32 %v1975, 0.0
      %v2152 = vmax.f32 %v1980, 0.0
      %v2153 = vmax.f32 %v1983, 0.0
      %v2154 = vmax.f32 %v1988, 0.0
      %v2155 = vmax.f32 %v1991, 0.0
      %v2156 = vpack.c.bf16 %v1995, %v1994
      %v2157 = vpack.c.bf16 %v1997, %v1996
      %v2158 = vpack.c.bf16 %v1999, %v1998
      %v2159 = vpack.c.bf16 %v2001, %v2000
      %v2160 = vpack.c.bf16 %v2003, %v2002
      %v2161 = vpack.c.bf16 %v2005, %v2004
      %v2162 = vpack.c.bf16 %v2007, %v2006
      %v2163 = vpack.c.bf16 %v2009, %v2008
      %v2164 = vpack.c.bf16 %v2011, %v2010
      %v2165 = vpack.c.bf16 %v2013, %v2012
      %v2166 = vpack.c.bf16 %v2015, %v2014
      %v2167 = vpack.c.bf16 %v2017, %v2016
      %v2168 = vpack.c.bf16 %v2019, %v2018
      %v2169 = vpack.c.bf16 %v2021, %v2020
      %v2170 = vpack.c.bf16 %v2023, %v2022
      %v2171 = vpack.c.bf16 %v2025, %v2024
      %v2172 = vpack.c.bf16 %v2027, %v2026
      %v2173 = vpack.c.bf16 %v2029, %v2028
      %v2174 = vpack.c.bf16 %v2031, %v2030
      %v2175 = vpack.c.bf16 %v2033, %v2032
      %v2176 = vpack.c.bf16 %v2035, %v2034
      %v2177 = vpack.c.bf16 %v2037, %v2036
      %v2178 = vpack.c.bf16 %v2039, %v2038
      %v2179 = vpack.c.bf16 %v2041, %v2040
      %v2180 = vpack.c.bf16 %v2043, %v2042
      %v2181 = vpack.c.bf16 %v2045, %v2044
      %v2182 = vpack.c.bf16 %v2047, %v2046
      %v2183 = vpack.c.bf16 %v2049, %v2048
      %v2184 = vpack.c.bf16 %v2051, %v2050
      %v2185 = vpack.c.bf16 %v2053, %v2052
      %v2186 = vpack.c.bf16 %v2055, %v2054
      %v2187 = vpack.c.bf16 %v2057, %v2056
      %v2188 = vpack.c.bf16 %v2059, %v2058
      %v2189 = vpack.c.bf16 %v2061, %v2060
      %v2190 = vpack.c.bf16 %v2063, %v2062
      %v2191 = vpack.c.bf16 %v2065, %v2064
      %v2192 = vpack.c.bf16 %v2067, %v2066
      %v2193 = vpack.c.bf16 %v2069, %v2068
      %v2194 = vpack.c.bf16 %v2071, %v2070
      %v2195 = vpack.c.bf16 %v2073, %v2072
      %v2196 = vpack.c.bf16 %v2075, %v2074
      %v2197 = vpack.c.bf16 %v2077, %v2076
      %v2198 = vpack.c.bf16 %v2079, %v2078
      %v2199 = vpack.c.bf16 %v2081, %v2080
      %v2200 = vpack.c.bf16 %v2083, %v2082
      %v2201 = vpack.c.bf16 %v2085, %v2084
      %v2202 = vpack.c.bf16 %v2087, %v2086
      %v2203 = vpack.c.bf16 %v2089, %v2088
      %v2204 = vpack.c.bf16 %v2091, %v2090
      %v2205 = vpack.c.bf16 %v2093, %v2092
      %v2206 = vpack.c.bf16 %v2095, %v2094
      %v2207 = vpack.c.bf16 %v2097, %v2096
      %v2208 = vpack.c.bf16 %v2099, %v2098
      %v2209 = vpack.c.bf16 %v2101, %v2100
      %v2210 = vpack.c.bf16 %v2103, %v2102
      %v2211 = vpack.c.bf16 %v2105, %v2104
      %v2212 = vpack.c.bf16 %v2107, %v2106
      %v2213 = vpack.c.bf16 %v2109, %v2108
      %v2214 = vpack.c.bf16 %v2111, %v2110
      %v2215 = vpack.c.bf16 %v2113, %v2112
      %v2216 = vpack.c.bf16 %v2115, %v2114
      %v2217 = vpack.c.bf16 %v2117, %v2116
      %v2218 = vpack.c.bf16 %v2119, %v2118
      %v2219 = vpack.c.bf16 %v2121, %v2120
      %v2220 = vpack.c.bf16 %v2123, %v2122
      %v2221 = vpack.c.bf16 %v2125, %v2124
      %v2222 = vpack.c.bf16 %v2127, %v2126
      %v2223 = vpack.c.bf16 %v2129, %v2128
      %v2224 = vpack.c.bf16 %v2131, %v2130
      %v2225 = vpack.c.bf16 %v2133, %v2132
      %v2226 = vpack.c.bf16 %v2135, %v2134
      %v2227 = vpack.c.bf16 %v2137, %v2136
      %v2228 = vpack.c.bf16 %v2139, %v2138
      %v2229 = vpack.c.bf16 %v2141, %v2140
      %v2230 = vpack.c.bf16 %v2143, %v2142
      %v2231 = vpack.c.bf16 %v2145, %v2144
      %v2232 = vpack.c.bf16 %v2147, %v2146
      %v2233 = vpack.c.bf16 %v2149, %v2148
      %v2234 = vpack.c.bf16 %v2151, %v2150
      %v2235 = vpack.c.bf16 %v2153, %v2152
      %v2236 = vpack.c.bf16 %v2155, %v2154
      %v2237 = vld [vmem:[%s4] sm:$0xf]
      %v2238 = vld [vmem:[%s4 + $0x4] sm:$0xf]
      %v2239 = vld [vmem:[%s4 + $0x8] sm:$0xf]
      %v2240 = vld [vmem:[%s4 + $0xc] sm:$0xf]
      %v2241 = vld [vmem:[%s4 + $0x10] sm:$0xf]
      %v2242 = vld [vmem:[%s4 + $0x14] sm:$0xf]
      %v2243 = vld [vmem:[%s4 + $0x18] sm:$0xf]
      %v2244 = vld [vmem:[%s4 + $0x1c] sm:$0xf]
      %v2245 = vld [vmem:[%s4 + $0x20] sm:$0xf]
      %v2246 = vld [vmem:[%s4 + $0x24] sm:$0xf]
      %v2247 = vld [vmem:[%s4 + $0x28] sm:$0xf]
      %v2248 = vld [vmem:[%s4 + $0x2c] sm:$0xf]
      %v2249 = vld [vmem:[%s4 + $0x30] sm:$0xf]
      %v2250 = vld [vmem:[%s4 + $0x34] sm:$0xf]
      %v2251 = vld [vmem:[%s4 + $0x38] sm:$0xf]
      %v2252 = vld [vmem:[%s4 + $0x3c] sm:$0xf]
      %s2253 = scalar_lea.vmem %s4, 64
      %v2254 = vld [vmem:[%s2253] sm:$0xf]
      %v2255 = vld [vmem:[%s2253 + $0x4] sm:$0xf]
      %v2256 = vld [vmem:[%s2253 + $0x8] sm:$0xf]
      %v2257 = vld [vmem:[%s2253 + $0xc] sm:$0xf]
      %v2258 = vld [vmem:[%s2253 + $0x10] sm:$0xf]
      %v2259 = vld [vmem:[%s2253 + $0x14] sm:$0xf]
      %v2260 = vld [vmem:[%s2253 + $0x18] sm:$0xf]
      %v2261 = vld [vmem:[%s2253 + $0x1c] sm:$0xf]
      %v2262 = vld [vmem:[%s2253 + $0x20] sm:$0xf]
      %v2263 = vld [vmem:[%s2253 + $0x24] sm:$0xf]
      %v2264 = vld [vmem:[%s2253 + $0x28] sm:$0xf]
      %v2265 = vld [vmem:[%s2253 + $0x2c] sm:$0xf]
      %v2266 = vld [vmem:[%s2253 + $0x30] sm:$0xf]
      %v2267 = vld [vmem:[%s2253 + $0x34] sm:$0xf]
      %v2268 = vld [vmem:[%s2253 + $0x38] sm:$0xf]
      %v2269 = vld [vmem:[%s2253 + $0x3c] sm:$0xf]
      %v2286 = vunpack.c.l.b16 %v2254
      %v2287 = vunpack.c.l.b16 %v2255
      %v2288 = vunpack.c.l.b16 %v2256
      %v2289 = vunpack.c.l.b16 %v2257
      %v2290 = vunpack.c.l.b16 %v2258
      %v2291 = vunpack.c.l.b16 %v2259
      %v2292 = vunpack.c.l.b16 %v2260
      %v2293 = vunpack.c.l.b16 %v2261
      %v2294 = vunpack.c.l.b16 %v2262
      %v2295 = vunpack.c.l.b16 %v2263
      %v2296 = vunpack.c.l.b16 %v2264
      %v2297 = vunpack.c.l.b16 %v2265
      %v2298 = vunpack.c.l.b16 %v2266
      %v2299 = vunpack.c.l.b16 %v2267
      %v2300 = vunpack.c.l.b16 %v2268
      %v2301 = vunpack.c.l.b16 %v2269
      %v2302 = vpack.c.b16 %v2287, %v2286
      %v2303 = vpack.c.b16 %v2289, %v2288
      %v2304 = vpack.c.b16 %v2291, %v2290
      %v2305 = vpack.c.b16 %v2293, %v2292
      %v2306 = vpack.c.b16 %v2295, %v2294
      %v2307 = vpack.c.b16 %v2297, %v2296
      %v2308 = vpack.c.b16 %v2299, %v2298
      %v2309 = vpack.c.b16 %v2301, %v2300
      %2318 = vmatprep.subr.bf16.mxu0 0
      %2319 = vmatpush1.bf16.msra.mxu0 %v2302
      %2320 = vmatprep.subr.bf16.mxu0 0
      %2321 = vmatpush1.bf16.msra.mxu0 %v2303
      %2322 = vmatprep.subr.bf16.mxu0 0
      %2323 = vmatpush1.bf16.msra.mxu0 %v2304
      %2324 = vmatprep.subr.bf16.mxu0 0
      %2325 = vmatpush1.bf16.msra.mxu0 %v2305
      %2326 = vmatprep.subr.bf16.mxu0 0
      %2327 = vmatpush1.bf16.msra.mxu0 %v2306
      %2328 = vmatprep.subr.bf16.mxu0 0
      %2329 = vmatpush1.bf16.msra.mxu0 %v2307
      %2330 = vmatprep.subr.bf16.mxu0 0
      %2331 = vmatpush1.bf16.msra.mxu0 %v2308
      %2332 = vmatprep.subr.bf16.mxu0 0
      %2333 = vmatpush1.bf16.msra.mxu0 %v2309
      %2334 = vmatprep.subr.bf16.mxu0 0
      %2335 = vmatpush1.bf16.msra.mxu0 0
      %2336 = vmatprep.subr.bf16.mxu0 0
      %2337 = vmatpush1.bf16.msra.mxu0 0
      %2338 = vmatprep.subr.bf16.mxu0 0
      %2339 = vmatpush1.bf16.msra.mxu0 0
      %2340 = vmatprep.subr.bf16.mxu0 0
      %2341 = vmatpush1.bf16.msra.mxu0 0
      %2342 = vmatprep.subr.bf16.mxu0 0
      %2343 = vmatpush1.bf16.msra.mxu0 0
      %2344 = vmatprep.subr.bf16.mxu0 0
      %2345 = vmatpush1.bf16.msra.mxu0 0
      %2346 = vmatprep.subr.bf16.mxu0 0
      %2347 = vmatpush1.bf16.msra.mxu0 0
      %2348 = vmatprep.subr.bf16.mxu0 0
      %2349 = vmatpush1.bf16.msra.mxu0 0
      %2350 = vmatprep.mubr.bf16.mxu0 0
      %2351 = vmatmul.mubr.bf16.gmra.mrb[0].mxu0 %v2165
      %v2352 = vpop.f32.mrb[0].mxu0
      %v2353 = vadd.f32 0.0, %v2352
      %v2354 = vpop.f32.mrb[0].mxu0
      %v2355 = vpop.f32.mrb[0].mxu0
      %v2356 = vadd.f32 0.0, %v2355
      %v2357 = vpop.f32.mrb[0].mxu0
      %2358 = vmatprep.mubr.bf16.mxu0 0
      %2359 = vmatmul.mubr.bf16.gmra.mrb[0].mxu0 %v2166
      %v2360 = vpop.f32.mrb[0].mxu0
      %v2361 = vadd.f32 0.0, %v2360
      %v2362 = vpop.f32.mrb[0].mxu0
      %v2363 = vpop.f32.mrb[0].mxu0
      %v2364 = vadd.f32 0.0, %v2363
      %v2365 = vpop.f32.mrb[0].mxu0
      %2366 = vmatprep.mubr.bf16.mxu0 0
      %2367 = vmatmul.mubr.bf16.gmra.mrb[0].mxu0 %v2167
      %v2368 = vpop.f32.mrb[0].mxu0
      %v2369 = vadd.f32 0.0, %v2368
      %v2370 = vpop.f32.mrb[0].mxu0
      %v2371 = vpop.f32.mrb[0].mxu0
      %v2372 = vadd.f32 0.0, %v2371
      %v2373 = vpop.f32.mrb[0].mxu0
      %2374 = vmatprep.mubr.bf16.mxu0 0
      %2375 = vmatmul.mubr.bf16.gmra.mrb[0].mxu0 %v2168
      %v2376 = vpop.f32.mrb[0].mxu0
      %v2377 = vadd.f32 0.0, %v2376
      %v2378 = vpop.f32.mrb[0].mxu0
      %v2379 = vpop.f32.mrb[0].mxu0
      %v2380 = vadd.f32 0.0, %v2379
      %v2381 = vpop.f32.mrb[0].mxu0
      %2382 = vmatprep.mubr.bf16.mxu0 0
      %2383 = vmatmul.mubr.bf16.gmra.mrb[0].mxu0 %v2169
      %v2384 = vpop.f32.mrb[0].mxu0
      %v2385 = vadd.f32 0.0, %v2384
      %v2386 = vpop.f32.mrb[0].mxu0
      %v2387 = vpop.f32.mrb[0].mxu0
      %v2388 = vadd.f32 0.0, %v2387
      %v2389 = vpop.f32.mrb[0].mxu0
      %2390 = vmatprep.mubr.bf16.mxu0 0
      %2391 = vmatmul.mubr.bf16.gmra.mrb[0].mxu0 %v2170
      %v2392 = vpop.f32.mrb[0].mxu0
      %v2393 = vadd.f32 0.0, %v2392
      %v2394 = vpop.f32.mrb[0].mxu0
      %v2395 = vpop.f32.mrb[0].mxu0
      %v2396 = vadd.f32 0.0, %v2395
      %v2397 = vpop.f32.mrb[0].mxu0
      %2398 = vmatprep.mubr.bf16.mxu0 0
      %2399 = vmatmul.mubr.bf16.gmra.mrb[0].mxu0 %v2171
      %v2400 = vpop.f32.mrb[0].mxu0
      %v2401 = vadd.f32 0.0, %v2400
      %v2402 = vpop.f32.mrb[0].mxu0
      %v2403 = vpop.f32.mrb[0].mxu0
      %v2404 = vadd.f32 0.0, %v2403
      %v2405 = vpop.f32.mrb[0].mxu0
      %2406 = vmatprep.mubr.bf16.mxu0 0
      %2407 = vmatmul.mubr.bf16.gmra.mrb[0].mxu0 %v2172
      %v2408 = vpop.f32.mrb[0].mxu0
      %v2409 = vadd.f32 0.0, %v2408
      %v2410 = vpop.f32.mrb[0].mxu0
      %v2411 = vpop.f32.mrb[0].mxu0
      %v2412 = vadd.f32 0.0, %v2411
      %v2413 = vpop.f32.mrb[0].mxu0
      %2414 = vmatprep.mubr.bf16.mxu0 0
      %2415 = vmatmul.mubr.bf16.gmra.mrb[0].mxu0 %v2173
      %v2416 = vpop.f32.mrb[0].mxu0
      %v2417 = vadd.f32 0.0, %v2416
      %v2418 = vpop.f32.mrb[0].mxu0
      %v2419 = vpop.f32.mrb[0].mxu0
      %v2420 = vadd.f32 0.0, %v2419
      %v2421 = vpop.f32.mrb[0].mxu0
      %2422 = vdwg.mxu0
      %v2439 = vunpack.c.l.b16 %v2237
      %v2440 = vunpack.c.l.b16 %v2238
      %v2441 = vunpack.c.l.b16 %v2239
      %v2442 = vunpack.c.l.b16 %v2240
      %v2443 = vunpack.c.l.b16 %v2241
      %v2444 = vunpack.c.l.b16 %v2242
      %v2445 = vunpack.c.l.b16 %v2243
      %v2446 = vunpack.c.l.b16 %v2244
      %v2447 = vunpack.c.l.b16 %v2245
      %v2448 = vunpack.c.l.b16 %v2246
      %v2449 = vunpack.c.l.b16 %v2247
      %v2450 = vunpack.c.l.b16 %v2248
      %v2451 = vunpack.c.l.b16 %v2249
      %v2452 = vunpack.c.l.b16 %v2250
      %v2453 = vunpack.c.l.b16 %v2251
      %v2454 = vunpack.c.l.b16 %v2252
      %v2455 = vpack.c.b16 %v2440, %v2439
      %v2456 = vpack.c.b16 %v2442, %v2441
      %v2457 = vpack.c.b16 %v2444, %v2443
      %v2458 = vpack.c.b16 %v2446, %v2445
      %v2459 = vpack.c.b16 %v2448, %v2447
      %v2460 = vpack.c.b16 %v2450, %v2449
      %v2461 = vpack.c.b16 %v2452, %v2451
      %v2462 = vpack.c.b16 %v2454, %v2453
      %2471 = vmatprep.subr.bf16.mxu0 0
      %2472 = vmatpush1.bf16.msra.mxu0 %v2455
      %2473 = vmatprep.subr.bf16.mxu0 0
      %2474 = vmatpush1.bf16.msra.mxu0 %v2456
      %2475 = vmatprep.subr.bf16.mxu0 0
      %2476 = vmatpush1.bf16.msra.mxu0 %v2457
      %2477 = vmatprep.subr.bf16.mxu0 0
      %2478 = vmatpush1.bf16.msra.mxu0 %v2458
      %2479 = vmatprep.subr.bf16.mxu0 0
      %2480 = vmatpush1.bf16.msra.mxu0 %v2459
      %2481 = vmatprep.subr.bf16.mxu0 0
      %2482 = vmatpush1.bf16.msra.mxu0 %v2460
      %2483 = vmatprep.subr.bf16.mxu0 0
      %2484 = vmatpush1.bf16.msra.mxu0 %v2461
      %2485 = vmatprep.subr.bf16.mxu0 0
      %2486 = vmatpush1.bf16.msra.mxu0 %v2462
      %2487 = vmatprep.subr.bf16.mxu0 0
      %2488 = vmatpush1.bf16.msra.mxu0 0
      %2489 = vmatprep.subr.bf16.mxu0 0
      %2490 = vmatpush1.bf16.msra.mxu0 0
      %2491 = vmatprep.subr.bf16.mxu0 0
      %2492 = vmatpush1.bf16.msra.mxu0 0
      %2493 = vmatprep.subr.bf16.mxu0 0
      %2494 = vmatpush1.bf16.msra.mxu0 0
      %2495 = vmatprep.subr.bf16.mxu0 0
      %2496 = vmatpush1.bf16.msra.mxu0 0
      %2497 = vmatprep.subr.bf16.mxu0 0
      %2498 = vmatpush1.bf16.msra.mxu0 0
      %2499 = vmatprep.subr.bf16.mxu0 0
      %2500 = vmatpush1.bf16.msra.mxu0 0
      %2501 = vmatprep.subr.bf16.mxu0 0
      %2502 = vmatpush1.bf16.msra.mxu0 0
      %2503 = vmatprep.mubr.bf16.mxu0 0
      %2504 = vmatmul.mubr.bf16.gmra.mrb[0].mxu0 %v2156
      %v2505 = vpop.f32.mrb[0].mxu0
      %v2506 = vadd.f32 %v2353, %v2505
      %v2507 = vpop.f32.mrb[0].mxu0
      %v2508 = vpop.f32.mrb[0].mxu0
      %v2509 = vadd.f32 %v2356, %v2508
      %v2510 = vpop.f32.mrb[0].mxu0
      %2511 = vmatprep.mubr.bf16.mxu0 0
      %2512 = vmatmul.mubr.bf16.gmra.mrb[0].mxu0 %v2157
      %v2513 = vpop.f32.mrb[0].mxu0
      %v2514 = vadd.f32 %v2361, %v2513
      %v2515 = vpop.f32.mrb[0].mxu0
      %v2516 = vpop.f32.mrb[0].mxu0
      %v2517 = vadd.f32 %v2364, %v2516
      %v2518 = vpop.f32.mrb[0].mxu0
      %2519 = vmatprep.mubr.bf16.mxu0 0
      %2520 = vmatmul.mubr.bf16.gmra.mrb[0].mxu0 %v2158
      %v2521 = vpop.f32.mrb[0].mxu0
      %v2522 = vadd.f32 %v2369, %v2521
      %v2523 = vpop.f32.mrb[0].mxu0
      %v2524 = vpop.f32.mrb[0].mxu0
      %v2525 = vadd.f32 %v2372, %v2524
      %v2526 = vpop.f32.mrb[0].mxu0
      %2527 = vmatprep.mubr.bf16.mxu0 0
      %2528 = vmatmul.mubr.bf16.gmra.mrb[0].mxu0 %v2159
      %v2529 = vpop.f32.mrb[0].mxu0
      %v2530 = vadd.f32 %v2377, %v2529
      %v2531 = vpop.f32.mrb[0].mxu0
      %v2532 = vpop.f32.mrb[0].mxu0
      %v2533 = vadd.f32 %v2380, %v2532
      %v2534 = vpop.f32.mrb[0].mxu0
      %2535 = vmatprep.mubr.bf16.mxu0 0
      %2536 = vmatmul.mubr.bf16.gmra.mrb[0].mxu0 %v2160
      %v2537 = vpop.f32.mrb[0].mxu0
      %v2538 = vadd.f32 %v2385, %v2537
      %v2539 = vpop.f32.mrb[0].mxu0
      %v2540 = vpop.f32.mrb[0].mxu0
      %v2541 = vadd.f32 %v2388, %v2540
      %v2542 = vpop.f32.mrb[0].mxu0
      %2543 = vmatprep.mubr.bf16.mxu0 0
      %2544 = vmatmul.mubr.bf16.gmra.mrb[0].mxu0 %v2161
      %v2545 = vpop.f32.mrb[0].mxu0
      %v2546 = vadd.f32 %v2393, %v2545
      %v2547 = vpop.f32.mrb[0].mxu0
      %v2548 = vpop.f32.mrb[0].mxu0
      %v2549 = vadd.f32 %v2396, %v2548
      %v2550 = vpop.f32.mrb[0].mxu0
      %2551 = vmatprep.mubr.bf16.mxu0 0
      %2552 = vmatmul.mubr.bf16.gmra.mrb[0].mxu0 %v2162
      %v2553 = vpop.f32.mrb[0].mxu0
      %v2554 = vadd.f32 %v2401, %v2553
      %v2555 = vpop.f32.mrb[0].mxu0
      %v2556 = vpop.f32.mrb[0].mxu0
      %v2557 = vadd.f32 %v2404, %v2556
      %v2558 = vpop.f32.mrb[0].mxu0
      %2559 = vmatprep.mubr.bf16.mxu0 0
      %2560 = vmatmul.mubr.bf16.gmra.mrb[0].mxu0 %v2163
      %v2561 = vpop.f32.mrb[0].mxu0
      %v2562 = vadd.f32 %v2409, %v2561
      %v2563 = vpop.f32.mrb[0].mxu0
      %v2564 = vpop.f32.mrb[0].mxu0
      %v2565 = vadd.f32 %v2412, %v2564
      %v2566 = vpop.f32.mrb[0].mxu0
      %2567 = vmatprep.mubr.bf16.mxu0 0
      %2568 = vmatmul.mubr.bf16.gmra.mrb[0].mxu0 %v2164
      %v2569 = vpop.f32.mrb[0].mxu0
      %v2570 = vadd.f32 %v2417, %v2569
      %v2571 = vpop.f32.mrb[0].mxu0
      %v2572 = vpop.f32.mrb[0].mxu0
      %v2573 = vadd.f32 %v2420, %v2572
      %v2574 = vpop.f32.mrb[0].mxu0
      %2575 = vdwg.mxu0
      %s2576 = scalar_lea.vmem %s4, 128
      %v2577 = vld [vmem:[%s2576] sm:$0xf]
      %v2578 = vld [vmem:[%s2576 + $0x4] sm:$0xf]
      %v2579 = vld [vmem:[%s2576 + $0x8] sm:$0xf]
      %v2580 = vld [vmem:[%s2576 + $0xc] sm:$0xf]
      %v2581 = vld [vmem:[%s2576 + $0x10] sm:$0xf]
      %v2582 = vld [vmem:[%s2576 + $0x14] sm:$0xf]
      %v2583 = vld [vmem:[%s2576 + $0x18] sm:$0xf]
      %v2584 = vld [vmem:[%s2576 + $0x1c] sm:$0xf]
      %v2585 = vld [vmem:[%s2576 + $0x20] sm:$0xf]
      %v2586 = vld [vmem:[%s2576 + $0x24] sm:$0xf]
      %v2587 = vld [vmem:[%s2576 + $0x28] sm:$0xf]
      %v2588 = vld [vmem:[%s2576 + $0x2c] sm:$0xf]
      %v2589 = vld [vmem:[%s2576 + $0x30] sm:$0xf]
      %v2590 = vld [vmem:[%s2576 + $0x34] sm:$0xf]
      %v2591 = vld [vmem:[%s2576 + $0x38] sm:$0xf]
      %v2592 = vld [vmem:[%s2576 + $0x3c] sm:$0xf]
      %v2609 = vunpack.c.l.b16 %v2577
      %v2610 = vunpack.c.l.b16 %v2578
      %v2611 = vunpack.c.l.b16 %v2579
      %v2612 = vunpack.c.l.b16 %v2580
      %v2613 = vunpack.c.l.b16 %v2581
      %v2614 = vunpack.c.l.b16 %v2582
      %v2615 = vunpack.c.l.b16 %v2583
      %v2616 = vunpack.c.l.b16 %v2584
      %v2617 = vunpack.c.l.b16 %v2585
      %v2618 = vunpack.c.l.b16 %v2586
      %v2619 = vunpack.c.l.b16 %v2587
      %v2620 = vunpack.c.l.b16 %v2588
      %v2621 = vunpack.c.l.b16 %v2589
      %v2622 = vunpack.c.l.b16 %v2590
      %v2623 = vunpack.c.l.b16 %v2591
      %v2624 = vunpack.c.l.b16 %v2592
      %v2625 = vpack.c.b16 %v2610, %v2609
      %v2626 = vpack.c.b16 %v2612, %v2611
      %v2627 = vpack.c.b16 %v2614, %v2613
      %v2628 = vpack.c.b16 %v2616, %v2615
      %v2629 = vpack.c.b16 %v2618, %v2617
      %v2630 = vpack.c.b16 %v2620, %v2619
      %v2631 = vpack.c.b16 %v2622, %v2621
      %v2632 = vpack.c.b16 %v2624, %v2623
      %2641 = vmatprep.subr.bf16.mxu0 0
      %2642 = vmatpush1.bf16.msra.mxu0 %v2625
      %2643 = vmatprep.subr.bf16.mxu0 0
      %2644 = vmatpush1.bf16.msra.mxu0 %v2626
      %2645 = vmatprep.subr.bf16.mxu0 0
      %2646 = vmatpush1.bf16.msra.mxu0 %v2627
      %2647 = vmatprep.subr.bf16.mxu0 0
      %2648 = vmatpush1.bf16.msra.mxu0 %v2628
      %2649 = vmatprep.subr.bf16.mxu0 0
      %2650 = vmatpush1.bf16.msra.mxu0 %v2629
      %2651 = vmatprep.subr.bf16.mxu0 0
      %2652 = vmatpush1.bf16.msra.mxu0 %v2630
      %2653 = vmatprep.subr.bf16.mxu0 0
      %2654 = vmatpush1.bf16.msra.mxu0 %v2631
      %2655 = vmatprep.subr.bf16.mxu0 0
      %2656 = vmatpush1.bf16.msra.mxu0 %v2632
      %2657 = vmatprep.subr.bf16.mxu0 0
      %2658 = vmatpush1.bf16.msra.mxu0 0
      %2659 = vmatprep.subr.bf16.mxu0 0
      %2660 = vmatpush1.bf16.msra.mxu0 0
      %2661 = vmatprep.subr.bf16.mxu0 0
      %2662 = vmatpush1.bf16.msra.mxu0 0
      %2663 = vmatprep.subr.bf16.mxu0 0
      %2664 = vmatpush1.bf16.msra.mxu0 0
      %2665 = vmatprep.subr.bf16.mxu0 0
      %2666 = vmatpush1.bf16.msra.mxu0 0
      %2667 = vmatprep.subr.bf16.mxu0 0
      %2668 = vmatpush1.bf16.msra.mxu0 0
      %2669 = vmatprep.subr.bf16.mxu0 0
      %2670 = vmatpush1.bf16.msra.mxu0 0
      %2671 = vmatprep.subr.bf16.mxu0 0
      %2672 = vmatpush1.bf16.msra.mxu0 0
      %2673 = vmatprep.mubr.bf16.mxu0 0
      %2674 = vmatmul.mubr.bf16.gmra.mrb[0].mxu0 %v2174
      %v2675 = vpop.f32.mrb[0].mxu0
      %v2676 = vadd.f32 0.0, %v2675
      %v2677 = vpop.f32.mrb[0].mxu0
      %v2678 = vpop.f32.mrb[0].mxu0
      %v2679 = vadd.f32 0.0, %v2678
      %v2680 = vpop.f32.mrb[0].mxu0
      %2681 = vmatprep.mubr.bf16.mxu0 0
      %2682 = vmatmul.mubr.bf16.gmra.mrb[0].mxu0 %v2175
      %v2683 = vpop.f32.mrb[0].mxu0
      %v2684 = vadd.f32 0.0, %v2683
      %v2685 = vpop.f32.mrb[0].mxu0
      %v2686 = vpop.f32.mrb[0].mxu0
      %v2687 = vadd.f32 0.0, %v2686
      %v2688 = vpop.f32.mrb[0].mxu0
      %2689 = vmatprep.mubr.bf16.mxu0 0
      %2690 = vmatmul.mubr.bf16.gmra.mrb[0].mxu0 %v2176
      %v2691 = vpop.f32.mrb[0].mxu0
      %v2692 = vadd.f32 0.0, %v2691
      %v2693 = vpop.f32.mrb[0].mxu0
      %v2694 = vpop.f32.mrb[0].mxu0
      %v2695 = vadd.f32 0.0, %v2694
      %v2696 = vpop.f32.mrb[0].mxu0
      %2697 = vmatprep.mubr.bf16.mxu0 0
      %2698 = vmatmul.mubr.bf16.gmra.mrb[0].mxu0 %v2177
      %v2699 = vpop.f32.mrb[0].mxu0
      %v2700 = vadd.f32 0.0, %v2699
      %v2701 = vpop.f32.mrb[0].mxu0
      %v2702 = vpop.f32.mrb[0].mxu0
      %v2703 = vadd.f32 0.0, %v2702
      %v2704 = vpop.f32.mrb[0].mxu0
      %2705 = vmatprep.mubr.bf16.mxu0 0
      %2706 = vmatmul.mubr.bf16.gmra.mrb[0].mxu0 %v2178
      %v2707 = vpop.f32.mrb[0].mxu0
      %v2708 = vadd.f32 0.0, %v2707
      %v2709 = vpop.f32.mrb[0].mxu0
      %v2710 = vpop.f32.mrb[0].mxu0
      %v2711 = vadd.f32 0.0, %v2710
      %v2712 = vpop.f32.mrb[0].mxu0
      %2713 = vmatprep.mubr.bf16.mxu0 0
      %2714 = vmatmul.mubr.bf16.gmra.mrb[0].mxu0 %v2179
      %v2715 = vpop.f32.mrb[0].mxu0
      %v2716 = vadd.f32 0.0, %v2715
      %v2717 = vpop.f32.mrb[0].mxu0
      %v2718 = vpop.f32.mrb[0].mxu0
      %v2719 = vadd.f32 0.0, %v2718
      %v2720 = vpop.f32.mrb[0].mxu0
      %2721 = vmatprep.mubr.bf16.mxu0 0
      %2722 = vmatmul.mubr.bf16.gmra.mrb[0].mxu0 %v2180
      %v2723 = vpop.f32.mrb[0].mxu0
      %v2724 = vadd.f32 0.0, %v2723
      %v2725 = vpop.f32.mrb[0].mxu0
      %v2726 = vpop.f32.mrb[0].mxu0
      %v2727 = vadd.f32 0.0, %v2726
      %v2728 = vpop.f32.mrb[0].mxu0
      %2729 = vmatprep.mubr.bf16.mxu0 0
      %2730 = vmatmul.mubr.bf16.gmra.mrb[0].mxu0 %v2181
      %v2731 = vpop.f32.mrb[0].mxu0
      %v2732 = vadd.f32 0.0, %v2731
      %v2733 = vpop.f32.mrb[0].mxu0
      %v2734 = vpop.f32.mrb[0].mxu0
      %v2735 = vadd.f32 0.0, %v2734
      %v2736 = vpop.f32.mrb[0].mxu0
      %2737 = vmatprep.mubr.bf16.mxu0 0
      %2738 = vmatmul.mubr.bf16.gmra.mrb[0].mxu0 %v2182
      %v2739 = vpop.f32.mrb[0].mxu0
      %v2740 = vadd.f32 0.0, %v2739
      %v2741 = vpop.f32.mrb[0].mxu0
      %v2742 = vpop.f32.mrb[0].mxu0
      %v2743 = vadd.f32 0.0, %v2742
      %v2744 = vpop.f32.mrb[0].mxu0
      %2745 = vdwg.mxu0
      %v2746 = vadd.f32 %v2506, %v2676
      %v2747 = vadd.f32 %v2509, %v2679
      %v2748 = vadd.f32 %v2514, %v2684
      %v2749 = vadd.f32 %v2517, %v2687
      %v2750 = vadd.f32 %v2522, %v2692
      %v2751 = vadd.f32 %v2525, %v2695
      %v2752 = vadd.f32 %v2530, %v2700
      %v2753 = vadd.f32 %v2533, %v2703
      %v2754 = vadd.f32 %v2538, %v2708
      %v2755 = vadd.f32 %v2541, %v2711
      %v2756 = vadd.f32 %v2546, %v2716
      %v2757 = vadd.f32 %v2549, %v2719
      %v2758 = vadd.f32 %v2554, %v2724
      %v2759 = vadd.f32 %v2557, %v2727
      %v2760 = vadd.f32 %v2562, %v2732
      %v2761 = vadd.f32 %v2565, %v2735
      %v2762 = vadd.f32 %v2570, %v2740
      %v2763 = vadd.f32 %v2573, %v2743
      %s2764 = scalar_lea.vmem %s4, 192
      %v2765 = vld [vmem:[%s2764] sm:$0xf]
      %v2766 = vld [vmem:[%s2764 + $0x4] sm:$0xf]
      %v2767 = vld [vmem:[%s2764 + $0x8] sm:$0xf]
      %v2768 = vld [vmem:[%s2764 + $0xc] sm:$0xf]
      %v2769 = vld [vmem:[%s2764 + $0x10] sm:$0xf]
      %v2770 = vld [vmem:[%s2764 + $0x14] sm:$0xf]
      %v2771 = vld [vmem:[%s2764 + $0x18] sm:$0xf]
      %v2772 = vld [vmem:[%s2764 + $0x1c] sm:$0xf]
      %v2773 = vld [vmem:[%s2764 + $0x20] sm:$0xf]
      %v2774 = vld [vmem:[%s2764 + $0x24] sm:$0xf]
      %v2775 = vld [vmem:[%s2764 + $0x28] sm:$0xf]
      %v2776 = vld [vmem:[%s2764 + $0x2c] sm:$0xf]
      %v2777 = vld [vmem:[%s2764 + $0x30] sm:$0xf]
      %v2778 = vld [vmem:[%s2764 + $0x34] sm:$0xf]
      %v2779 = vld [vmem:[%s2764 + $0x38] sm:$0xf]
      %v2780 = vld [vmem:[%s2764 + $0x3c] sm:$0xf]
      %v2797 = vunpack.c.l.b16 %v2765
      %v2798 = vunpack.c.l.b16 %v2766
      %v2799 = vunpack.c.l.b16 %v2767
      %v2800 = vunpack.c.l.b16 %v2768
      %v2801 = vunpack.c.l.b16 %v2769
      %v2802 = vunpack.c.l.b16 %v2770
      %v2803 = vunpack.c.l.b16 %v2771
      %v2804 = vunpack.c.l.b16 %v2772
      %v2805 = vunpack.c.l.b16 %v2773
      %v2806 = vunpack.c.l.b16 %v2774
      %v2807 = vunpack.c.l.b16 %v2775
      %v2808 = vunpack.c.l.b16 %v2776
      %v2809 = vunpack.c.l.b16 %v2777
      %v2810 = vunpack.c.l.b16 %v2778
      %v2811 = vunpack.c.l.b16 %v2779
      %v2812 = vunpack.c.l.b16 %v2780
      %v2813 = vpack.c.b16 %v2798, %v2797
      %v2814 = vpack.c.b16 %v2800, %v2799
      %v2815 = vpack.c.b16 %v2802, %v2801
      %v2816 = vpack.c.b16 %v2804, %v2803
      %v2817 = vpack.c.b16 %v2806, %v2805
      %v2818 = vpack.c.b16 %v2808, %v2807
      %v2819 = vpack.c.b16 %v2810, %v2809
      %v2820 = vpack.c.b16 %v2812, %v2811
      %2829 = vmatprep.subr.bf16.mxu0 0
      %2830 = vmatpush1.bf16.msra.mxu0 %v2813
      %2831 = vmatprep.subr.bf16.mxu0 0
      %2832 = vmatpush1.bf16.msra.mxu0 %v2814
      %2833 = vmatprep.subr.bf16.mxu0 0
      %2834 = vmatpush1.bf16.msra.mxu0 %v2815
      %2835 = vmatprep.subr.bf16.mxu0 0
      %2836 = vmatpush1.bf16.msra.mxu0 %v2816
      %2837 = vmatprep.subr.bf16.mxu0 0
      %2838 = vmatpush1.bf16.msra.mxu0 %v2817
      %2839 = vmatprep.subr.bf16.mxu0 0
      %2840 = vmatpush1.bf16.msra.mxu0 %v2818
      %2841 = vmatprep.subr.bf16.mxu0 0
      %2842 = vmatpush1.bf16.msra.mxu0 %v2819
      %2843 = vmatprep.subr.bf16.mxu0 0
      %2844 = vmatpush1.bf16.msra.mxu0 %v2820
      %2845 = vmatprep.subr.bf16.mxu0 0
      %2846 = vmatpush1.bf16.msra.mxu0 0
      %2847 = vmatprep.subr.bf16.mxu0 0
      %2848 = vmatpush1.bf16.msra.mxu0 0
      %2849 = vmatprep.subr.bf16.mxu0 0
      %2850 = vmatpush1.bf16.msra.mxu0 0
      %2851 = vmatprep.subr.bf16.mxu0 0
      %2852 = vmatpush1.bf16.msra.mxu0 0
      %2853 = vmatprep.subr.bf16.mxu0 0
      %2854 = vmatpush1.bf16.msra.mxu0 0
      %2855 = vmatprep.subr.bf16.mxu0 0
      %2856 = vmatpush1.bf16.msra.mxu0 0
      %2857 = vmatprep.subr.bf16.mxu0 0
      %2858 = vmatpush1.bf16.msra.mxu0 0
      %2859 = vmatprep.subr.bf16.mxu0 0
      %2860 = vmatpush1.bf16.msra.mxu0 0
      %2861 = vmatprep.mubr.bf16.mxu0 0
      %2862 = vmatmul.mubr.bf16.gmra.mrb[0].mxu0 %v2183
      %v2863 = vpop.f32.mrb[0].mxu0
      %v2864 = vadd.f32 0.0, %v2863
      %v2865 = vpop.f32.mrb[0].mxu0
      %v2866 = vpop.f32.mrb[0].mxu0
      %v2867 = vadd.f32 0.0, %v2866
      %v2868 = vpop.f32.mrb[0].mxu0
      %2869 = vmatprep.mubr.bf16.mxu0 0
      %2870 = vmatmul.mubr.bf16.gmra.mrb[0].mxu0 %v2184
      %v2871 = vpop.f32.mrb[0].mxu0
      %v2872 = vadd.f32 0.0, %v2871
      %v2873 = vpop.f32.mrb[0].mxu0
      %v2874 = vpop.f32.mrb[0].mxu0
      %v2875 = vadd.f32 0.0, %v2874
      %v2876 = vpop.f32.mrb[0].mxu0
      %2877 = vmatprep.mubr.bf16.mxu0 0
      %2878 = vmatmul.mubr.bf16.gmra.mrb[0].mxu0 %v2185
      %v2879 = vpop.f32.mrb[0].mxu0
      %v2880 = vadd.f32 0.0, %v2879
      %v2881 = vpop.f32.mrb[0].mxu0
      %v2882 = vpop.f32.mrb[0].mxu0
      %v2883 = vadd.f32 0.0, %v2882
      %v2884 = vpop.f32.mrb[0].mxu0
      %2885 = vmatprep.mubr.bf16.mxu0 0
      %2886 = vmatmul.mubr.bf16.gmra.mrb[0].mxu0 %v2186
      %v2887 = vpop.f32.mrb[0].mxu0
      %v2888 = vadd.f32 0.0, %v2887
      %v2889 = vpop.f32.mrb[0].mxu0
      %v2890 = vpop.f32.mrb[0].mxu0
      %v2891 = vadd.f32 0.0, %v2890
      %v2892 = vpop.f32.mrb[0].mxu0
      %2893 = vmatprep.mubr.bf16.mxu0 0
      %2894 = vmatmul.mubr.bf16.gmra.mrb[0].mxu0 %v2187
      %v2895 = vpop.f32.mrb[0].mxu0
      %v2896 = vadd.f32 0.0, %v2895
      %v2897 = vpop.f32.mrb[0].mxu0
      %v2898 = vpop.f32.mrb[0].mxu0
      %v2899 = vadd.f32 0.0, %v2898
      %v2900 = vpop.f32.mrb[0].mxu0
      %2901 = vmatprep.mubr.bf16.mxu0 0
      %2902 = vmatmul.mubr.bf16.gmra.mrb[0].mxu0 %v2188
      %v2903 = vpop.f32.mrb[0].mxu0
      %v2904 = vadd.f32 0.0, %v2903
      %v2905 = vpop.f32.mrb[0].mxu0
      %v2906 = vpop.f32.mrb[0].mxu0
      %v2907 = vadd.f32 0.0, %v2906
      %v2908 = vpop.f32.mrb[0].mxu0
      %2909 = vmatprep.mubr.bf16.mxu0 0
      %2910 = vmatmul.mubr.bf16.gmra.mrb[0].mxu0 %v2189
      %v2911 = vpop.f32.mrb[0].mxu0
      %v2912 = vadd.f32 0.0, %v2911
      %v2913 = vpop.f32.mrb[0].mxu0
      %v2914 = vpop.f32.mrb[0].mxu0
      %v2915 = vadd.f32 0.0, %v2914
      %v2916 = vpop.f32.mrb[0].mxu0
      %2917 = vmatprep.mubr.bf16.mxu0 0
      %2918 = vmatmul.mubr.bf16.gmra.mrb[0].mxu0 %v2190
      %v2919 = vpop.f32.mrb[0].mxu0
      %v2920 = vadd.f32 0.0, %v2919
      %v2921 = vpop.f32.mrb[0].mxu0
      %v2922 = vpop.f32.mrb[0].mxu0
      %v2923 = vadd.f32 0.0, %v2922
      %v2924 = vpop.f32.mrb[0].mxu0
      %2925 = vmatprep.mubr.bf16.mxu0 0
      %2926 = vmatmul.mubr.bf16.gmra.mrb[0].mxu0 %v2191
      %v2927 = vpop.f32.mrb[0].mxu0
      %v2928 = vadd.f32 0.0, %v2927
      %v2929 = vpop.f32.mrb[0].mxu0
      %v2930 = vpop.f32.mrb[0].mxu0
      %v2931 = vadd.f32 0.0, %v2930
      %v2932 = vpop.f32.mrb[0].mxu0
      %2933 = vdwg.mxu0
      %v2934 = vadd.f32 %v2746, %v2864
      %v2935 = vadd.f32 %v2747, %v2867
      %v2936 = vadd.f32 %v2748, %v2872
      %v2937 = vadd.f32 %v2749, %v2875
      %v2938 = vadd.f32 %v2750, %v2880
      %v2939 = vadd.f32 %v2751, %v2883
      %v2940 = vadd.f32 %v2752, %v2888
      %v2941 = vadd.f32 %v2753, %v2891
      %v2942 = vadd.f32 %v2754, %v2896
      %v2943 = vadd.f32 %v2755, %v2899
      %v2944 = vadd.f32 %v2756, %v2904
      %v2945 = vadd.f32 %v2757, %v2907
      %v2946 = vadd.f32 %v2758, %v2912
      %v2947 = vadd.f32 %v2759, %v2915
      %v2948 = vadd.f32 %v2760, %v2920
      %v2949 = vadd.f32 %v2761, %v2923
      %v2950 = vadd.f32 %v2762, %v2928
      %v2951 = vadd.f32 %v2763, %v2931
      %s2952 = scalar_lea.vmem %s4, 256
      %v2953 = vld [vmem:[%s2952] sm:$0xf]
      %v2954 = vld [vmem:[%s2952 + $0x4] sm:$0xf]
      %v2955 = vld [vmem:[%s2952 + $0x8] sm:$0xf]
      %v2956 = vld [vmem:[%s2952 + $0xc] sm:$0xf]
      %v2957 = vld [vmem:[%s2952 + $0x10] sm:$0xf]
      %v2958 = vld [vmem:[%s2952 + $0x14] sm:$0xf]
      %v2959 = vld [vmem:[%s2952 + $0x18] sm:$0xf]
      %v2960 = vld [vmem:[%s2952 + $0x1c] sm:$0xf]
      %v2961 = vld [vmem:[%s2952 + $0x20] sm:$0xf]
      %v2962 = vld [vmem:[%s2952 + $0x24] sm:$0xf]
      %v2963 = vld [vmem:[%s2952 + $0x28] sm:$0xf]
      %v2964 = vld [vmem:[%s2952 + $0x2c] sm:$0xf]
      %v2965 = vld [vmem:[%s2952 + $0x30] sm:$0xf]
      %v2966 = vld [vmem:[%s2952 + $0x34] sm:$0xf]
      %v2967 = vld [vmem:[%s2952 + $0x38] sm:$0xf]
      %v2968 = vld [vmem:[%s2952 + $0x3c] sm:$0xf]
      %v2985 = vunpack.c.l.b16 %v2953
      %v2986 = vunpack.c.l.b16 %v2954
      %v2987 = vunpack.c.l.b16 %v2955
      %v2988 = vunpack.c.l.b16 %v2956
      %v2989 = vunpack.c.l.b16 %v2957
      %v2990 = vunpack.c.l.b16 %v2958
      %v2991 = vunpack.c.l.b16 %v2959
      %v2992 = vunpack.c.l.b16 %v2960
      %v2993 = vunpack.c.l.b16 %v2961
      %v2994 = vunpack.c.l.b16 %v2962
      %v2995 = vunpack.c.l.b16 %v2963
      %v2996 = vunpack.c.l.b16 %v2964
      %v2997 = vunpack.c.l.b16 %v2965
      %v2998 = vunpack.c.l.b16 %v2966
      %v2999 = vunpack.c.l.b16 %v2967
      %v3000 = vunpack.c.l.b16 %v2968
      %v3001 = vpack.c.b16 %v2986, %v2985
      %v3002 = vpack.c.b16 %v2988, %v2987
      %v3003 = vpack.c.b16 %v2990, %v2989
      %v3004 = vpack.c.b16 %v2992, %v2991
      %v3005 = vpack.c.b16 %v2994, %v2993
      %v3006 = vpack.c.b16 %v2996, %v2995
      %v3007 = vpack.c.b16 %v2998, %v2997
      %v3008 = vpack.c.b16 %v3000, %v2999
      %3017 = vmatprep.subr.bf16.mxu0 0
      %3018 = vmatpush1.bf16.msra.mxu0 %v3001
      %3019 = vmatprep.subr.bf16.mxu0 0
      %3020 = vmatpush1.bf16.msra.mxu0 %v3002
      %3021 = vmatprep.subr.bf16.mxu0 0
      %3022 = vmatpush1.bf16.msra.mxu0 %v3003
      %3023 = vmatprep.subr.bf16.mxu0 0
      %3024 = vmatpush1.bf16.msra.mxu0 %v3004
      %3025 = vmatprep.subr.bf16.mxu0 0
      %3026 = vmatpush1.bf16.msra.mxu0 %v3005
      %3027 = vmatprep.subr.bf16.mxu0 0
      %3028 = vmatpush1.bf16.msra.mxu0 %v3006
      %3029 = vmatprep.subr.bf16.mxu0 0
      %3030 = vmatpush1.bf16.msra.mxu0 %v3007
      %3031 = vmatprep.subr.bf16.mxu0 0
      %3032 = vmatpush1.bf16.msra.mxu0 %v3008
      %3033 = vmatprep.subr.bf16.mxu0 0
      %3034 = vmatpush1.bf16.msra.mxu0 0
      %3035 = vmatprep.subr.bf16.mxu0 0
      %3036 = vmatpush1.bf16.msra.mxu0 0
      %3037 = vmatprep.subr.bf16.mxu0 0
      %3038 = vmatpush1.bf16.msra.mxu0 0
      %3039 = vmatprep.subr.bf16.mxu0 0
      %3040 = vmatpush1.bf16.msra.mxu0 0
      %3041 = vmatprep.subr.bf16.mxu0 0
      %3042 = vmatpush1.bf16.msra.mxu0 0
      %3043 = vmatprep.subr.bf16.mxu0 0
      %3044 = vmatpush1.bf16.msra.mxu0 0
      %3045 = vmatprep.subr.bf16.mxu0 0
      %3046 = vmatpush1.bf16.msra.mxu0 0
      %3047 = vmatprep.subr.bf16.mxu0 0
      %3048 = vmatpush1.bf16.msra.mxu0 0
      %3049 = vmatprep.mubr.bf16.mxu0 0
      %3050 = vmatmul.mubr.bf16.gmra.mrb[0].mxu0 %v2192
      %v3051 = vpop.f32.mrb[0].mxu0
      %v3052 = vadd.f32 0.0, %v3051
      %v3053 = vpop.f32.mrb[0].mxu0
      %v3054 = vpop.f32.mrb[0].mxu0
      %v3055 = vadd.f32 0.0, %v3054
      %v3056 = vpop.f32.mrb[0].mxu0
      %3057 = vmatprep.mubr.bf16.mxu0 0
      %3058 = vmatmul.mubr.bf16.gmra.mrb[0].mxu0 %v2193
      %v3059 = vpop.f32.mrb[0].mxu0
      %v3060 = vadd.f32 0.0, %v3059
      %v3061 = vpop.f32.mrb[0].mxu0
      %v3062 = vpop.f32.mrb[0].mxu0
      %v3063 = vadd.f32 0.0, %v3062
      %v3064 = vpop.f32.mrb[0].mxu0
      %3065 = vmatprep.mubr.bf16.mxu0 0
      %3066 = vmatmul.mubr.bf16.gmra.mrb[0].mxu0 %v2194
      %v3067 = vpop.f32.mrb[0].mxu0
      %v3068 = vadd.f32 0.0, %v3067
      %v3069 = vpop.f32.mrb[0].mxu0
      %v3070 = vpop.f32.mrb[0].mxu0
      %v3071 = vadd.f32 0.0, %v3070
      %v3072 = vpop.f32.mrb[0].mxu0
      %3073 = vmatprep.mubr.bf16.mxu0 0
      %3074 = vmatmul.mubr.bf16.gmra.mrb[0].mxu0 %v2195
      %v3075 = vpop.f32.mrb[0].mxu0
      %v3076 = vadd.f32 0.0, %v3075
      %v3077 = vpop.f32.mrb[0].mxu0
      %v3078 = vpop.f32.mrb[0].mxu0
      %v3079 = vadd.f32 0.0, %v3078
      %v3080 = vpop.f32.mrb[0].mxu0
      %3081 = vmatprep.mubr.bf16.mxu0 0
      %3082 = vmatmul.mubr.bf16.gmra.mrb[0].mxu0 %v2196
      %v3083 = vpop.f32.mrb[0].mxu0
      %v3084 = vadd.f32 0.0, %v3083
      %v3085 = vpop.f32.mrb[0].mxu0
      %v3086 = vpop.f32.mrb[0].mxu0
      %v3087 = vadd.f32 0.0, %v3086
      %v3088 = vpop.f32.mrb[0].mxu0
      %3089 = vmatprep.mubr.bf16.mxu0 0
      %3090 = vmatmul.mubr.bf16.gmra.mrb[0].mxu0 %v2197
      %v3091 = vpop.f32.mrb[0].mxu0
      %v3092 = vadd.f32 0.0, %v3091
      %v3093 = vpop.f32.mrb[0].mxu0
      %v3094 = vpop.f32.mrb[0].mxu0
      %v3095 = vadd.f32 0.0, %v3094
      %v3096 = vpop.f32.mrb[0].mxu0
      %3097 = vmatprep.mubr.bf16.mxu0 0
      %3098 = vmatmul.mubr.bf16.gmra.mrb[0].mxu0 %v2198
      %v3099 = vpop.f32.mrb[0].mxu0
      %v3100 = vadd.f32 0.0, %v3099
      %v3101 = vpop.f32.mrb[0].mxu0
      %v3102 = vpop.f32.mrb[0].mxu0
      %v3103 = vadd.f32 0.0, %v3102
      %v3104 = vpop.f32.mrb[0].mxu0
      %3105 = vmatprep.mubr.bf16.mxu0 0
      %3106 = vmatmul.mubr.bf16.gmra.mrb[0].mxu0 %v2199
      %v3107 = vpop.f32.mrb[0].mxu0
      %v3108 = vadd.f32 0.0, %v3107
      %v3109 = vpop.f32.mrb[0].mxu0
      %v3110 = vpop.f32.mrb[0].mxu0
      %v3111 = vadd.f32 0.0, %v3110
      %v3112 = vpop.f32.mrb[0].mxu0
      %3113 = vmatprep.mubr.bf16.mxu0 0
      %3114 = vmatmul.mubr.bf16.gmra.mrb[0].mxu0 %v2200
      %v3115 = vpop.f32.mrb[0].mxu0
      %v3116 = vadd.f32 0.0, %v3115
      %v3117 = vpop.f32.mrb[0].mxu0
      %v3118 = vpop.f32.mrb[0].mxu0
      %v3119 = vadd.f32 0.0, %v3118
      %v3120 = vpop.f32.mrb[0].mxu0
      %3121 = vdwg.mxu0
      %v3122 = vadd.f32 %v2934, %v3052
      %v3123 = vadd.f32 %v2935, %v3055
      %v3124 = vadd.f32 %v2936, %v3060
      %v3125 = vadd.f32 %v2937, %v3063
      %v3126 = vadd.f32 %v2938, %v3068
      %v3127 = vadd.f32 %v2939, %v3071
      %v3128 = vadd.f32 %v2940, %v3076
      %v3129 = vadd.f32 %v2941, %v3079
      %v3130 = vadd.f32 %v2942, %v3084
      %v3131 = vadd.f32 %v2943, %v3087
      %v3132 = vadd.f32 %v2944, %v3092
      %v3133 = vadd.f32 %v2945, %v3095
      %v3134 = vadd.f32 %v2946, %v3100
      %v3135 = vadd.f32 %v2947, %v3103
      %v3136 = vadd.f32 %v2948, %v3108
      %v3137 = vadd.f32 %v2949, %v3111
      %v3138 = vadd.f32 %v2950, %v3116
      %v3139 = vadd.f32 %v2951, %v3119
      %s3140 = scalar_lea.vmem %s4, 320
      %v3141 = vld [vmem:[%s3140] sm:$0xf]
      %v3142 = vld [vmem:[%s3140 + $0x4] sm:$0xf]
      %v3143 = vld [vmem:[%s3140 + $0x8] sm:$0xf]
      %v3144 = vld [vmem:[%s3140 + $0xc] sm:$0xf]
      %v3145 = vld [vmem:[%s3140 + $0x10] sm:$0xf]
      %v3146 = vld [vmem:[%s3140 + $0x14] sm:$0xf]
      %v3147 = vld [vmem:[%s3140 + $0x18] sm:$0xf]
      %v3148 = vld [vmem:[%s3140 + $0x1c] sm:$0xf]
      %v3149 = vld [vmem:[%s3140 + $0x20] sm:$0xf]
      %v3150 = vld [vmem:[%s3140 + $0x24] sm:$0xf]
      %v3151 = vld [vmem:[%s3140 + $0x28] sm:$0xf]
      %v3152 = vld [vmem:[%s3140 + $0x2c] sm:$0xf]
      %v3153 = vld [vmem:[%s3140 + $0x30] sm:$0xf]
      %v3154 = vld [vmem:[%s3140 + $0x34] sm:$0xf]
      %v3155 = vld [vmem:[%s3140 + $0x38] sm:$0xf]
      %v3156 = vld [vmem:[%s3140 + $0x3c] sm:$0xf]
      %v3173 = vunpack.c.l.b16 %v3141
      %v3174 = vunpack.c.l.b16 %v3142
      %v3175 = vunpack.c.l.b16 %v3143
      %v3176 = vunpack.c.l.b16 %v3144
      %v3177 = vunpack.c.l.b16 %v3145
      %v3178 = vunpack.c.l.b16 %v3146
      %v3179 = vunpack.c.l.b16 %v3147
      %v3180 = vunpack.c.l.b16 %v3148
      %v3181 = vunpack.c.l.b16 %v3149
      %v3182 = vunpack.c.l.b16 %v3150
      %v3183 = vunpack.c.l.b16 %v3151
      %v3184 = vunpack.c.l.b16 %v3152
      %v3185 = vunpack.c.l.b16 %v3153
      %v3186 = vunpack.c.l.b16 %v3154
      %v3187 = vunpack.c.l.b16 %v3155
      %v3188 = vunpack.c.l.b16 %v3156
      %v3189 = vpack.c.b16 %v3174, %v3173
      %v3190 = vpack.c.b16 %v3176, %v3175
      %v3191 = vpack.c.b16 %v3178, %v3177
      %v3192 = vpack.c.b16 %v3180, %v3179
      %v3193 = vpack.c.b16 %v3182, %v3181
      %v3194 = vpack.c.b16 %v3184, %v3183
      %v3195 = vpack.c.b16 %v3186, %v3185
      %v3196 = vpack.c.b16 %v3188, %v3187
      %3205 = vmatprep.subr.bf16.mxu0 0
      %3206 = vmatpush1.bf16.msra.mxu0 %v3189
      %3207 = vmatprep.subr.bf16.mxu0 0
      %3208 = vmatpush1.bf16.msra.mxu0 %v3190
      %3209 = vmatprep.subr.bf16.mxu0 0
      %3210 = vmatpush1.bf16.msra.mxu0 %v3191
      %3211 = vmatprep.subr.bf16.mxu0 0
      %3212 = vmatpush1.bf16.msra.mxu0 %v3192
      %3213 = vmatprep.subr.bf16.mxu0 0
      %3214 = vmatpush1.bf16.msra.mxu0 %v3193
      %3215 = vmatprep.subr.bf16.mxu0 0
      %3216 = vmatpush1.bf16.msra.mxu0 %v3194
      %3217 = vmatprep.subr.bf16.mxu0 0
      %3218 = vmatpush1.bf16.msra.mxu0 %v3195
      %3219 = vmatprep.subr.bf16.mxu0 0
      %3220 = vmatpush1.bf16.msra.mxu0 %v3196
      %3221 = vmatprep.subr.bf16.mxu0 0
      %3222 = vmatpush1.bf16.msra.mxu0 0
      %3223 = vmatprep.subr.bf16.mxu0 0
      %3224 = vmatpush1.bf16.msra.mxu0 0
      %3225 = vmatprep.subr.bf16.mxu0 0
      %3226 = vmatpush1.bf16.msra.mxu0 0
      %3227 = vmatprep.subr.bf16.mxu0 0
      %3228 = vmatpush1.bf16.msra.mxu0 0
      %3229 = vmatprep.subr.bf16.mxu0 0
      %3230 = vmatpush1.bf16.msra.mxu0 0
      %3231 = vmatprep.subr.bf16.mxu0 0
      %3232 = vmatpush1.bf16.msra.mxu0 0
      %3233 = vmatprep.subr.bf16.mxu0 0
      %3234 = vmatpush1.bf16.msra.mxu0 0
      %3235 = vmatprep.subr.bf16.mxu0 0
      %3236 = vmatpush1.bf16.msra.mxu0 0
      %3237 = vmatprep.mubr.bf16.mxu0 0
      %3238 = vmatmul.mubr.bf16.gmra.mrb[0].mxu0 %v2201
      %v3239 = vpop.f32.mrb[0].mxu0
      %v3240 = vadd.f32 0.0, %v3239
      %v3241 = vpop.f32.mrb[0].mxu0
      %v3242 = vpop.f32.mrb[0].mxu0
      %v3243 = vadd.f32 0.0, %v3242
      %v3244 = vpop.f32.mrb[0].mxu0
      %3245 = vmatprep.mubr.bf16.mxu0 0
      %3246 = vmatmul.mubr.bf16.gmra.mrb[0].mxu0 %v2202
      %v3247 = vpop.f32.mrb[0].mxu0
      %v3248 = vadd.f32 0.0, %v3247
      %v3249 = vpop.f32.mrb[0].mxu0
      %v3250 = vpop.f32.mrb[0].mxu0
      %v3251 = vadd.f32 0.0, %v3250
      %v3252 = vpop.f32.mrb[0].mxu0
      %3253 = vmatprep.mubr.bf16.mxu0 0
      %3254 = vmatmul.mubr.bf16.gmra.mrb[0].mxu0 %v2203
      %v3255 = vpop.f32.mrb[0].mxu0
      %v3256 = vadd.f32 0.0, %v3255
      %v3257 = vpop.f32.mrb[0].mxu0
      %v3258 = vpop.f32.mrb[0].mxu0
      %v3259 = vadd.f32 0.0, %v3258
      %v3260 = vpop.f32.mrb[0].mxu0
      %3261 = vmatprep.mubr.bf16.mxu0 0
      %3262 = vmatmul.mubr.bf16.gmra.mrb[0].mxu0 %v2204
      %v3263 = vpop.f32.mrb[0].mxu0
      %v3264 = vadd.f32 0.0, %v3263
      %v3265 = vpop.f32.mrb[0].mxu0
      %v3266 = vpop.f32.mrb[0].mxu0
      %v3267 = vadd.f32 0.0, %v3266
      %v3268 = vpop.f32.mrb[0].mxu0
      %3269 = vmatprep.mubr.bf16.mxu0 0
      %3270 = vmatmul.mubr.bf16.gmra.mrb[0].mxu0 %v2205
      %v3271 = vpop.f32.mrb[0].mxu0
      %v3272 = vadd.f32 0.0, %v3271
      %v3273 = vpop.f32.mrb[0].mxu0
      %v3274 = vpop.f32.mrb[0].mxu0
      %v3275 = vadd.f32 0.0, %v3274
      %v3276 = vpop.f32.mrb[0].mxu0
      %3277 = vmatprep.mubr.bf16.mxu0 0
      %3278 = vmatmul.mubr.bf16.gmra.mrb[0].mxu0 %v2206
      %v3279 = vpop.f32.mrb[0].mxu0
      %v3280 = vadd.f32 0.0, %v3279
      %v3281 = vpop.f32.mrb[0].mxu0
      %v3282 = vpop.f32.mrb[0].mxu0
      %v3283 = vadd.f32 0.0, %v3282
      %v3284 = vpop.f32.mrb[0].mxu0
      %3285 = vmatprep.mubr.bf16.mxu0 0
      %3286 = vmatmul.mubr.bf16.gmra.mrb[0].mxu0 %v2207
      %v3287 = vpop.f32.mrb[0].mxu0
      %v3288 = vadd.f32 0.0, %v3287
      %v3289 = vpop.f32.mrb[0].mxu0
      %v3290 = vpop.f32.mrb[0].mxu0
      %v3291 = vadd.f32 0.0, %v3290
      %v3292 = vpop.f32.mrb[0].mxu0
      %3293 = vmatprep.mubr.bf16.mxu0 0
      %3294 = vmatmul.mubr.bf16.gmra.mrb[0].mxu0 %v2208
      %v3295 = vpop.f32.mrb[0].mxu0
      %v3296 = vadd.f32 0.0, %v3295
      %v3297 = vpop.f32.mrb[0].mxu0
      %v3298 = vpop.f32.mrb[0].mxu0
      %v3299 = vadd.f32 0.0, %v3298
      %v3300 = vpop.f32.mrb[0].mxu0
      %3301 = vmatprep.mubr.bf16.mxu0 0
      %3302 = vmatmul.mubr.bf16.gmra.mrb[0].mxu0 %v2209
      %v3303 = vpop.f32.mrb[0].mxu0
      %v3304 = vadd.f32 0.0, %v3303
      %v3305 = vpop.f32.mrb[0].mxu0
      %v3306 = vpop.f32.mrb[0].mxu0
      %v3307 = vadd.f32 0.0, %v3306
      %v3308 = vpop.f32.mrb[0].mxu0
      %3309 = vdwg.mxu0
      %v3310 = vadd.f32 %v3122, %v3240
      %v3311 = vadd.f32 %v3123, %v3243
      %v3312 = vadd.f32 %v3124, %v3248
      %v3313 = vadd.f32 %v3125, %v3251
      %v3314 = vadd.f32 %v3126, %v3256
      %v3315 = vadd.f32 %v3127, %v3259
      %v3316 = vadd.f32 %v3128, %v3264
      %v3317 = vadd.f32 %v3129, %v3267
      %v3318 = vadd.f32 %v3130, %v3272
      %v3319 = vadd.f32 %v3131, %v3275
      %v3320 = vadd.f32 %v3132, %v3280
      %v3321 = vadd.f32 %v3133, %v3283
      %v3322 = vadd.f32 %v3134, %v3288
      %v3323 = vadd.f32 %v3135, %v3291
      %v3324 = vadd.f32 %v3136, %v3296
      %v3325 = vadd.f32 %v3137, %v3299
      %v3326 = vadd.f32 %v3138, %v3304
      %v3327 = vadd.f32 %v3139, %v3307
      %s3328 = scalar_lea.vmem %s4, 384
      %v3329 = vld [vmem:[%s3328] sm:$0xf]
      %v3330 = vld [vmem:[%s3328 + $0x4] sm:$0xf]
      %v3331 = vld [vmem:[%s3328 + $0x8] sm:$0xf]
      %v3332 = vld [vmem:[%s3328 + $0xc] sm:$0xf]
      %v3333 = vld [vmem:[%s3328 + $0x10] sm:$0xf]
      %v3334 = vld [vmem:[%s3328 + $0x14] sm:$0xf]
      %v3335 = vld [vmem:[%s3328 + $0x18] sm:$0xf]
      %v3336 = vld [vmem:[%s3328 + $0x1c] sm:$0xf]
      %v3337 = vld [vmem:[%s3328 + $0x20] sm:$0xf]
      %v3338 = vld [vmem:[%s3328 + $0x24] sm:$0xf]
      %v3339 = vld [vmem:[%s3328 + $0x28] sm:$0xf]
      %v3340 = vld [vmem:[%s3328 + $0x2c] sm:$0xf]
      %v3341 = vld [vmem:[%s3328 + $0x30] sm:$0xf]
      %v3342 = vld [vmem:[%s3328 + $0x34] sm:$0xf]
      %v3343 = vld [vmem:[%s3328 + $0x38] sm:$0xf]
      %v3344 = vld [vmem:[%s3328 + $0x3c] sm:$0xf]
      %v3361 = vunpack.c.l.b16 %v3329
      %v3362 = vunpack.c.l.b16 %v3330
      %v3363 = vunpack.c.l.b16 %v3331
      %v3364 = vunpack.c.l.b16 %v3332
      %v3365 = vunpack.c.l.b16 %v3333
      %v3366 = vunpack.c.l.b16 %v3334
      %v3367 = vunpack.c.l.b16 %v3335
      %v3368 = vunpack.c.l.b16 %v3336
      %v3369 = vunpack.c.l.b16 %v3337
      %v3370 = vunpack.c.l.b16 %v3338
      %v3371 = vunpack.c.l.b16 %v3339
      %v3372 = vunpack.c.l.b16 %v3340
      %v3373 = vunpack.c.l.b16 %v3341
      %v3374 = vunpack.c.l.b16 %v3342
      %v3375 = vunpack.c.l.b16 %v3343
      %v3376 = vunpack.c.l.b16 %v3344
      %v3377 = vpack.c.b16 %v3362, %v3361
      %v3378 = vpack.c.b16 %v3364, %v3363
      %v3379 = vpack.c.b16 %v3366, %v3365
      %v3380 = vpack.c.b16 %v3368, %v3367
      %v3381 = vpack.c.b16 %v3370, %v3369
      %v3382 = vpack.c.b16 %v3372, %v3371
      %v3383 = vpack.c.b16 %v3374, %v3373
      %v3384 = vpack.c.b16 %v3376, %v3375
      %3393 = vmatprep.subr.bf16.mxu0 0
      %3394 = vmatpush1.bf16.msra.mxu0 %v3377
      %3395 = vmatprep.subr.bf16.mxu0 0
      %3396 = vmatpush1.bf16.msra.mxu0 %v3378
      %3397 = vmatprep.subr.bf16.mxu0 0
      %3398 = vmatpush1.bf16.msra.mxu0 %v3379
      %3399 = vmatprep.subr.bf16.mxu0 0
      %3400 = vmatpush1.bf16.msra.mxu0 %v3380
      %3401 = vmatprep.subr.bf16.mxu0 0
      %3402 = vmatpush1.bf16.msra.mxu0 %v3381
      %3403 = vmatprep.subr.bf16.mxu0 0
      %3404 = vmatpush1.bf16.msra.mxu0 %v3382
      %3405 = vmatprep.subr.bf16.mxu0 0
      %3406 = vmatpush1.bf16.msra.mxu0 %v3383
      %3407 = vmatprep.subr.bf16.mxu0 0
      %3408 = vmatpush1.bf16.msra.mxu0 %v3384
      %3409 = vmatprep.subr.bf16.mxu0 0
      %3410 = vmatpush1.bf16.msra.mxu0 0
      %3411 = vmatprep.subr.bf16.mxu0 0
      %3412 = vmatpush1.bf16.msra.mxu0 0
      %3413 = vmatprep.subr.bf16.mxu0 0
      %3414 = vmatpush1.bf16.msra.mxu0 0
      %3415 = vmatprep.subr.bf16.mxu0 0
      %3416 = vmatpush1.bf16.msra.mxu0 0
      %3417 = vmatprep.subr.bf16.mxu0 0
      %3418 = vmatpush1.bf16.msra.mxu0 0
      %3419 = vmatprep.subr.bf16.mxu0 0
      %3420 = vmatpush1.bf16.msra.mxu0 0
      %3421 = vmatprep.subr.bf16.mxu0 0
      %3422 = vmatpush1.bf16.msra.mxu0 0
      %3423 = vmatprep.subr.bf16.mxu0 0
      %3424 = vmatpush1.bf16.msra.mxu0 0
      %3425 = vmatprep.mubr.bf16.mxu0 0
      %3426 = vmatmul.mubr.bf16.gmra.mrb[0].mxu0 %v2210
      %v3427 = vpop.f32.mrb[0].mxu0
      %v3428 = vadd.f32 0.0, %v3427
      %v3429 = vpop.f32.mrb[0].mxu0
      %v3430 = vpop.f32.mrb[0].mxu0
      %v3431 = vadd.f32 0.0, %v3430
      %v3432 = vpop.f32.mrb[0].mxu0
      %3433 = vmatprep.mubr.bf16.mxu0 0
      %3434 = vmatmul.mubr.bf16.gmra.mrb[0].mxu0 %v2211
      %v3435 = vpop.f32.mrb[0].mxu0
      %v3436 = vadd.f32 0.0, %v3435
      %v3437 = vpop.f32.mrb[0].mxu0
      %v3438 = vpop.f32.mrb[0].mxu0
      %v3439 = vadd.f32 0.0, %v3438
      %v3440 = vpop.f32.mrb[0].mxu0
      %3441 = vmatprep.mubr.bf16.mxu0 0
      %3442 = vmatmul.mubr.bf16.gmra.mrb[0].mxu0 %v2212
      %v3443 = vpop.f32.mrb[0].mxu0
      %v3444 = vadd.f32 0.0, %v3443
      %v3445 = vpop.f32.mrb[0].mxu0
      %v3446 = vpop.f32.mrb[0].mxu0
      %v3447 = vadd.f32 0.0, %v3446
      %v3448 = vpop.f32.mrb[0].mxu0
      %3449 = vmatprep.mubr.bf16.mxu0 0
      %3450 = vmatmul.mubr.bf16.gmra.mrb[0].mxu0 %v2213
      %v3451 = vpop.f32.mrb[0].mxu0
      %v3452 = vadd.f32 0.0, %v3451
      %v3453 = vpop.f32.mrb[0].mxu0
      %v3454 = vpop.f32.mrb[0].mxu0
      %v3455 = vadd.f32 0.0, %v3454
      %v3456 = vpop.f32.mrb[0].mxu0
      %3457 = vmatprep.mubr.bf16.mxu0 0
      %3458 = vmatmul.mubr.bf16.gmra.mrb[0].mxu0 %v2214
      %v3459 = vpop.f32.mrb[0].mxu0
      %v3460 = vadd.f32 0.0, %v3459
      %v3461 = vpop.f32.mrb[0].mxu0
      %v3462 = vpop.f32.mrb[0].mxu0
      %v3463 = vadd.f32 0.0, %v3462
      %v3464 = vpop.f32.mrb[0].mxu0
      %3465 = vmatprep.mubr.bf16.mxu0 0
      %3466 = vmatmul.mubr.bf16.gmra.mrb[0].mxu0 %v2215
      %v3467 = vpop.f32.mrb[0].mxu0
      %v3468 = vadd.f32 0.0, %v3467
      %v3469 = vpop.f32.mrb[0].mxu0
      %v3470 = vpop.f32.mrb[0].mxu0
      %v3471 = vadd.f32 0.0, %v3470
      %v3472 = vpop.f32.mrb[0].mxu0
      %3473 = vmatprep.mubr.bf16.mxu0 0
      %3474 = vmatmul.mubr.bf16.gmra.mrb[0].mxu0 %v2216
      %v3475 = vpop.f32.mrb[0].mxu0
      %v3476 = vadd.f32 0.0, %v3475
      %v3477 = vpop.f32.mrb[0].mxu0
      %v3478 = vpop.f32.mrb[0].mxu0
      %v3479 = vadd.f32 0.0, %v3478
      %v3480 = vpop.f32.mrb[0].mxu0
      %3481 = vmatprep.mubr.bf16.mxu0 0
      %3482 = vmatmul.mubr.bf16.gmra.mrb[0].mxu0 %v2217
      %v3483 = vpop.f32.mrb[0].mxu0
      %v3484 = vadd.f32 0.0, %v3483
      %v3485 = vpop.f32.mrb[0].mxu0
      %v3486 = vpop.f32.mrb[0].mxu0
      %v3487 = vadd.f32 0.0, %v3486
      %v3488 = vpop.f32.mrb[0].mxu0
      %3489 = vmatprep.mubr.bf16.mxu0 0
      %3490 = vmatmul.mubr.bf16.gmra.mrb[0].mxu0 %v2218
      %v3491 = vpop.f32.mrb[0].mxu0
      %v3492 = vadd.f32 0.0, %v3491
      %v3493 = vpop.f32.mrb[0].mxu0
      %v3494 = vpop.f32.mrb[0].mxu0
      %v3495 = vadd.f32 0.0, %v3494
      %v3496 = vpop.f32.mrb[0].mxu0
      %3497 = vdwg.mxu0
      %v3498 = vadd.f32 %v3310, %v3428
      %v3499 = vadd.f32 %v3311, %v3431
      %v3500 = vadd.f32 %v3312, %v3436
      %v3501 = vadd.f32 %v3313, %v3439
      %v3502 = vadd.f32 %v3314, %v3444
      %v3503 = vadd.f32 %v3315, %v3447
      %v3504 = vadd.f32 %v3316, %v3452
      %v3505 = vadd.f32 %v3317, %v3455
      %v3506 = vadd.f32 %v3318, %v3460
      %v3507 = vadd.f32 %v3319, %v3463
      %v3508 = vadd.f32 %v3320, %v3468
      %v3509 = vadd.f32 %v3321, %v3471
      %v3510 = vadd.f32 %v3322, %v3476
      %v3511 = vadd.f32 %v3323, %v3479
      %v3512 = vadd.f32 %v3324, %v3484
      %v3513 = vadd.f32 %v3325, %v3487
      %v3514 = vadd.f32 %v3326, %v3492
      %v3515 = vadd.f32 %v3327, %v3495
      %s3516 = scalar_lea.vmem %s4, 448
      %v3517 = vld [vmem:[%s3516] sm:$0xf]
      %v3518 = vld [vmem:[%s3516 + $0x4] sm:$0xf]
      %v3519 = vld [vmem:[%s3516 + $0x8] sm:$0xf]
      %v3520 = vld [vmem:[%s3516 + $0xc] sm:$0xf]
      %v3521 = vld [vmem:[%s3516 + $0x10] sm:$0xf]
      %v3522 = vld [vmem:[%s3516 + $0x14] sm:$0xf]
      %v3523 = vld [vmem:[%s3516 + $0x18] sm:$0xf]
      %v3524 = vld [vmem:[%s3516 + $0x1c] sm:$0xf]
      %v3525 = vld [vmem:[%s3516 + $0x20] sm:$0xf]
      %v3526 = vld [vmem:[%s3516 + $0x24] sm:$0xf]
      %v3527 = vld [vmem:[%s3516 + $0x28] sm:$0xf]
      %v3528 = vld [vmem:[%s3516 + $0x2c] sm:$0xf]
      %v3529 = vld [vmem:[%s3516 + $0x30] sm:$0xf]
      %v3530 = vld [vmem:[%s3516 + $0x34] sm:$0xf]
      %v3531 = vld [vmem:[%s3516 + $0x38] sm:$0xf]
      %v3532 = vld [vmem:[%s3516 + $0x3c] sm:$0xf]
      %v3549 = vunpack.c.l.b16 %v3517
      %v3550 = vunpack.c.l.b16 %v3518
      %v3551 = vunpack.c.l.b16 %v3519
      %v3552 = vunpack.c.l.b16 %v3520
      %v3553 = vunpack.c.l.b16 %v3521
      %v3554 = vunpack.c.l.b16 %v3522
      %v3555 = vunpack.c.l.b16 %v3523
      %v3556 = vunpack.c.l.b16 %v3524
      %v3557 = vunpack.c.l.b16 %v3525
      %v3558 = vunpack.c.l.b16 %v3526
      %v3559 = vunpack.c.l.b16 %v3527
      %v3560 = vunpack.c.l.b16 %v3528
      %v3561 = vunpack.c.l.b16 %v3529
      %v3562 = vunpack.c.l.b16 %v3530
      %v3563 = vunpack.c.l.b16 %v3531
      %v3564 = vunpack.c.l.b16 %v3532
      %v3565 = vpack.c.b16 %v3550, %v3549
      %v3566 = vpack.c.b16 %v3552, %v3551
      %v3567 = vpack.c.b16 %v3554, %v3553
      %v3568 = vpack.c.b16 %v3556, %v3555
      %v3569 = vpack.c.b16 %v3558, %v3557
      %v3570 = vpack.c.b16 %v3560, %v3559
      %v3571 = vpack.c.b16 %v3562, %v3561
      %v3572 = vpack.c.b16 %v3564, %v3563
      %3581 = vmatprep.subr.bf16.mxu0 0
      %3582 = vmatpush1.bf16.msra.mxu0 %v3565
      %3583 = vmatprep.subr.bf16.mxu0 0
      %3584 = vmatpush1.bf16.msra.mxu0 %v3566
      %3585 = vmatprep.subr.bf16.mxu0 0
      %3586 = vmatpush1.bf16.msra.mxu0 %v3567
      %3587 = vmatprep.subr.bf16.mxu0 0
      %3588 = vmatpush1.bf16.msra.mxu0 %v3568
      %3589 = vmatprep.subr.bf16.mxu0 0
      %3590 = vmatpush1.bf16.msra.mxu0 %v3569
      %3591 = vmatprep.subr.bf16.mxu0 0
      %3592 = vmatpush1.bf16.msra.mxu0 %v3570
      %3593 = vmatprep.subr.bf16.mxu0 0
      %3594 = vmatpush1.bf16.msra.mxu0 %v3571
      %3595 = vmatprep.subr.bf16.mxu0 0
      %3596 = vmatpush1.bf16.msra.mxu0 %v3572
      %3597 = vmatprep.subr.bf16.mxu0 0
      %3598 = vmatpush1.bf16.msra.mxu0 0
      %3599 = vmatprep.subr.bf16.mxu0 0
      %3600 = vmatpush1.bf16.msra.mxu0 0
      %3601 = vmatprep.subr.bf16.mxu0 0
      %3602 = vmatpush1.bf16.msra.mxu0 0
      %3603 = vmatprep.subr.bf16.mxu0 0
      %3604 = vmatpush1.bf16.msra.mxu0 0
      %3605 = vmatprep.subr.bf16.mxu0 0
      %3606 = vmatpush1.bf16.msra.mxu0 0
      %3607 = vmatprep.subr.bf16.mxu0 0
      %3608 = vmatpush1.bf16.msra.mxu0 0
      %3609 = vmatprep.subr.bf16.mxu0 0
      %3610 = vmatpush1.bf16.msra.mxu0 0
      %3611 = vmatprep.subr.bf16.mxu0 0
      %3612 = vmatpush1.bf16.msra.mxu0 0
      %3613 = vmatprep.mubr.bf16.mxu0 0
      %3614 = vmatmul.mubr.bf16.gmra.mrb[0].mxu0 %v2219
      %v3615 = vpop.f32.mrb[0].mxu0
      %v3616 = vadd.f32 0.0, %v3615
      %v3617 = vpop.f32.mrb[0].mxu0
      %v3618 = vpop.f32.mrb[0].mxu0
      %v3619 = vadd.f32 0.0, %v3618
      %v3620 = vpop.f32.mrb[0].mxu0
      %3621 = vmatprep.mubr.bf16.mxu0 0
      %3622 = vmatmul.mubr.bf16.gmra.mrb[0].mxu0 %v2220
      %v3623 = vpop.f32.mrb[0].mxu0
      %v3624 = vadd.f32 0.0, %v3623
      %v3625 = vpop.f32.mrb[0].mxu0
      %v3626 = vpop.f32.mrb[0].mxu0
      %v3627 = vadd.f32 0.0, %v3626
      %v3628 = vpop.f32.mrb[0].mxu0
      %3629 = vmatprep.mubr.bf16.mxu0 0
      %3630 = vmatmul.mubr.bf16.gmra.mrb[0].mxu0 %v2221
      %v3631 = vpop.f32.mrb[0].mxu0
      %v3632 = vadd.f32 0.0, %v3631
      %v3633 = vpop.f32.mrb[0].mxu0
      %v3634 = vpop.f32.mrb[0].mxu0
      %v3635 = vadd.f32 0.0, %v3634
      %v3636 = vpop.f32.mrb[0].mxu0
      %3637 = vmatprep.mubr.bf16.mxu0 0
      %3638 = vmatmul.mubr.bf16.gmra.mrb[0].mxu0 %v2222
      %v3639 = vpop.f32.mrb[0].mxu0
      %v3640 = vadd.f32 0.0, %v3639
      %v3641 = vpop.f32.mrb[0].mxu0
      %v3642 = vpop.f32.mrb[0].mxu0
      %v3643 = vadd.f32 0.0, %v3642
      %v3644 = vpop.f32.mrb[0].mxu0
      %3645 = vmatprep.mubr.bf16.mxu0 0
      %3646 = vmatmul.mubr.bf16.gmra.mrb[0].mxu0 %v2223
      %v3647 = vpop.f32.mrb[0].mxu0
      %v3648 = vadd.f32 0.0, %v3647
      %v3649 = vpop.f32.mrb[0].mxu0
      %v3650 = vpop.f32.mrb[0].mxu0
      %v3651 = vadd.f32 0.0, %v3650
      %v3652 = vpop.f32.mrb[0].mxu0
      %3653 = vmatprep.mubr.bf16.mxu0 0
      %3654 = vmatmul.mubr.bf16.gmra.mrb[0].mxu0 %v2224
      %v3655 = vpop.f32.mrb[0].mxu0
      %v3656 = vadd.f32 0.0, %v3655
      %v3657 = vpop.f32.mrb[0].mxu0
      %v3658 = vpop.f32.mrb[0].mxu0
      %v3659 = vadd.f32 0.0, %v3658
      %v3660 = vpop.f32.mrb[0].mxu0
      %3661 = vmatprep.mubr.bf16.mxu0 0
      %3662 = vmatmul.mubr.bf16.gmra.mrb[0].mxu0 %v2225
      %v3663 = vpop.f32.mrb[0].mxu0
      %v3664 = vadd.f32 0.0, %v3663
      %v3665 = vpop.f32.mrb[0].mxu0
      %v3666 = vpop.f32.mrb[0].mxu0
      %v3667 = vadd.f32 0.0, %v3666
      %v3668 = vpop.f32.mrb[0].mxu0
      %3669 = vmatprep.mubr.bf16.mxu0 0
      %3670 = vmatmul.mubr.bf16.gmra.mrb[0].mxu0 %v2226
      %v3671 = vpop.f32.mrb[0].mxu0
      %v3672 = vadd.f32 0.0, %v3671
      %v3673 = vpop.f32.mrb[0].mxu0
      %v3674 = vpop.f32.mrb[0].mxu0
      %v3675 = vadd.f32 0.0, %v3674
      %v3676 = vpop.f32.mrb[0].mxu0
      %3677 = vmatprep.mubr.bf16.mxu0 0
      %3678 = vmatmul.mubr.bf16.gmra.mrb[0].mxu0 %v2227
      %v3679 = vpop.f32.mrb[0].mxu0
      %v3680 = vadd.f32 0.0, %v3679
      %v3681 = vpop.f32.mrb[0].mxu0
      %v3682 = vpop.f32.mrb[0].mxu0
      %v3683 = vadd.f32 0.0, %v3682
      %v3684 = vpop.f32.mrb[0].mxu0
      %3685 = vdwg.mxu0
      %v3686 = vadd.f32 %v3498, %v3616
      %v3687 = vadd.f32 %v3499, %v3619
      %v3688 = vadd.f32 %v3500, %v3624
      %v3689 = vadd.f32 %v3501, %v3627
      %v3690 = vadd.f32 %v3502, %v3632
      %v3691 = vadd.f32 %v3503, %v3635
      %v3692 = vadd.f32 %v3504, %v3640
      %v3693 = vadd.f32 %v3505, %v3643
      %v3694 = vadd.f32 %v3506, %v3648
      %v3695 = vadd.f32 %v3507, %v3651
      %v3696 = vadd.f32 %v3508, %v3656
      %v3697 = vadd.f32 %v3509, %v3659
      %v3698 = vadd.f32 %v3510, %v3664
      %v3699 = vadd.f32 %v3511, %v3667
      %v3700 = vadd.f32 %v3512, %v3672
      %v3701 = vadd.f32 %v3513, %v3675
      %v3702 = vadd.f32 %v3514, %v3680
      %v3703 = vadd.f32 %v3515, %v3683
      %s3704 = scalar_lea.vmem %s4, 512
      %v3705 = vld [vmem:[%s3704] sm:$0xf]
      %v3706 = vld [vmem:[%s3704 + $0x4] sm:$0xf]
      %v3707 = vld [vmem:[%s3704 + $0x8] sm:$0xf]
      %v3708 = vld [vmem:[%s3704 + $0xc] sm:$0xf]
      %v3709 = vld [vmem:[%s3704 + $0x10] sm:$0xf]
      %v3710 = vld [vmem:[%s3704 + $0x14] sm:$0xf]
      %v3711 = vld [vmem:[%s3704 + $0x18] sm:$0xf]
      %v3712 = vld [vmem:[%s3704 + $0x1c] sm:$0xf]
      %v3713 = vld [vmem:[%s3704 + $0x20] sm:$0xf]
      %v3714 = vld [vmem:[%s3704 + $0x24] sm:$0xf]
      %v3715 = vld [vmem:[%s3704 + $0x28] sm:$0xf]
      %v3716 = vld [vmem:[%s3704 + $0x2c] sm:$0xf]
      %v3717 = vld [vmem:[%s3704 + $0x30] sm:$0xf]
      %v3718 = vld [vmem:[%s3704 + $0x34] sm:$0xf]
      %v3719 = vld [vmem:[%s3704 + $0x38] sm:$0xf]
      %v3720 = vld [vmem:[%s3704 + $0x3c] sm:$0xf]
      %v3737 = vunpack.c.l.b16 %v3705
      %v3738 = vunpack.c.l.b16 %v3706
      %v3739 = vunpack.c.l.b16 %v3707
      %v3740 = vunpack.c.l.b16 %v3708
      %v3741 = vunpack.c.l.b16 %v3709
      %v3742 = vunpack.c.l.b16 %v3710
      %v3743 = vunpack.c.l.b16 %v3711
      %v3744 = vunpack.c.l.b16 %v3712
      %v3745 = vunpack.c.l.b16 %v3713
      %v3746 = vunpack.c.l.b16 %v3714
      %v3747 = vunpack.c.l.b16 %v3715
      %v3748 = vunpack.c.l.b16 %v3716
      %v3749 = vunpack.c.l.b16 %v3717
      %v3750 = vunpack.c.l.b16 %v3718
      %v3751 = vunpack.c.l.b16 %v3719
      %v3752 = vunpack.c.l.b16 %v3720
      %v3753 = vpack.c.b16 %v3738, %v3737
      %v3754 = vpack.c.b16 %v3740, %v3739
      %v3755 = vpack.c.b16 %v3742, %v3741
      %v3756 = vpack.c.b16 %v3744, %v3743
      %v3757 = vpack.c.b16 %v3746, %v3745
      %v3758 = vpack.c.b16 %v3748, %v3747
      %v3759 = vpack.c.b16 %v3750, %v3749
      %v3760 = vpack.c.b16 %v3752, %v3751
      %3769 = vmatprep.subr.bf16.mxu0 0
      %3770 = vmatpush1.bf16.msra.mxu0 %v3753
      %3771 = vmatprep.subr.bf16.mxu0 0
      %3772 = vmatpush1.bf16.msra.mxu0 %v3754
      %3773 = vmatprep.subr.bf16.mxu0 0
      %3774 = vmatpush1.bf16.msra.mxu0 %v3755
      %3775 = vmatprep.subr.bf16.mxu0 0
      %3776 = vmatpush1.bf16.msra.mxu0 %v3756
      %3777 = vmatprep.subr.bf16.mxu0 0
      %3778 = vmatpush1.bf16.msra.mxu0 %v3757
      %3779 = vmatprep.subr.bf16.mxu0 0
      %3780 = vmatpush1.bf16.msra.mxu0 %v3758
      %3781 = vmatprep.subr.bf16.mxu0 0
      %3782 = vmatpush1.bf16.msra.mxu0 %v3759
      %3783 = vmatprep.subr.bf16.mxu0 0
      %3784 = vmatpush1.bf16.msra.mxu0 %v3760
      %3785 = vmatprep.subr.bf16.mxu0 0
      %3786 = vmatpush1.bf16.msra.mxu0 0
      %3787 = vmatprep.subr.bf16.mxu0 0
      %3788 = vmatpush1.bf16.msra.mxu0 0
      %3789 = vmatprep.subr.bf16.mxu0 0
      %3790 = vmatpush1.bf16.msra.mxu0 0
      %3791 = vmatprep.subr.bf16.mxu0 0
      %3792 = vmatpush1.bf16.msra.mxu0 0
      %3793 = vmatprep.subr.bf16.mxu0 0
      %3794 = vmatpush1.bf16.msra.mxu0 0
      %3795 = vmatprep.subr.bf16.mxu0 0
      %3796 = vmatpush1.bf16.msra.mxu0 0
      %3797 = vmatprep.subr.bf16.mxu0 0
      %3798 = vmatpush1.bf16.msra.mxu0 0
      %3799 = vmatprep.subr.bf16.mxu0 0
      %3800 = vmatpush1.bf16.msra.mxu0 0
      %3801 = vmatprep.mubr.bf16.mxu0 0
      %3802 = vmatmul.mubr.bf16.gmra.mrb[0].mxu0 %v2228
      %v3803 = vpop.f32.mrb[0].mxu0
      %v3804 = vadd.f32 0.0, %v3803
      %v3805 = vpop.f32.mrb[0].mxu0
      %v3806 = vpop.f32.mrb[0].mxu0
      %v3807 = vadd.f32 0.0, %v3806
      %v3808 = vpop.f32.mrb[0].mxu0
      %3809 = vmatprep.mubr.bf16.mxu0 0
      %3810 = vmatmul.mubr.bf16.gmra.mrb[0].mxu0 %v2229
      %v3811 = vpop.f32.mrb[0].mxu0
      %v3812 = vadd.f32 0.0, %v3811
      %v3813 = vpop.f32.mrb[0].mxu0
      %v3814 = vpop.f32.mrb[0].mxu0
      %v3815 = vadd.f32 0.0, %v3814
      %v3816 = vpop.f32.mrb[0].mxu0
      %3817 = vmatprep.mubr.bf16.mxu0 0
      %3818 = vmatmul.mubr.bf16.gmra.mrb[0].mxu0 %v2230
      %v3819 = vpop.f32.mrb[0].mxu0
      %v3820 = vadd.f32 0.0, %v3819
      %v3821 = vpop.f32.mrb[0].mxu0
      %v3822 = vpop.f32.mrb[0].mxu0
      %v3823 = vadd.f32 0.0, %v3822
      %v3824 = vpop.f32.mrb[0].mxu0
      %3825 = vmatprep.mubr.bf16.mxu0 0
      %3826 = vmatmul.mubr.bf16.gmra.mrb[0].mxu0 %v2231
      %v3827 = vpop.f32.mrb[0].mxu0
      %v3828 = vadd.f32 0.0, %v3827
      %v3829 = vpop.f32.mrb[0].mxu0
      %v3830 = vpop.f32.mrb[0].mxu0
      %v3831 = vadd.f32 0.0, %v3830
      %v3832 = vpop.f32.mrb[0].mxu0
      %3833 = vmatprep.mubr.bf16.mxu0 0
      %3834 = vmatmul.mubr.bf16.gmra.mrb[0].mxu0 %v2232
      %v3835 = vpop.f32.mrb[0].mxu0
      %v3836 = vadd.f32 0.0, %v3835
      %v3837 = vpop.f32.mrb[0].mxu0
      %v3838 = vpop.f32.mrb[0].mxu0
      %v3839 = vadd.f32 0.0, %v3838
      %v3840 = vpop.f32.mrb[0].mxu0
      %3841 = vmatprep.mubr.bf16.mxu0 0
      %3842 = vmatmul.mubr.bf16.gmra.mrb[0].mxu0 %v2233
      %v3843 = vpop.f32.mrb[0].mxu0
      %v3844 = vadd.f32 0.0, %v3843
      %v3845 = vpop.f32.mrb[0].mxu0
      %v3846 = vpop.f32.mrb[0].mxu0
      %v3847 = vadd.f32 0.0, %v3846
      %v3848 = vpop.f32.mrb[0].mxu0
      %3849 = vmatprep.mubr.bf16.mxu0 0
      %3850 = vmatmul.mubr.bf16.gmra.mrb[0].mxu0 %v2234
      %v3851 = vpop.f32.mrb[0].mxu0
      %v3852 = vadd.f32 0.0, %v3851
      %v3853 = vpop.f32.mrb[0].mxu0
      %v3854 = vpop.f32.mrb[0].mxu0
      %v3855 = vadd.f32 0.0, %v3854
      %v3856 = vpop.f32.mrb[0].mxu0
      %3857 = vmatprep.mubr.bf16.mxu0 0
      %3858 = vmatmul.mubr.bf16.gmra.mrb[0].mxu0 %v2235
      %v3859 = vpop.f32.mrb[0].mxu0
      %v3860 = vadd.f32 0.0, %v3859
      %v3861 = vpop.f32.mrb[0].mxu0
      %v3862 = vpop.f32.mrb[0].mxu0
      %v3863 = vadd.f32 0.0, %v3862
      %v3864 = vpop.f32.mrb[0].mxu0
      %3865 = vmatprep.mubr.bf16.mxu0 0
      %3866 = vmatmul.mubr.bf16.gmra.mrb[0].mxu0 %v2236
      %v3867 = vpop.f32.mrb[0].mxu0
      %v3868 = vadd.f32 0.0, %v3867
      %v3869 = vpop.f32.mrb[0].mxu0
      %v3870 = vpop.f32.mrb[0].mxu0
      %v3871 = vadd.f32 0.0, %v3870
      %v3872 = vpop.f32.mrb[0].mxu0
      %3873 = vdwg.mxu0
      %v3874 = vadd.f32 %v3686, %v3804
      %v3875 = vadd.f32 %v3687, %v3807
      %v3876 = vadd.f32 %v3688, %v3812
      %v3877 = vadd.f32 %v3689, %v3815
      %v3878 = vadd.f32 %v3690, %v3820
      %v3879 = vadd.f32 %v3691, %v3823
      %v3880 = vadd.f32 %v3692, %v3828
      %v3881 = vadd.f32 %v3693, %v3831
      %v3882 = vadd.f32 %v3694, %v3836
      %v3883 = vadd.f32 %v3695, %v3839
      %v3884 = vadd.f32 %v3696, %v3844
      %v3885 = vadd.f32 %v3697, %v3847
      %v3886 = vadd.f32 %v3698, %v3852
      %v3887 = vadd.f32 %v3699, %v3855
      %v3888 = vadd.f32 %v3700, %v3860
      %v3889 = vadd.f32 %v3701, %v3863
      %v3890 = vadd.f32 %v3702, %v3868
      %v3891 = vadd.f32 %v3703, %v3871
      %v3892 = vld [vmem:[%s5] sm:$0x1]
      %v3894 = vlaneseq
      %v3895 = vshrl.u32 %v3894, 7
      %v3896 = vsub.s32 0, %v3895
      %v3897 = vrot.slane %v3892, %v3896
      %v3899 = vadd.f32 %v3874, %v3897
      %v3900 = vadd.f32 %v3875, %v3897
      %v3901 = vadd.f32 %v3876, %v3897
      %v3902 = vadd.f32 %v3877, %v3897
      %v3903 = vadd.f32 %v3878, %v3897
      %v3904 = vadd.f32 %v3879, %v3897
      %v3905 = vadd.f32 %v3880, %v3897
      %v3906 = vadd.f32 %v3881, %v3897
      %v3907 = vadd.f32 %v3882, %v3897
      %v3908 = vadd.f32 %v3883, %v3897
      %v3909 = vadd.f32 %v3884, %v3897
      %v3910 = vadd.f32 %v3885, %v3897
      %v3911 = vadd.f32 %v3886, %v3897
      %v3912 = vadd.f32 %v3887, %v3897
      %v3913 = vadd.f32 %v3888, %v3897
      %v3914 = vadd.f32 %v3889, %v3897
      %v3915 = vadd.f32 %v3890, %v3897
      %v3916 = vadd.f32 %v3891, %v3897
      %v3917 = vmax.f32 %v3899, 0.0
      %v3918 = vmax.f32 %v3900, 0.0
      %v3919 = vmax.f32 %v3901, 0.0
      %v3920 = vmax.f32 %v3902, 0.0
      %v3921 = vmax.f32 %v3903, 0.0
      %v3922 = vmax.f32 %v3904, 0.0
      %v3923 = vmax.f32 %v3905, 0.0
      %v3924 = vmax.f32 %v3906, 0.0
      %v3925 = vmax.f32 %v3907, 0.0
      %v3926 = vmax.f32 %v3908, 0.0
      %v3927 = vmax.f32 %v3909, 0.0
      %v3928 = vmax.f32 %v3910, 0.0
      %v3929 = vmax.f32 %v3911, 0.0
      %v3930 = vmax.f32 %v3912, 0.0
      %v3931 = vmax.f32 %v3913, 0.0
      %v3932 = vmax.f32 %v3914, 0.0
      %v3933 = vmax.f32 %v3915, 0.0
      %v3934 = vmax.f32 %v3916, 0.0
      %v3935 = vpack.c.bf16 %v3918, %v3917
      %v3936 = vpack.c.bf16 %v3920, %v3919
      %v3937 = vpack.c.bf16 %v3922, %v3921
      %v3938 = vpack.c.bf16 %v3924, %v3923
      %v3939 = vpack.c.bf16 %v3926, %v3925
      %v3940 = vpack.c.bf16 %v3928, %v3927
      %v3941 = vpack.c.bf16 %v3930, %v3929
      %v3942 = vpack.c.bf16 %v3932, %v3931
      %v3943 = vpack.c.bf16 %v3934, %v3933
      %v3944 = vld [vmem:[%s6] sm:$0xf]
      %v3945 = vld [vmem:[%s6 + $0x4] sm:$0xf]
      %v3946 = vld [vmem:[%s6 + $0x8] sm:$0xf]
      %v3947 = vld [vmem:[%s6 + $0xc] sm:$0xf]
      %v3948 = vld [vmem:[%s6 + $0x10] sm:$0xf]
      %v3949 = vld [vmem:[%s6 + $0x14] sm:$0xf]
      %v3950 = vld [vmem:[%s6 + $0x18] sm:$0xf]
      %v3951 = vld [vmem:[%s6 + $0x1c] sm:$0xf]
      %v3952 = vld [vmem:[%s6 + $0x20] sm:$0xf]
      %v3953 = vld [vmem:[%s6 + $0x24] sm:$0xf]
      %v3954 = vld [vmem:[%s6 + $0x28] sm:$0xf]
      %v3955 = vld [vmem:[%s6 + $0x2c] sm:$0xf]
      %v3956 = vld [vmem:[%s6 + $0x30] sm:$0xf]
      %v3957 = vld [vmem:[%s6 + $0x34] sm:$0xf]
      %v3958 = vld [vmem:[%s6 + $0x38] sm:$0xf]
      %v3959 = vld [vmem:[%s6 + $0x3c] sm:$0xf]
      %s3960 = scalar_lea.vmem %s6, 64
      %v3961 = vld [vmem:[%s3960] sm:$0xf]
      %v3962 = vld [vmem:[%s3960 + $0x4] sm:$0xf]
      %v3963 = vld [vmem:[%s3960 + $0x8] sm:$0xf]
      %v3964 = vld [vmem:[%s3960 + $0xc] sm:$0xf]
      %v3965 = vld [vmem:[%s3960 + $0x10] sm:$0xf]
      %v3966 = vld [vmem:[%s3960 + $0x14] sm:$0xf]
      %v3967 = vld [vmem:[%s3960 + $0x18] sm:$0xf]
      %v3968 = vld [vmem:[%s3960 + $0x1c] sm:$0xf]
      %v3969 = vld [vmem:[%s3960 + $0x20] sm:$0xf]
      %v3970 = vld [vmem:[%s3960 + $0x24] sm:$0xf]
      %v3971 = vld [vmem:[%s3960 + $0x28] sm:$0xf]
      %v3972 = vld [vmem:[%s3960 + $0x2c] sm:$0xf]
      %v3973 = vld [vmem:[%s3960 + $0x30] sm:$0xf]
      %v3974 = vld [vmem:[%s3960 + $0x34] sm:$0xf]
      %v3975 = vld [vmem:[%s3960 + $0x38] sm:$0xf]
      %v3976 = vld [vmem:[%s3960 + $0x3c] sm:$0xf]
      %v3993 = vunpack.c.l.b16 %v3961
      %v3994 = vunpack.c.l.b16 %v3962
      %v3995 = vunpack.c.l.b16 %v3963
      %v3996 = vunpack.c.l.b16 %v3964
      %v3997 = vunpack.c.l.b16 %v3965
      %v3998 = vunpack.c.l.b16 %v3966
      %v3999 = vunpack.c.l.b16 %v3967
      %v4000 = vunpack.c.l.b16 %v3968
      %v4001 = vunpack.c.l.b16 %v3969
      %v4002 = vunpack.c.l.b16 %v3970
      %v4003 = vunpack.c.l.b16 %v3971
      %v4004 = vunpack.c.l.b16 %v3972
      %v4005 = vunpack.c.l.b16 %v3973
      %v4006 = vunpack.c.l.b16 %v3974
      %v4007 = vunpack.c.l.b16 %v3975
      %v4008 = vunpack.c.l.b16 %v3976
      %v4009 = vpack.c.b16 %v3994, %v3993
      %v4010 = vpack.c.b16 %v3996, %v3995
      %v4011 = vpack.c.b16 %v3998, %v3997
      %v4012 = vpack.c.b16 %v4000, %v3999
      %v4013 = vpack.c.b16 %v4002, %v4001
      %v4014 = vpack.c.b16 %v4004, %v4003
      %v4015 = vpack.c.b16 %v4006, %v4005
      %v4016 = vpack.c.b16 %v4008, %v4007
      %4025 = vmatprep.subr.bf16.mxu0 0
      %4026 = vmatpush1.bf16.msra.mxu0 %v4009
      %4027 = vmatprep.subr.bf16.mxu0 0
      %4028 = vmatpush1.bf16.msra.mxu0 %v4010
      %4029 = vmatprep.subr.bf16.mxu0 0
      %4030 = vmatpush1.bf16.msra.mxu0 %v4011
      %4031 = vmatprep.subr.bf16.mxu0 0
      %4032 = vmatpush1.bf16.msra.mxu0 %v4012
      %4033 = vmatprep.subr.bf16.mxu0 0
      %4034 = vmatpush1.bf16.msra.mxu0 %v4013
      %4035 = vmatprep.subr.bf16.mxu0 0
      %4036 = vmatpush1.bf16.msra.mxu0 %v4014
      %4037 = vmatprep.subr.bf16.mxu0 0
      %4038 = vmatpush1.bf16.msra.mxu0 %v4015
      %4039 = vmatprep.subr.bf16.mxu0 0
      %4040 = vmatpush1.bf16.msra.mxu0 %v4016
      %4041 = vmatprep.subr.bf16.mxu0 0
      %4042 = vmatpush1.bf16.msra.mxu0 0
      %4043 = vmatprep.subr.bf16.mxu0 0
      %4044 = vmatpush1.bf16.msra.mxu0 0
      %4045 = vmatprep.subr.bf16.mxu0 0
      %4046 = vmatpush1.bf16.msra.mxu0 0
      %4047 = vmatprep.subr.bf16.mxu0 0
      %4048 = vmatpush1.bf16.msra.mxu0 0
      %4049 = vmatprep.subr.bf16.mxu0 0
      %4050 = vmatpush1.bf16.msra.mxu0 0
      %4051 = vmatprep.subr.bf16.mxu0 0
      %4052 = vmatpush1.bf16.msra.mxu0 0
      %4053 = vmatprep.subr.bf16.mxu0 0
      %4054 = vmatpush1.bf16.msra.mxu0 0
      %4055 = vmatprep.subr.bf16.mxu0 0
      %4056 = vmatpush1.bf16.msra.mxu0 0
      %4057 = vmatprep.mubr.bf16.mxu0 0
      %4058 = vmatmul.mubr.bf16.gmra.mrb[0].mxu0 %v3936
      %v4059 = vpop.f32.mrb[0].mxu0
      %v4060 = vadd.f32 0.0, %v4059
      %v4061 = vpop.f32.mrb[0].mxu0
      %v4062 = vpop.f32.mrb[0].mxu0
      %v4063 = vadd.f32 0.0, %v4062
      %v4064 = vpop.f32.mrb[0].mxu0
      %4065 = vdwg.mxu0
      %v4082 = vunpack.c.l.b16 %v3944
      %v4083 = vunpack.c.l.b16 %v3945
      %v4084 = vunpack.c.l.b16 %v3946
      %v4085 = vunpack.c.l.b16 %v3947
      %v4086 = vunpack.c.l.b16 %v3948
      %v4087 = vunpack.c.l.b16 %v3949
      %v4088 = vunpack.c.l.b16 %v3950
      %v4089 = vunpack.c.l.b16 %v3951
      %v4090 = vunpack.c.l.b16 %v3952
      %v4091 = vunpack.c.l.b16 %v3953
      %v4092 = vunpack.c.l.b16 %v3954
      %v4093 = vunpack.c.l.b16 %v3955
      %v4094 = vunpack.c.l.b16 %v3956
      %v4095 = vunpack.c.l.b16 %v3957
      %v4096 = vunpack.c.l.b16 %v3958
      %v4097 = vunpack.c.l.b16 %v3959
      %v4098 = vpack.c.b16 %v4083, %v4082
      %v4099 = vpack.c.b16 %v4085, %v4084
      %v4100 = vpack.c.b16 %v4087, %v4086
      %v4101 = vpack.c.b16 %v4089, %v4088
      %v4102 = vpack.c.b16 %v4091, %v4090
      %v4103 = vpack.c.b16 %v4093, %v4092
      %v4104 = vpack.c.b16 %v4095, %v4094
      %v4105 = vpack.c.b16 %v4097, %v4096
      %4114 = vmatprep.subr.bf16.mxu0 0
      %4115 = vmatpush1.bf16.msra.mxu0 %v4098
      %4116 = vmatprep.subr.bf16.mxu0 0
      %4117 = vmatpush1.bf16.msra.mxu0 %v4099
      %4118 = vmatprep.subr.bf16.mxu0 0
      %4119 = vmatpush1.bf16.msra.mxu0 %v4100
      %4120 = vmatprep.subr.bf16.mxu0 0
      %4121 = vmatpush1.bf16.msra.mxu0 %v4101
      %4122 = vmatprep.subr.bf16.mxu0 0
      %4123 = vmatpush1.bf16.msra.mxu0 %v4102
      %4124 = vmatprep.subr.bf16.mxu0 0
      %4125 = vmatpush1.bf16.msra.mxu0 %v4103
      %4126 = vmatprep.subr.bf16.mxu0 0
      %4127 = vmatpush1.bf16.msra.mxu0 %v4104
      %4128 = vmatprep.subr.bf16.mxu0 0
      %4129 = vmatpush1.bf16.msra.mxu0 %v4105
      %4130 = vmatprep.subr.bf16.mxu0 0
      %4131 = vmatpush1.bf16.msra.mxu0 0
      %4132 = vmatprep.subr.bf16.mxu0 0
      %4133 = vmatpush1.bf16.msra.mxu0 0
      %4134 = vmatprep.subr.bf16.mxu0 0
      %4135 = vmatpush1.bf16.msra.mxu0 0
      %4136 = vmatprep.subr.bf16.mxu0 0
      %4137 = vmatpush1.bf16.msra.mxu0 0
      %4138 = vmatprep.subr.bf16.mxu0 0
      %4139 = vmatpush1.bf16.msra.mxu0 0
      %4140 = vmatprep.subr.bf16.mxu0 0
      %4141 = vmatpush1.bf16.msra.mxu0 0
      %4142 = vmatprep.subr.bf16.mxu0 0
      %4143 = vmatpush1.bf16.msra.mxu0 0
      %4144 = vmatprep.subr.bf16.mxu0 0
      %4145 = vmatpush1.bf16.msra.mxu0 0
      %4146 = vmatprep.mubr.bf16.mxu0 0
      %4147 = vmatmul.mubr.bf16.gmra.mrb[0].mxu0 %v3935
      %v4148 = vpop.f32.mrb[0].mxu0
      %v4149 = vadd.f32 %v4060, %v4148
      %v4150 = vpop.f32.mrb[0].mxu0
      %v4151 = vpop.f32.mrb[0].mxu0
      %v4152 = vadd.f32 %v4063, %v4151
      %v4153 = vpop.f32.mrb[0].mxu0
      %4154 = vdwg.mxu0
      %s4155 = scalar_lea.vmem %s6, 128
      %v4156 = vld [vmem:[%s4155] sm:$0xf]
      %v4157 = vld [vmem:[%s4155 + $0x4] sm:$0xf]
      %v4158 = vld [vmem:[%s4155 + $0x8] sm:$0xf]
      %v4159 = vld [vmem:[%s4155 + $0xc] sm:$0xf]
      %v4160 = vld [vmem:[%s4155 + $0x10] sm:$0xf]
      %v4161 = vld [vmem:[%s4155 + $0x14] sm:$0xf]
      %v4162 = vld [vmem:[%s4155 + $0x18] sm:$0xf]
      %v4163 = vld [vmem:[%s4155 + $0x1c] sm:$0xf]
      %v4164 = vld [vmem:[%s4155 + $0x20] sm:$0xf]
      %v4165 = vld [vmem:[%s4155 + $0x24] sm:$0xf]
      %v4166 = vld [vmem:[%s4155 + $0x28] sm:$0xf]
      %v4167 = vld [vmem:[%s4155 + $0x2c] sm:$0xf]
      %v4168 = vld [vmem:[%s4155 + $0x30] sm:$0xf]
      %v4169 = vld [vmem:[%s4155 + $0x34] sm:$0xf]
      %v4170 = vld [vmem:[%s4155 + $0x38] sm:$0xf]
      %v4171 = vld [vmem:[%s4155 + $0x3c] sm:$0xf]
      %v4188 = vunpack.c.l.b16 %v4156
      %v4189 = vunpack.c.l.b16 %v4157
      %v4190 = vunpack.c.l.b16 %v4158
      %v4191 = vunpack.c.l.b16 %v4159
      %v4192 = vunpack.c.l.b16 %v4160
      %v4193 = vunpack.c.l.b16 %v4161
      %v4194 = vunpack.c.l.b16 %v4162
      %v4195 = vunpack.c.l.b16 %v4163
      %v4196 = vunpack.c.l.b16 %v4164
      %v4197 = vunpack.c.l.b16 %v4165
      %v4198 = vunpack.c.l.b16 %v4166
      %v4199 = vunpack.c.l.b16 %v4167
      %v4200 = vunpack.c.l.b16 %v4168
      %v4201 = vunpack.c.l.b16 %v4169
      %v4202 = vunpack.c.l.b16 %v4170
      %v4203 = vunpack.c.l.b16 %v4171
      %v4204 = vpack.c.b16 %v4189, %v4188
      %v4205 = vpack.c.b16 %v4191, %v4190
      %v4206 = vpack.c.b16 %v4193, %v4192
      %v4207 = vpack.c.b16 %v4195, %v4194
      %v4208 = vpack.c.b16 %v4197, %v4196
      %v4209 = vpack.c.b16 %v4199, %v4198
      %v4210 = vpack.c.b16 %v4201, %v4200
      %v4211 = vpack.c.b16 %v4203, %v4202
      %4220 = vmatprep.subr.bf16.mxu0 0
      %4221 = vmatpush1.bf16.msra.mxu0 %v4204
      %4222 = vmatprep.subr.bf16.mxu0 0
      %4223 = vmatpush1.bf16.msra.mxu0 %v4205
      %4224 = vmatprep.subr.bf16.mxu0 0
      %4225 = vmatpush1.bf16.msra.mxu0 %v4206
      %4226 = vmatprep.subr.bf16.mxu0 0
      %4227 = vmatpush1.bf16.msra.mxu0 %v4207
      %4228 = vmatprep.subr.bf16.mxu0 0
      %4229 = vmatpush1.bf16.msra.mxu0 %v4208
      %4230 = vmatprep.subr.bf16.mxu0 0
      %4231 = vmatpush1.bf16.msra.mxu0 %v4209
      %4232 = vmatprep.subr.bf16.mxu0 0
      %4233 = vmatpush1.bf16.msra.mxu0 %v4210
      %4234 = vmatprep.subr.bf16.mxu0 0
      %4235 = vmatpush1.bf16.msra.mxu0 %v4211
      %4236 = vmatprep.subr.bf16.mxu0 0
      %4237 = vmatpush1.bf16.msra.mxu0 0
      %4238 = vmatprep.subr.bf16.mxu0 0
      %4239 = vmatpush1.bf16.msra.mxu0 0
      %4240 = vmatprep.subr.bf16.mxu0 0
      %4241 = vmatpush1.bf16.msra.mxu0 0
      %4242 = vmatprep.subr.bf16.mxu0 0
      %4243 = vmatpush1.bf16.msra.mxu0 0
      %4244 = vmatprep.subr.bf16.mxu0 0
      %4245 = vmatpush1.bf16.msra.mxu0 0
      %4246 = vmatprep.subr.bf16.mxu0 0
      %4247 = vmatpush1.bf16.msra.mxu0 0
      %4248 = vmatprep.subr.bf16.mxu0 0
      %4249 = vmatpush1.bf16.msra.mxu0 0
      %4250 = vmatprep.subr.bf16.mxu0 0
      %4251 = vmatpush1.bf16.msra.mxu0 0
      %4252 = vmatprep.mubr.bf16.mxu0 0
      %4253 = vmatmul.mubr.bf16.gmra.mrb[0].mxu0 %v3937
      %v4254 = vpop.f32.mrb[0].mxu0
      %v4255 = vadd.f32 0.0, %v4254
      %v4256 = vpop.f32.mrb[0].mxu0
      %v4257 = vpop.f32.mrb[0].mxu0
      %v4258 = vadd.f32 0.0, %v4257
      %v4259 = vpop.f32.mrb[0].mxu0
      %4260 = vdwg.mxu0
      %v4261 = vadd.f32 %v4149, %v4255
      %v4262 = vadd.f32 %v4152, %v4258
      %s4263 = scalar_lea.vmem %s6, 192
      %v4264 = vld [vmem:[%s4263] sm:$0xf]
      %v4265 = vld [vmem:[%s4263 + $0x4] sm:$0xf]
      %v4266 = vld [vmem:[%s4263 + $0x8] sm:$0xf]
      %v4267 = vld [vmem:[%s4263 + $0xc] sm:$0xf]
      %v4268 = vld [vmem:[%s4263 + $0x10] sm:$0xf]
      %v4269 = vld [vmem:[%s4263 + $0x14] sm:$0xf]
      %v4270 = vld [vmem:[%s4263 + $0x18] sm:$0xf]
      %v4271 = vld [vmem:[%s4263 + $0x1c] sm:$0xf]
      %v4272 = vld [vmem:[%s4263 + $0x20] sm:$0xf]
      %v4273 = vld [vmem:[%s4263 + $0x24] sm:$0xf]
      %v4274 = vld [vmem:[%s4263 + $0x28] sm:$0xf]
      %v4275 = vld [vmem:[%s4263 + $0x2c] sm:$0xf]
      %v4276 = vld [vmem:[%s4263 + $0x30] sm:$0xf]
      %v4277 = vld [vmem:[%s4263 + $0x34] sm:$0xf]
      %v4278 = vld [vmem:[%s4263 + $0x38] sm:$0xf]
      %v4279 = vld [vmem:[%s4263 + $0x3c] sm:$0xf]
      %v4296 = vunpack.c.l.b16 %v4264
      %v4297 = vunpack.c.l.b16 %v4265
      %v4298 = vunpack.c.l.b16 %v4266
      %v4299 = vunpack.c.l.b16 %v4267
      %v4300 = vunpack.c.l.b16 %v4268
      %v4301 = vunpack.c.l.b16 %v4269
      %v4302 = vunpack.c.l.b16 %v4270
      %v4303 = vunpack.c.l.b16 %v4271
      %v4304 = vunpack.c.l.b16 %v4272
      %v4305 = vunpack.c.l.b16 %v4273
      %v4306 = vunpack.c.l.b16 %v4274
      %v4307 = vunpack.c.l.b16 %v4275
      %v4308 = vunpack.c.l.b16 %v4276
      %v4309 = vunpack.c.l.b16 %v4277
      %v4310 = vunpack.c.l.b16 %v4278
      %v4311 = vunpack.c.l.b16 %v4279
      %v4312 = vpack.c.b16 %v4297, %v4296
      %v4313 = vpack.c.b16 %v4299, %v4298
      %v4314 = vpack.c.b16 %v4301, %v4300
      %v4315 = vpack.c.b16 %v4303, %v4302
      %v4316 = vpack.c.b16 %v4305, %v4304
      %v4317 = vpack.c.b16 %v4307, %v4306
      %v4318 = vpack.c.b16 %v4309, %v4308
      %v4319 = vpack.c.b16 %v4311, %v4310
      %4328 = vmatprep.subr.bf16.mxu0 0
      %4329 = vmatpush1.bf16.msra.mxu0 %v4312
      %4330 = vmatprep.subr.bf16.mxu0 0
      %4331 = vmatpush1.bf16.msra.mxu0 %v4313
      %4332 = vmatprep.subr.bf16.mxu0 0
      %4333 = vmatpush1.bf16.msra.mxu0 %v4314
      %4334 = vmatprep.subr.bf16.mxu0 0
      %4335 = vmatpush1.bf16.msra.mxu0 %v4315
      %4336 = vmatprep.subr.bf16.mxu0 0
      %4337 = vmatpush1.bf16.msra.mxu0 %v4316
      %4338 = vmatprep.subr.bf16.mxu0 0
      %4339 = vmatpush1.bf16.msra.mxu0 %v4317
      %4340 = vmatprep.subr.bf16.mxu0 0
      %4341 = vmatpush1.bf16.msra.mxu0 %v4318
      %4342 = vmatprep.subr.bf16.mxu0 0
      %4343 = vmatpush1.bf16.msra.mxu0 %v4319
      %4344 = vmatprep.subr.bf16.mxu0 0
      %4345 = vmatpush1.bf16.msra.mxu0 0
      %4346 = vmatprep.subr.bf16.mxu0 0
      %4347 = vmatpush1.bf16.msra.mxu0 0
      %4348 = vmatprep.subr.bf16.mxu0 0
      %4349 = vmatpush1.bf16.msra.mxu0 0
      %4350 = vmatprep.subr.bf16.mxu0 0
      %4351 = vmatpush1.bf16.msra.mxu0 0
      %4352 = vmatprep.subr.bf16.mxu0 0
      %4353 = vmatpush1.bf16.msra.mxu0 0
      %4354 = vmatprep.subr.bf16.mxu0 0
      %4355 = vmatpush1.bf16.msra.mxu0 0
      %4356 = vmatprep.subr.bf16.mxu0 0
      %4357 = vmatpush1.bf16.msra.mxu0 0
      %4358 = vmatprep.subr.bf16.mxu0 0
      %4359 = vmatpush1.bf16.msra.mxu0 0
      %4360 = vmatprep.mubr.bf16.mxu0 0
      %4361 = vmatmul.mubr.bf16.gmra.mrb[0].mxu0 %v3938
      %v4362 = vpop.f32.mrb[0].mxu0
      %v4363 = vadd.f32 0.0, %v4362
      %v4364 = vpop.f32.mrb[0].mxu0
      %v4365 = vpop.f32.mrb[0].mxu0
      %v4366 = vadd.f32 0.0, %v4365
      %v4367 = vpop.f32.mrb[0].mxu0
      %4368 = vdwg.mxu0
      %v4369 = vadd.f32 %v4261, %v4363
      %v4370 = vadd.f32 %v4262, %v4366
      %s4371 = scalar_lea.vmem %s6, 256
      %v4372 = vld [vmem:[%s4371] sm:$0xf]
      %v4373 = vld [vmem:[%s4371 + $0x4] sm:$0xf]
      %v4374 = vld [vmem:[%s4371 + $0x8] sm:$0xf]
      %v4375 = vld [vmem:[%s4371 + $0xc] sm:$0xf]
      %v4376 = vld [vmem:[%s4371 + $0x10] sm:$0xf]
      %v4377 = vld [vmem:[%s4371 + $0x14] sm:$0xf]
      %v4378 = vld [vmem:[%s4371 + $0x18] sm:$0xf]
      %v4379 = vld [vmem:[%s4371 + $0x1c] sm:$0xf]
      %v4380 = vld [vmem:[%s4371 + $0x20] sm:$0xf]
      %v4381 = vld [vmem:[%s4371 + $0x24] sm:$0xf]
      %v4382 = vld [vmem:[%s4371 + $0x28] sm:$0xf]
      %v4383 = vld [vmem:[%s4371 + $0x2c] sm:$0xf]
      %v4384 = vld [vmem:[%s4371 + $0x30] sm:$0xf]
      %v4385 = vld [vmem:[%s4371 + $0x34] sm:$0xf]
      %v4386 = vld [vmem:[%s4371 + $0x38] sm:$0xf]
      %v4387 = vld [vmem:[%s4371 + $0x3c] sm:$0xf]
      %v4404 = vunpack.c.l.b16 %v4372
      %v4405 = vunpack.c.l.b16 %v4373
      %v4406 = vunpack.c.l.b16 %v4374
      %v4407 = vunpack.c.l.b16 %v4375
      %v4408 = vunpack.c.l.b16 %v4376
      %v4409 = vunpack.c.l.b16 %v4377
      %v4410 = vunpack.c.l.b16 %v4378
      %v4411 = vunpack.c.l.b16 %v4379
      %v4412 = vunpack.c.l.b16 %v4380
      %v4413 = vunpack.c.l.b16 %v4381
      %v4414 = vunpack.c.l.b16 %v4382
      %v4415 = vunpack.c.l.b16 %v4383
      %v4416 = vunpack.c.l.b16 %v4384
      %v4417 = vunpack.c.l.b16 %v4385
      %v4418 = vunpack.c.l.b16 %v4386
      %v4419 = vunpack.c.l.b16 %v4387
      %v4420 = vpack.c.b16 %v4405, %v4404
      %v4421 = vpack.c.b16 %v4407, %v4406
      %v4422 = vpack.c.b16 %v4409, %v4408
      %v4423 = vpack.c.b16 %v4411, %v4410
      %v4424 = vpack.c.b16 %v4413, %v4412
      %v4425 = vpack.c.b16 %v4415, %v4414
      %v4426 = vpack.c.b16 %v4417, %v4416
      %v4427 = vpack.c.b16 %v4419, %v4418
      %4436 = vmatprep.subr.bf16.mxu0 0
      %4437 = vmatpush1.bf16.msra.mxu0 %v4420
      %4438 = vmatprep.subr.bf16.mxu0 0
      %4439 = vmatpush1.bf16.msra.mxu0 %v4421
      %4440 = vmatprep.subr.bf16.mxu0 0
      %4441 = vmatpush1.bf16.msra.mxu0 %v4422
      %4442 = vmatprep.subr.bf16.mxu0 0
      %4443 = vmatpush1.bf16.msra.mxu0 %v4423
      %4444 = vmatprep.subr.bf16.mxu0 0
      %4445 = vmatpush1.bf16.msra.mxu0 %v4424
      %4446 = vmatprep.subr.bf16.mxu0 0
      %4447 = vmatpush1.bf16.msra.mxu0 %v4425
      %4448 = vmatprep.subr.bf16.mxu0 0
      %4449 = vmatpush1.bf16.msra.mxu0 %v4426
      %4450 = vmatprep.subr.bf16.mxu0 0
      %4451 = vmatpush1.bf16.msra.mxu0 %v4427
      %4452 = vmatprep.subr.bf16.mxu0 0
      %4453 = vmatpush1.bf16.msra.mxu0 0
      %4454 = vmatprep.subr.bf16.mxu0 0
      %4455 = vmatpush1.bf16.msra.mxu0 0
      %4456 = vmatprep.subr.bf16.mxu0 0
      %4457 = vmatpush1.bf16.msra.mxu0 0
      %4458 = vmatprep.subr.bf16.mxu0 0
      %4459 = vmatpush1.bf16.msra.mxu0 0
      %4460 = vmatprep.subr.bf16.mxu0 0
      %4461 = vmatpush1.bf16.msra.mxu0 0
      %4462 = vmatprep.subr.bf16.mxu0 0
      %4463 = vmatpush1.bf16.msra.mxu0 0
      %4464 = vmatprep.subr.bf16.mxu0 0
      %4465 = vmatpush1.bf16.msra.mxu0 0
      %4466 = vmatprep.subr.bf16.mxu0 0
      %4467 = vmatpush1.bf16.msra.mxu0 0
      %4468 = vmatprep.mubr.bf16.mxu0 0
      %4469 = vmatmul.mubr.bf16.gmra.mrb[0].mxu0 %v3939
      %v4470 = vpop.f32.mrb[0].mxu0
      %v4471 = vadd.f32 0.0, %v4470
      %v4472 = vpop.f32.mrb[0].mxu0
      %v4473 = vpop.f32.mrb[0].mxu0
      %v4474 = vadd.f32 0.0, %v4473
      %v4475 = vpop.f32.mrb[0].mxu0
      %4476 = vdwg.mxu0
      %v4477 = vadd.f32 %v4369, %v4471
      %v4478 = vadd.f32 %v4370, %v4474
      %s4479 = scalar_lea.vmem %s6, 320
      %v4480 = vld [vmem:[%s4479] sm:$0xf]
      %v4481 = vld [vmem:[%s4479 + $0x4] sm:$0xf]
      %v4482 = vld [vmem:[%s4479 + $0x8] sm:$0xf]
      %v4483 = vld [vmem:[%s4479 + $0xc] sm:$0xf]
      %v4484 = vld [vmem:[%s4479 + $0x10] sm:$0xf]
      %v4485 = vld [vmem:[%s4479 + $0x14] sm:$0xf]
      %v4486 = vld [vmem:[%s4479 + $0x18] sm:$0xf]
      %v4487 = vld [vmem:[%s4479 + $0x1c] sm:$0xf]
      %v4488 = vld [vmem:[%s4479 + $0x20] sm:$0xf]
      %v4489 = vld [vmem:[%s4479 + $0x24] sm:$0xf]
      %v4490 = vld [vmem:[%s4479 + $0x28] sm:$0xf]
      %v4491 = vld [vmem:[%s4479 + $0x2c] sm:$0xf]
      %v4492 = vld [vmem:[%s4479 + $0x30] sm:$0xf]
      %v4493 = vld [vmem:[%s4479 + $0x34] sm:$0xf]
      %v4494 = vld [vmem:[%s4479 + $0x38] sm:$0xf]
      %v4495 = vld [vmem:[%s4479 + $0x3c] sm:$0xf]
      %v4512 = vunpack.c.l.b16 %v4480
      %v4513 = vunpack.c.l.b16 %v4481
      %v4514 = vunpack.c.l.b16 %v4482
      %v4515 = vunpack.c.l.b16 %v4483
      %v4516 = vunpack.c.l.b16 %v4484
      %v4517 = vunpack.c.l.b16 %v4485
      %v4518 = vunpack.c.l.b16 %v4486
      %v4519 = vunpack.c.l.b16 %v4487
      %v4520 = vunpack.c.l.b16 %v4488
      %v4521 = vunpack.c.l.b16 %v4489
      %v4522 = vunpack.c.l.b16 %v4490
      %v4523 = vunpack.c.l.b16 %v4491
      %v4524 = vunpack.c.l.b16 %v4492
      %v4525 = vunpack.c.l.b16 %v4493
      %v4526 = vunpack.c.l.b16 %v4494
      %v4527 = vunpack.c.l.b16 %v4495
      %v4528 = vpack.c.b16 %v4513, %v4512
      %v4529 = vpack.c.b16 %v4515, %v4514
      %v4530 = vpack.c.b16 %v4517, %v4516
      %v4531 = vpack.c.b16 %v4519, %v4518
      %v4532 = vpack.c.b16 %v4521, %v4520
      %v4533 = vpack.c.b16 %v4523, %v4522
      %v4534 = vpack.c.b16 %v4525, %v4524
      %v4535 = vpack.c.b16 %v4527, %v4526
      %4544 = vmatprep.subr.bf16.mxu0 0
      %4545 = vmatpush1.bf16.msra.mxu0 %v4528
      %4546 = vmatprep.subr.bf16.mxu0 0
      %4547 = vmatpush1.bf16.msra.mxu0 %v4529
      %4548 = vmatprep.subr.bf16.mxu0 0
      %4549 = vmatpush1.bf16.msra.mxu0 %v4530
      %4550 = vmatprep.subr.bf16.mxu0 0
      %4551 = vmatpush1.bf16.msra.mxu0 %v4531
      %4552 = vmatprep.subr.bf16.mxu0 0
      %4553 = vmatpush1.bf16.msra.mxu0 %v4532
      %4554 = vmatprep.subr.bf16.mxu0 0
      %4555 = vmatpush1.bf16.msra.mxu0 %v4533
      %4556 = vmatprep.subr.bf16.mxu0 0
      %4557 = vmatpush1.bf16.msra.mxu0 %v4534
      %4558 = vmatprep.subr.bf16.mxu0 0
      %4559 = vmatpush1.bf16.msra.mxu0 %v4535
      %4560 = vmatprep.subr.bf16.mxu0 0
      %4561 = vmatpush1.bf16.msra.mxu0 0
      %4562 = vmatprep.subr.bf16.mxu0 0
      %4563 = vmatpush1.bf16.msra.mxu0 0
      %4564 = vmatprep.subr.bf16.mxu0 0
      %4565 = vmatpush1.bf16.msra.mxu0 0
      %4566 = vmatprep.subr.bf16.mxu0 0
      %4567 = vmatpush1.bf16.msra.mxu0 0
      %4568 = vmatprep.subr.bf16.mxu0 0
      %4569 = vmatpush1.bf16.msra.mxu0 0
      %4570 = vmatprep.subr.bf16.mxu0 0
      %4571 = vmatpush1.bf16.msra.mxu0 0
      %4572 = vmatprep.subr.bf16.mxu0 0
      %4573 = vmatpush1.bf16.msra.mxu0 0
      %4574 = vmatprep.subr.bf16.mxu0 0
      %4575 = vmatpush1.bf16.msra.mxu0 0
      %4576 = vmatprep.mubr.bf16.mxu0 0
      %4577 = vmatmul.mubr.bf16.gmra.mrb[0].mxu0 %v3940
      %v4578 = vpop.f32.mrb[0].mxu0
      %v4579 = vadd.f32 0.0, %v4578
      %v4580 = vpop.f32.mrb[0].mxu0
      %v4581 = vpop.f32.mrb[0].mxu0
      %v4582 = vadd.f32 0.0, %v4581
      %v4583 = vpop.f32.mrb[0].mxu0
      %4584 = vdwg.mxu0
      %v4585 = vadd.f32 %v4477, %v4579
      %v4586 = vadd.f32 %v4478, %v4582
      %s4587 = scalar_lea.vmem %s6, 384
      %v4588 = vld [vmem:[%s4587] sm:$0xf]
      %v4589 = vld [vmem:[%s4587 + $0x4] sm:$0xf]
      %v4590 = vld [vmem:[%s4587 + $0x8] sm:$0xf]
      %v4591 = vld [vmem:[%s4587 + $0xc] sm:$0xf]
      %v4592 = vld [vmem:[%s4587 + $0x10] sm:$0xf]
      %v4593 = vld [vmem:[%s4587 + $0x14] sm:$0xf]
      %v4594 = vld [vmem:[%s4587 + $0x18] sm:$0xf]
      %v4595 = vld [vmem:[%s4587 + $0x1c] sm:$0xf]
      %v4596 = vld [vmem:[%s4587 + $0x20] sm:$0xf]
      %v4597 = vld [vmem:[%s4587 + $0x24] sm:$0xf]
      %v4598 = vld [vmem:[%s4587 + $0x28] sm:$0xf]
      %v4599 = vld [vmem:[%s4587 + $0x2c] sm:$0xf]
      %v4600 = vld [vmem:[%s4587 + $0x30] sm:$0xf]
      %v4601 = vld [vmem:[%s4587 + $0x34] sm:$0xf]
      %v4602 = vld [vmem:[%s4587 + $0x38] sm:$0xf]
      %v4603 = vld [vmem:[%s4587 + $0x3c] sm:$0xf]
      %v4620 = vunpack.c.l.b16 %v4588
      %v4621 = vunpack.c.l.b16 %v4589
      %v4622 = vunpack.c.l.b16 %v4590
      %v4623 = vunpack.c.l.b16 %v4591
      %v4624 = vunpack.c.l.b16 %v4592
      %v4625 = vunpack.c.l.b16 %v4593
      %v4626 = vunpack.c.l.b16 %v4594
      %v4627 = vunpack.c.l.b16 %v4595
      %v4628 = vunpack.c.l.b16 %v4596
      %v4629 = vunpack.c.l.b16 %v4597
      %v4630 = vunpack.c.l.b16 %v4598
      %v4631 = vunpack.c.l.b16 %v4599
      %v4632 = vunpack.c.l.b16 %v4600
      %v4633 = vunpack.c.l.b16 %v4601
      %v4634 = vunpack.c.l.b16 %v4602
      %v4635 = vunpack.c.l.b16 %v4603
      %v4636 = vpack.c.b16 %v4621, %v4620
      %v4637 = vpack.c.b16 %v4623, %v4622
      %v4638 = vpack.c.b16 %v4625, %v4624
      %v4639 = vpack.c.b16 %v4627, %v4626
      %v4640 = vpack.c.b16 %v4629, %v4628
      %v4641 = vpack.c.b16 %v4631, %v4630
      %v4642 = vpack.c.b16 %v4633, %v4632
      %v4643 = vpack.c.b16 %v4635, %v4634
      %4652 = vmatprep.subr.bf16.mxu0 0
      %4653 = vmatpush1.bf16.msra.mxu0 %v4636
      %4654 = vmatprep.subr.bf16.mxu0 0
      %4655 = vmatpush1.bf16.msra.mxu0 %v4637
      %4656 = vmatprep.subr.bf16.mxu0 0
      %4657 = vmatpush1.bf16.msra.mxu0 %v4638
      %4658 = vmatprep.subr.bf16.mxu0 0
      %4659 = vmatpush1.bf16.msra.mxu0 %v4639
      %4660 = vmatprep.subr.bf16.mxu0 0
      %4661 = vmatpush1.bf16.msra.mxu0 %v4640
      %4662 = vmatprep.subr.bf16.mxu0 0
      %4663 = vmatpush1.bf16.msra.mxu0 %v4641
      %4664 = vmatprep.subr.bf16.mxu0 0
      %4665 = vmatpush1.bf16.msra.mxu0 %v4642
      %4666 = vmatprep.subr.bf16.mxu0 0
      %4667 = vmatpush1.bf16.msra.mxu0 %v4643
      %4668 = vmatprep.subr.bf16.mxu0 0
      %4669 = vmatpush1.bf16.msra.mxu0 0
      %4670 = vmatprep.subr.bf16.mxu0 0
      %4671 = vmatpush1.bf16.msra.mxu0 0
      %4672 = vmatprep.subr.bf16.mxu0 0
      %4673 = vmatpush1.bf16.msra.mxu0 0
      %4674 = vmatprep.subr.bf16.mxu0 0
      %4675 = vmatpush1.bf16.msra.mxu0 0
      %4676 = vmatprep.subr.bf16.mxu0 0
      %4677 = vmatpush1.bf16.msra.mxu0 0
      %4678 = vmatprep.subr.bf16.mxu0 0
      %4679 = vmatpush1.bf16.msra.mxu0 0
      %4680 = vmatprep.subr.bf16.mxu0 0
      %4681 = vmatpush1.bf16.msra.mxu0 0
      %4682 = vmatprep.subr.bf16.mxu0 0
      %4683 = vmatpush1.bf16.msra.mxu0 0
      %4684 = vmatprep.mubr.bf16.mxu0 0
      %4685 = vmatmul.mubr.bf16.gmra.mrb[0].mxu0 %v3941
      %v4686 = vpop.f32.mrb[0].mxu0
      %v4687 = vadd.f32 0.0, %v4686
      %v4688 = vpop.f32.mrb[0].mxu0
      %v4689 = vpop.f32.mrb[0].mxu0
      %v4690 = vadd.f32 0.0, %v4689
      %v4691 = vpop.f32.mrb[0].mxu0
      %4692 = vdwg.mxu0
      %v4693 = vadd.f32 %v4585, %v4687
      %v4694 = vadd.f32 %v4586, %v4690
      %s4695 = scalar_lea.vmem %s6, 448
      %v4696 = vld [vmem:[%s4695] sm:$0xf]
      %v4697 = vld [vmem:[%s4695 + $0x4] sm:$0xf]
      %v4698 = vld [vmem:[%s4695 + $0x8] sm:$0xf]
      %v4699 = vld [vmem:[%s4695 + $0xc] sm:$0xf]
      %v4700 = vld [vmem:[%s4695 + $0x10] sm:$0xf]
      %v4701 = vld [vmem:[%s4695 + $0x14] sm:$0xf]
      %v4702 = vld [vmem:[%s4695 + $0x18] sm:$0xf]
      %v4703 = vld [vmem:[%s4695 + $0x1c] sm:$0xf]
      %v4704 = vld [vmem:[%s4695 + $0x20] sm:$0xf]
      %v4705 = vld [vmem:[%s4695 + $0x24] sm:$0xf]
      %v4706 = vld [vmem:[%s4695 + $0x28] sm:$0xf]
      %v4707 = vld [vmem:[%s4695 + $0x2c] sm:$0xf]
      %v4708 = vld [vmem:[%s4695 + $0x30] sm:$0xf]
      %v4709 = vld [vmem:[%s4695 + $0x34] sm:$0xf]
      %v4710 = vld [vmem:[%s4695 + $0x38] sm:$0xf]
      %v4711 = vld [vmem:[%s4695 + $0x3c] sm:$0xf]
      %v4728 = vunpack.c.l.b16 %v4696
      %v4729 = vunpack.c.l.b16 %v4697
      %v4730 = vunpack.c.l.b16 %v4698
      %v4731 = vunpack.c.l.b16 %v4699
      %v4732 = vunpack.c.l.b16 %v4700
      %v4733 = vunpack.c.l.b16 %v4701
      %v4734 = vunpack.c.l.b16 %v4702
      %v4735 = vunpack.c.l.b16 %v4703
      %v4736 = vunpack.c.l.b16 %v4704
      %v4737 = vunpack.c.l.b16 %v4705
      %v4738 = vunpack.c.l.b16 %v4706
      %v4739 = vunpack.c.l.b16 %v4707
      %v4740 = vunpack.c.l.b16 %v4708
      %v4741 = vunpack.c.l.b16 %v4709
      %v4742 = vunpack.c.l.b16 %v4710
      %v4743 = vunpack.c.l.b16 %v4711
      %v4744 = vpack.c.b16 %v4729, %v4728
      %v4745 = vpack.c.b16 %v4731, %v4730
      %v4746 = vpack.c.b16 %v4733, %v4732
      %v4747 = vpack.c.b16 %v4735, %v4734
      %v4748 = vpack.c.b16 %v4737, %v4736
      %v4749 = vpack.c.b16 %v4739, %v4738
      %v4750 = vpack.c.b16 %v4741, %v4740
      %v4751 = vpack.c.b16 %v4743, %v4742
      %4760 = vmatprep.subr.bf16.mxu0 0
      %4761 = vmatpush1.bf16.msra.mxu0 %v4744
      %4762 = vmatprep.subr.bf16.mxu0 0
      %4763 = vmatpush1.bf16.msra.mxu0 %v4745
      %4764 = vmatprep.subr.bf16.mxu0 0
      %4765 = vmatpush1.bf16.msra.mxu0 %v4746
      %4766 = vmatprep.subr.bf16.mxu0 0
      %4767 = vmatpush1.bf16.msra.mxu0 %v4747
      %4768 = vmatprep.subr.bf16.mxu0 0
      %4769 = vmatpush1.bf16.msra.mxu0 %v4748
      %4770 = vmatprep.subr.bf16.mxu0 0
      %4771 = vmatpush1.bf16.msra.mxu0 %v4749
      %4772 = vmatprep.subr.bf16.mxu0 0
      %4773 = vmatpush1.bf16.msra.mxu0 %v4750
      %4774 = vmatprep.subr.bf16.mxu0 0
      %4775 = vmatpush1.bf16.msra.mxu0 %v4751
      %4776 = vmatprep.subr.bf16.mxu0 0
      %4777 = vmatpush1.bf16.msra.mxu0 0
      %4778 = vmatprep.subr.bf16.mxu0 0
      %4779 = vmatpush1.bf16.msra.mxu0 0
      %4780 = vmatprep.subr.bf16.mxu0 0
      %4781 = vmatpush1.bf16.msra.mxu0 0
      %4782 = vmatprep.subr.bf16.mxu0 0
      %4783 = vmatpush1.bf16.msra.mxu0 0
      %4784 = vmatprep.subr.bf16.mxu0 0
      %4785 = vmatpush1.bf16.msra.mxu0 0
      %4786 = vmatprep.subr.bf16.mxu0 0
      %4787 = vmatpush1.bf16.msra.mxu0 0
      %4788 = vmatprep.subr.bf16.mxu0 0
      %4789 = vmatpush1.bf16.msra.mxu0 0
      %4790 = vmatprep.subr.bf16.mxu0 0
      %4791 = vmatpush1.bf16.msra.mxu0 0
      %4792 = vmatprep.mubr.bf16.mxu0 0
      %4793 = vmatmul.mubr.bf16.gmra.mrb[0].mxu0 %v3942
      %v4794 = vpop.f32.mrb[0].mxu0
      %v4795 = vadd.f32 0.0, %v4794
      %v4796 = vpop.f32.mrb[0].mxu0
      %v4797 = vpop.f32.mrb[0].mxu0
      %v4798 = vadd.f32 0.0, %v4797
      %v4799 = vpop.f32.mrb[0].mxu0
      %4800 = vdwg.mxu0
      %v4801 = vadd.f32 %v4693, %v4795
      %v4802 = vadd.f32 %v4694, %v4798
      %s4803 = scalar_lea.vmem %s6, 512
      %v4804 = vld [vmem:[%s4803] sm:$0xf]
      %v4805 = vld [vmem:[%s4803 + $0x4] sm:$0xf]
      %v4806 = vld [vmem:[%s4803 + $0x8] sm:$0xf]
      %v4807 = vld [vmem:[%s4803 + $0xc] sm:$0xf]
      %v4808 = vld [vmem:[%s4803 + $0x10] sm:$0xf]
      %v4809 = vld [vmem:[%s4803 + $0x14] sm:$0xf]
      %v4810 = vld [vmem:[%s4803 + $0x18] sm:$0xf]
      %v4811 = vld [vmem:[%s4803 + $0x1c] sm:$0xf]
      %v4812 = vld [vmem:[%s4803 + $0x20] sm:$0xf]
      %v4813 = vld [vmem:[%s4803 + $0x24] sm:$0xf]
      %v4814 = vld [vmem:[%s4803 + $0x28] sm:$0xf]
      %v4815 = vld [vmem:[%s4803 + $0x2c] sm:$0xf]
      %v4816 = vld [vmem:[%s4803 + $0x30] sm:$0xf]
      %v4817 = vld [vmem:[%s4803 + $0x34] sm:$0xf]
      %v4818 = vld [vmem:[%s4803 + $0x38] sm:$0xf]
      %v4819 = vld [vmem:[%s4803 + $0x3c] sm:$0xf]
      %v4836 = vunpack.c.l.b16 %v4804
      %v4837 = vunpack.c.l.b16 %v4805
      %v4838 = vunpack.c.l.b16 %v4806
      %v4839 = vunpack.c.l.b16 %v4807
      %v4840 = vunpack.c.l.b16 %v4808
      %v4841 = vunpack.c.l.b16 %v4809
      %v4842 = vunpack.c.l.b16 %v4810
      %v4843 = vunpack.c.l.b16 %v4811
      %v4844 = vunpack.c.l.b16 %v4812
      %v4845 = vunpack.c.l.b16 %v4813
      %v4846 = vunpack.c.l.b16 %v4814
      %v4847 = vunpack.c.l.b16 %v4815
      %v4848 = vunpack.c.l.b16 %v4816
      %v4849 = vunpack.c.l.b16 %v4817
      %v4850 = vunpack.c.l.b16 %v4818
      %v4851 = vunpack.c.l.b16 %v4819
      %v4852 = vpack.c.b16 %v4837, %v4836
      %v4853 = vpack.c.b16 %v4839, %v4838
      %v4854 = vpack.c.b16 %v4841, %v4840
      %v4855 = vpack.c.b16 %v4843, %v4842
      %v4856 = vpack.c.b16 %v4845, %v4844
      %v4857 = vpack.c.b16 %v4847, %v4846
      %v4858 = vpack.c.b16 %v4849, %v4848
      %v4859 = vpack.c.b16 %v4851, %v4850
      %4868 = vmatprep.subr.bf16.mxu0 0
      %4869 = vmatpush1.bf16.msra.mxu0 %v4852
      %4870 = vmatprep.subr.bf16.mxu0 0
      %4871 = vmatpush1.bf16.msra.mxu0 %v4853
      %4872 = vmatprep.subr.bf16.mxu0 0
      %4873 = vmatpush1.bf16.msra.mxu0 %v4854
      %4874 = vmatprep.subr.bf16.mxu0 0
      %4875 = vmatpush1.bf16.msra.mxu0 %v4855
      %4876 = vmatprep.subr.bf16.mxu0 0
      %4877 = vmatpush1.bf16.msra.mxu0 %v4856
      %4878 = vmatprep.subr.bf16.mxu0 0
      %4879 = vmatpush1.bf16.msra.mxu0 %v4857
      %4880 = vmatprep.subr.bf16.mxu0 0
      %4881 = vmatpush1.bf16.msra.mxu0 %v4858
      %4882 = vmatprep.subr.bf16.mxu0 0
      %4883 = vmatpush1.bf16.msra.mxu0 %v4859
      %4884 = vmatprep.subr.bf16.mxu0 0
      %4885 = vmatpush1.bf16.msra.mxu0 0
      %4886 = vmatprep.subr.bf16.mxu0 0
      %4887 = vmatpush1.bf16.msra.mxu0 0
      %4888 = vmatprep.subr.bf16.mxu0 0
      %4889 = vmatpush1.bf16.msra.mxu0 0
      %4890 = vmatprep.subr.bf16.mxu0 0
      %4891 = vmatpush1.bf16.msra.mxu0 0
      %4892 = vmatprep.subr.bf16.mxu0 0
      %4893 = vmatpush1.bf16.msra.mxu0 0
      %4894 = vmatprep.subr.bf16.mxu0 0
      %4895 = vmatpush1.bf16.msra.mxu0 0
      %4896 = vmatprep.subr.bf16.mxu0 0
      %4897 = vmatpush1.bf16.msra.mxu0 0
      %4898 = vmatprep.subr.bf16.mxu0 0
      %4899 = vmatpush1.bf16.msra.mxu0 0
      %4900 = vmatprep.mubr.bf16.mxu0 0
      %4901 = vmatmul.mubr.bf16.gmra.mrb[0].mxu0 %v3943
      %v4902 = vpop.f32.mrb[0].mxu0
      %v4903 = vadd.f32 0.0, %v4902
      %v4904 = vpop.f32.mrb[0].mxu0
      %v4905 = vpop.f32.mrb[0].mxu0
      %v4906 = vadd.f32 0.0, %v4905
      %v4907 = vpop.f32.mrb[0].mxu0
      %4908 = vdwg.mxu0
      %v4909 = vadd.f32 %v4801, %v4903
      %v4910 = vadd.f32 %v4802, %v4906
      %v4911 = vld [vmem:[%s7] sm:$0x1]
      %v4913 = vlaneseq
      %v4914 = vshrl.u32 %v4913, 7
      %v4915 = vsub.s32 0, %v4914
      %v4916 = vrot.slane %v4911, %v4915
      %v4918 = vadd.f32 %v4909, %v4916
      %v4919 = vadd.f32 %v4910, %v4916
      %v4920 = vmax.f32 %v4918, 0.0
      %v4921 = vmax.f32 %v4919, 0.0
      %v4922 = vpack.c.bf16 %v4921, %v4920
      %v4923 = vld [vmem:[%s8] sm:$0xf]
      %vm4924 = vcmask 130048
      %v4926 = vsel %vm4924, %v4923, 0
      %4928 = vmatprep.subr.bf16.mxu0 0
      %4929 = vmatpush1.bf16.msra.mxu0 %v4922
      %4930 = vmatprep.subr.bf16.mxu0 0
      %4931 = vmatpush1.bf16.msra.mxu0 0
      %4932 = vmatprep.subr.bf16.mxu0 0
      %4933 = vmatpush1.bf16.msra.mxu0 0
      %4934 = vmatprep.subr.bf16.mxu0 0
      %4935 = vmatpush1.bf16.msra.mxu0 0
      %4936 = vmatprep.subr.bf16.mxu0 0
      %4937 = vmatpush1.bf16.msra.mxu0 0
      %4938 = vmatprep.subr.bf16.mxu0 0
      %4939 = vmatpush1.bf16.msra.mxu0 0
      %4940 = vmatprep.subr.bf16.mxu0 0
      %4941 = vmatpush1.bf16.msra.mxu0 0
      %4942 = vmatprep.subr.bf16.mxu0 0
      %4943 = vmatpush1.bf16.msra.mxu0 0
      %4944 = vmatprep.subr.bf16.mxu0 0
      %4945 = vmatpush1.bf16.msra.mxu0 0
      %4946 = vmatprep.subr.bf16.mxu0 0
      %4947 = vmatpush1.bf16.msra.mxu0 0
      %4948 = vmatprep.subr.bf16.mxu0 0
      %4949 = vmatpush1.bf16.msra.mxu0 0
      %4950 = vmatprep.subr.bf16.mxu0 0
      %4951 = vmatpush1.bf16.msra.mxu0 0
      %4952 = vmatprep.subr.bf16.mxu0 0
      %4953 = vmatpush1.bf16.msra.mxu0 0
      %4954 = vmatprep.subr.bf16.mxu0 0
      %4955 = vmatpush1.bf16.msra.mxu0 0
      %4956 = vmatprep.subr.bf16.mxu0 0
      %4957 = vmatpush1.bf16.msra.mxu0 0
      %4958 = vmatprep.subr.bf16.mxu0 0
      %4959 = vmatpush1.bf16.msra.mxu0 0
      %4960 = vmatprep.mubr.bf16.mxu0 0
      %4961 = vmatmul.mubr.bf16.gmra.mrb[0].mxu0 %v4926
      %v4962 = vpop.f32.mrb[0].mxu0
      %v4963 = vadd.f32 0.0, %v4962
      %v4964 = vpop.f32.mrb[0].mxu0
      %v4965 = vpop.f32.mrb[0].mxu0
      %v4966 = vpop.f32.mrb[0].mxu0
      %4967 = vdwg.mxu0
      %v4968 = vpack.c.bf16 %v4963, %v4963
      %v4969 = vld [vmem:[%s588] sm:$0xff]
      %v4970 = vpack.c.bf16 %v4969, %v4969
      %v4971 = vld [vmem:[%s9] sm:$0xf]
      %v4972 = vld [vmem:[%s9 + $0x4] sm:$0xf]
      %v4973 = vld [vmem:[%s9 + $0x8] sm:$0xf]
      %v4974 = vld [vmem:[%s9 + $0xc] sm:$0xf]
      %v4975 = vld [vmem:[%s9 + $0x10] sm:$0xf]
      %v4976 = vld [vmem:[%s9 + $0x14] sm:$0xf]
      %v4977 = vld [vmem:[%s9 + $0x18] sm:$0xf]
      %v4978 = vld [vmem:[%s9 + $0x1c] sm:$0xf]
      %v4979 = vld [vmem:[%s9 + $0x20] sm:$0xf]
      %v4980 = vld [vmem:[%s9 + $0x24] sm:$0xf]
      %v4981 = vld [vmem:[%s9 + $0x28] sm:$0xf]
      %v4982 = vld [vmem:[%s9 + $0x2c] sm:$0xf]
      %v4983 = vld [vmem:[%s9 + $0x30] sm:$0xf]
      %v4984 = vld [vmem:[%s9 + $0x34] sm:$0xf]
      %v4985 = vld [vmem:[%s9 + $0x38] sm:$0xf]
      %v4986 = vld [vmem:[%s9 + $0x3c] sm:$0xf]
      %v4987 = vld [vmem:[%s10] sm:$0x1]
      %v4989 = vlaneseq
      %v4990 = vshrl.u32 %v4989, 7
      %v4991 = vsub.s32 0, %v4990
      %v4992 = vrot.slane %v4987, %v4991
      %v5010 = vunpack.c.l.b16 %v4971
      %v5011 = vunpack.c.l.b16 %v4972
      %v5012 = vunpack.c.l.b16 %v4973
      %v5013 = vunpack.c.l.b16 %v4974
      %v5014 = vunpack.c.l.b16 %v4975
      %v5015 = vunpack.c.l.b16 %v4976
      %v5016 = vunpack.c.l.b16 %v4977
      %v5017 = vunpack.c.l.b16 %v4978
      %v5018 = vunpack.c.l.b16 %v4979
      %v5019 = vunpack.c.l.b16 %v4980
      %v5020 = vunpack.c.l.b16 %v4981
      %v5021 = vunpack.c.l.b16 %v4982
      %v5022 = vunpack.c.l.b16 %v4983
      %v5023 = vunpack.c.l.b16 %v4984
      %v5024 = vunpack.c.l.b16 %v4985
      %v5025 = vunpack.c.l.b16 %v4986
      %v5026 = vpack.c.b16 %v5011, %v5010
      %v5027 = vpack.c.b16 %v5013, %v5012
      %v5028 = vpack.c.b16 %v5015, %v5014
      %v5029 = vpack.c.b16 %v5017, %v5016
      %v5030 = vpack.c.b16 %v5019, %v5018
      %v5031 = vpack.c.b16 %v5021, %v5020
      %v5032 = vpack.c.b16 %v5023, %v5022
      %v5033 = vpack.c.b16 %v5025, %v5024
      %5042 = vmatprep.subr.bf16.mxu0 0
      %5043 = vmatpush1.bf16.msra.mxu0 %v5026
      %5044 = vmatprep.subr.bf16.mxu0 0
      %5045 = vmatpush1.bf16.msra.mxu0 %v5027
      %5046 = vmatprep.subr.bf16.mxu0 0
      %5047 = vmatpush1.bf16.msra.mxu0 %v5028
      %5048 = vmatprep.subr.bf16.mxu0 0
      %5049 = vmatpush1.bf16.msra.mxu0 %v5029
      %5050 = vmatprep.subr.bf16.mxu0 0
      %5051 = vmatpush1.bf16.msra.mxu0 %v5030
      %5052 = vmatprep.subr.bf16.mxu0 0
      %5053 = vmatpush1.bf16.msra.mxu0 %v5031
      %5054 = vmatprep.subr.bf16.mxu0 0
      %5055 = vmatpush1.bf16.msra.mxu0 %v5032
      %5056 = vmatprep.subr.bf16.mxu0 0
      %5057 = vmatpush1.bf16.msra.mxu0 %v5033
      %5058 = vmatprep.subr.bf16.mxu0 0
      %5059 = vmatpush1.bf16.msra.mxu0 0
      %5060 = vmatprep.subr.bf16.mxu0 0
      %5061 = vmatpush1.bf16.msra.mxu0 0
      %5062 = vmatprep.subr.bf16.mxu0 0
      %5063 = vmatpush1.bf16.msra.mxu0 0
      %5064 = vmatprep.subr.bf16.mxu0 0
      %5065 = vmatpush1.bf16.msra.mxu0 0
      %5066 = vmatprep.subr.bf16.mxu0 0
      %5067 = vmatpush1.bf16.msra.mxu0 0
      %5068 = vmatprep.subr.bf16.mxu0 0
      %5069 = vmatpush1.bf16.msra.mxu0 0
      %5070 = vmatprep.subr.bf16.mxu0 0
      %5071 = vmatpush1.bf16.msra.mxu0 0
      %5072 = vmatprep.subr.bf16.mxu0 0
      %5073 = vmatpush1.bf16.msra.mxu0 0
      %5074 = vmatprep.mubr.bf16.mxu0 0
      %5075 = vmatmul.mubr.bf16.gmra.mrb[0].mxu0 %v4970
      %v5076 = vpop.f32.mrb[0].mxu0
      %v5077 = vadd.f32 %v4992, %v5076
      %v5078 = vpop.f32.mrb[0].mxu0
      %v5079 = vpop.f32.mrb[0].mxu0
      %v5080 = vpop.f32.mrb[0].mxu0
      %5081 = vdwg.mxu0
      %v5082 = vmax.f32 %v5077, 0.0
      %v5083 = vpack.c.bf16 %v5082, %v5082
      %v5084 = vld [vmem:[%s11] sm:$0xf]
      %v5085 = vld [vmem:[%s11 + $0x4] sm:$0xf]
      %v5086 = vld [vmem:[%s11 + $0x8] sm:$0xf]
      %v5087 = vld [vmem:[%s11 + $0xc] sm:$0xf]
      %v5088 = vld [vmem:[%s11 + $0x10] sm:$0xf]
      %v5089 = vld [vmem:[%s11 + $0x14] sm:$0xf]
      %v5090 = vld [vmem:[%s11 + $0x18] sm:$0xf]
      %v5091 = vld [vmem:[%s11 + $0x1c] sm:$0xf]
      %v5092 = vld [vmem:[%s11 + $0x20] sm:$0xf]
      %v5093 = vld [vmem:[%s11 + $0x24] sm:$0xf]
      %v5094 = vld [vmem:[%s11 + $0x28] sm:$0xf]
      %v5095 = vld [vmem:[%s11 + $0x2c] sm:$0xf]
      %v5096 = vld [vmem:[%s11 + $0x30] sm:$0xf]
      %v5097 = vld [vmem:[%s11 + $0x34] sm:$0xf]
      %v5098 = vld [vmem:[%s11 + $0x38] sm:$0xf]
      %v5099 = vld [vmem:[%s11 + $0x3c] sm:$0xf]
      %v5100 = vld [vmem:[%s12] sm:$0x1]
      %v5102 = vlaneseq
      %v5103 = vshrl.u32 %v5102, 7
      %v5104 = vsub.s32 0, %v5103
      %v5105 = vrot.slane %v5100, %v5104
      %v5123 = vunpack.c.l.b16 %v5084
      %v5124 = vunpack.c.l.b16 %v5085
      %v5125 = vunpack.c.l.b16 %v5086
      %v5126 = vunpack.c.l.b16 %v5087
      %v5127 = vunpack.c.l.b16 %v5088
      %v5128 = vunpack.c.l.b16 %v5089
      %v5129 = vunpack.c.l.b16 %v5090
      %v5130 = vunpack.c.l.b16 %v5091
      %v5131 = vunpack.c.l.b16 %v5092
      %v5132 = vunpack.c.l.b16 %v5093
      %v5133 = vunpack.c.l.b16 %v5094
      %v5134 = vunpack.c.l.b16 %v5095
      %v5135 = vunpack.c.l.b16 %v5096
      %v5136 = vunpack.c.l.b16 %v5097
      %v5137 = vunpack.c.l.b16 %v5098
      %v5138 = vunpack.c.l.b16 %v5099
      %v5139 = vpack.c.b16 %v5124, %v5123
      %v5140 = vpack.c.b16 %v5126, %v5125
      %v5141 = vpack.c.b16 %v5128, %v5127
      %v5142 = vpack.c.b16 %v5130, %v5129
      %v5143 = vpack.c.b16 %v5132, %v5131
      %v5144 = vpack.c.b16 %v5134, %v5133
      %v5145 = vpack.c.b16 %v5136, %v5135
      %v5146 = vpack.c.b16 %v5138, %v5137
      %5155 = vmatprep.subr.bf16.mxu0 0
      %5156 = vmatpush1.bf16.msra.mxu0 %v5139
      %5157 = vmatprep.subr.bf16.mxu0 0
      %5158 = vmatpush1.bf16.msra.mxu0 %v5140
      %5159 = vmatprep.subr.bf16.mxu0 0
      %5160 = vmatpush1.bf16.msra.mxu0 %v5141
      %5161 = vmatprep.subr.bf16.mxu0 0
      %5162 = vmatpush1.bf16.msra.mxu0 %v5142
      %5163 = vmatprep.subr.bf16.mxu0 0
      %5164 = vmatpush1.bf16.msra.mxu0 %v5143
      %5165 = vmatprep.subr.bf16.mxu0 0
      %5166 = vmatpush1.bf16.msra.mxu0 %v5144
      %5167 = vmatprep.subr.bf16.mxu0 0
      %5168 = vmatpush1.bf16.msra.mxu0 %v5145
      %5169 = vmatprep.subr.bf16.mxu0 0
      %5170 = vmatpush1.bf16.msra.mxu0 %v5146
      %5171 = vmatprep.subr.bf16.mxu0 0
      %5172 = vmatpush1.bf16.msra.mxu0 0
      %5173 = vmatprep.subr.bf16.mxu0 0
      %5174 = vmatpush1.bf16.msra.mxu0 0
      %5175 = vmatprep.subr.bf16.mxu0 0
      %5176 = vmatpush1.bf16.msra.mxu0 0
      %5177 = vmatprep.subr.bf16.mxu0 0
      %5178 = vmatpush1.bf16.msra.mxu0 0
      %5179 = vmatprep.subr.bf16.mxu0 0
      %5180 = vmatpush1.bf16.msra.mxu0 0
      %5181 = vmatprep.subr.bf16.mxu0 0
      %5182 = vmatpush1.bf16.msra.mxu0 0
      %5183 = vmatprep.subr.bf16.mxu0 0
      %5184 = vmatpush1.bf16.msra.mxu0 0
      %5185 = vmatprep.subr.bf16.mxu0 0
      %5186 = vmatpush1.bf16.msra.mxu0 0
      %5187 = vmatprep.mubr.bf16.mxu0 0
      %5188 = vmatmul.mubr.bf16.gmra.mrb[0].mxu0 %v5083
      %v5189 = vpop.f32.mrb[0].mxu0
      %v5190 = vadd.f32 %v5105, %v5189
      %v5191 = vpop.f32.mrb[0].mxu0
      %v5192 = vpop.f32.mrb[0].mxu0
      %v5193 = vpop.f32.mrb[0].mxu0
      %5194 = vdwg.mxu0
      %v5195 = vmax.f32 %v5190, 0.0
      %v5196 = vpack.c.bf16 %v5195, %v5195
      %v5197 = vld [vmem:[%s13] sm:$0xf]
      %v5198 = vld [vmem:[%s13 + $0x4] sm:$0xf]
      %v5199 = vld [vmem:[%s13 + $0x8] sm:$0xf]
      %v5200 = vld [vmem:[%s13 + $0xc] sm:$0xf]
      %v5201 = vld [vmem:[%s13 + $0x10] sm:$0xf]
      %v5202 = vld [vmem:[%s13 + $0x14] sm:$0xf]
      %v5203 = vld [vmem:[%s13 + $0x18] sm:$0xf]
      %v5204 = vld [vmem:[%s13 + $0x1c] sm:$0xf]
      %v5205 = vld [vmem:[%s13 + $0x20] sm:$0xf]
      %v5206 = vld [vmem:[%s13 + $0x24] sm:$0xf]
      %v5207 = vld [vmem:[%s13 + $0x28] sm:$0xf]
      %v5208 = vld [vmem:[%s13 + $0x2c] sm:$0xf]
      %v5209 = vld [vmem:[%s13 + $0x30] sm:$0xf]
      %v5210 = vld [vmem:[%s13 + $0x34] sm:$0xf]
      %v5211 = vld [vmem:[%s13 + $0x38] sm:$0xf]
      %v5212 = vld [vmem:[%s13 + $0x3c] sm:$0xf]
      %v5213 = vld [vmem:[%s14] sm:$0xf]
      %v5214 = vld [vmem:[%s14 + $0x4] sm:$0xf]
      %v5215 = vld [vmem:[%s14 + $0x8] sm:$0xf]
      %v5216 = vld [vmem:[%s14 + $0xc] sm:$0xf]
      %v5217 = vld [vmem:[%s14 + $0x10] sm:$0xf]
      %v5218 = vld [vmem:[%s14 + $0x14] sm:$0xf]
      %v5219 = vld [vmem:[%s14 + $0x18] sm:$0xf]
      %v5220 = vld [vmem:[%s14 + $0x1c] sm:$0xf]
      %v5221 = vld [vmem:[%s14 + $0x20] sm:$0xf]
      %v5222 = vld [vmem:[%s14 + $0x24] sm:$0xf]
      %v5223 = vld [vmem:[%s14 + $0x28] sm:$0xf]
      %v5224 = vld [vmem:[%s14 + $0x2c] sm:$0xf]
      %v5225 = vld [vmem:[%s14 + $0x30] sm:$0xf]
      %v5226 = vld [vmem:[%s14 + $0x34] sm:$0xf]
      %v5227 = vld [vmem:[%s14 + $0x38] sm:$0xf]
      %v5228 = vld [vmem:[%s14 + $0x3c] sm:$0xf]
      %v5245 = vunpack.c.l.b16 %v5213
      %v5246 = vunpack.c.l.b16 %v5214
      %v5247 = vunpack.c.l.b16 %v5215
      %v5248 = vunpack.c.l.b16 %v5216
      %v5249 = vunpack.c.l.b16 %v5217
      %v5250 = vunpack.c.l.b16 %v5218
      %v5251 = vunpack.c.l.b16 %v5219
      %v5252 = vunpack.c.l.b16 %v5220
      %v5253 = vunpack.c.l.b16 %v5221
      %v5254 = vunpack.c.l.b16 %v5222
      %v5255 = vunpack.c.l.b16 %v5223
      %v5256 = vunpack.c.l.b16 %v5224
      %v5257 = vunpack.c.l.b16 %v5225
      %v5258 = vunpack.c.l.b16 %v5226
      %v5259 = vunpack.c.l.b16 %v5227
      %v5260 = vunpack.c.l.b16 %v5228
      %v5261 = vpack.c.b16 %v5246, %v5245
      %v5262 = vpack.c.b16 %v5248, %v5247
      %v5263 = vpack.c.b16 %v5250, %v5249
      %v5264 = vpack.c.b16 %v5252, %v5251
      %v5265 = vpack.c.b16 %v5254, %v5253
      %v5266 = vpack.c.b16 %v5256, %v5255
      %v5267 = vpack.c.b16 %v5258, %v5257
      %v5268 = vpack.c.b16 %v5260, %v5259
      %5277 = vmatprep.subr.bf16.mxu0 0
      %5278 = vmatpush1.bf16.msra.mxu0 %v5261
      %5279 = vmatprep.subr.bf16.mxu0 0
      %5280 = vmatpush1.bf16.msra.mxu0 %v5262
      %5281 = vmatprep.subr.bf16.mxu0 0
      %5282 = vmatpush1.bf16.msra.mxu0 %v5263
      %5283 = vmatprep.subr.bf16.mxu0 0
      %5284 = vmatpush1.bf16.msra.mxu0 %v5264
      %5285 = vmatprep.subr.bf16.mxu0 0
      %5286 = vmatpush1.bf16.msra.mxu0 %v5265
      %5287 = vmatprep.subr.bf16.mxu0 0
      %5288 = vmatpush1.bf16.msra.mxu0 %v5266
      %5289 = vmatprep.subr.bf16.mxu0 0
      %5290 = vmatpush1.bf16.msra.mxu0 %v5267
      %5291 = vmatprep.subr.bf16.mxu0 0
      %5292 = vmatpush1.bf16.msra.mxu0 %v5268
      %5293 = vmatprep.subr.bf16.mxu0 0
      %5294 = vmatpush1.bf16.msra.mxu0 0
      %5295 = vmatprep.subr.bf16.mxu0 0
      %5296 = vmatpush1.bf16.msra.mxu0 0
      %5297 = vmatprep.subr.bf16.mxu0 0
      %5298 = vmatpush1.bf16.msra.mxu0 0
      %5299 = vmatprep.subr.bf16.mxu0 0
      %5300 = vmatpush1.bf16.msra.mxu0 0
      %5301 = vmatprep.subr.bf16.mxu0 0
      %5302 = vmatpush1.bf16.msra.mxu0 0
      %5303 = vmatprep.subr.bf16.mxu0 0
      %5304 = vmatpush1.bf16.msra.mxu0 0
      %5305 = vmatprep.subr.bf16.mxu0 0
      %5306 = vmatpush1.bf16.msra.mxu0 0
      %5307 = vmatprep.subr.bf16.mxu0 0
      %5308 = vmatpush1.bf16.msra.mxu0 0
      %5309 = vmatprep.mubr.bf16.mxu0 0
      %5310 = vmatmul.mubr.bf16.gmra.mrb[0].mxu0 %v4968
      %v5311 = vpop.f32.mrb[0].mxu0
      %v5312 = vadd.f32 0.0, %v5311
      %v5313 = vpop.f32.mrb[0].mxu0
      %v5314 = vpop.f32.mrb[0].mxu0
      %v5315 = vpop.f32.mrb[0].mxu0
      %5316 = vdwg.mxu0
      %v5333 = vunpack.c.l.b16 %v5197
      %v5334 = vunpack.c.l.b16 %v5198
      %v5335 = vunpack.c.l.b16 %v5199
      %v5336 = vunpack.c.l.b16 %v5200
      %v5337 = vunpack.c.l.b16 %v5201
      %v5338 = vunpack.c.l.b16 %v5202
      %v5339 = vunpack.c.l.b16 %v5203
      %v5340 = vunpack.c.l.b16 %v5204
      %v5341 = vunpack.c.l.b16 %v5205
      %v5342 = vunpack.c.l.b16 %v5206
      %v5343 = vunpack.c.l.b16 %v5207
      %v5344 = vunpack.c.l.b16 %v5208
      %v5345 = vunpack.c.l.b16 %v5209
      %v5346 = vunpack.c.l.b16 %v5210
      %v5347 = vunpack.c.l.b16 %v5211
      %v5348 = vunpack.c.l.b16 %v5212
      %v5349 = vpack.c.b16 %v5334, %v5333
      %v5350 = vpack.c.b16 %v5336, %v5335
      %v5351 = vpack.c.b16 %v5338, %v5337
      %v5352 = vpack.c.b16 %v5340, %v5339
      %v5353 = vpack.c.b16 %v5342, %v5341
      %v5354 = vpack.c.b16 %v5344, %v5343
      %v5355 = vpack.c.b16 %v5346, %v5345
      %v5356 = vpack.c.b16 %v5348, %v5347
      %5365 = vmatprep.subr.bf16.mxu0 0
      %5366 = vmatpush1.bf16.msra.mxu0 %v5349
      %5367 = vmatprep.subr.bf16.mxu0 0
      %5368 = vmatpush1.bf16.msra.mxu0 %v5350
      %5369 = vmatprep.subr.bf16.mxu0 0
      %5370 = vmatpush1.bf16.msra.mxu0 %v5351
      %5371 = vmatprep.subr.bf16.mxu0 0
      %5372 = vmatpush1.bf16.msra.mxu0 %v5352
      %5373 = vmatprep.subr.bf16.mxu0 0
      %5374 = vmatpush1.bf16.msra.mxu0 %v5353
      %5375 = vmatprep.subr.bf16.mxu0 0
      %5376 = vmatpush1.bf16.msra.mxu0 %v5354
      %5377 = vmatprep.subr.bf16.mxu0 0
      %5378 = vmatpush1.bf16.msra.mxu0 %v5355
      %5379 = vmatprep.subr.bf16.mxu0 0
      %5380 = vmatpush1.bf16.msra.mxu0 %v5356
      %5381 = vmatprep.subr.bf16.mxu0 0
      %5382 = vmatpush1.bf16.msra.mxu0 0
      %5383 = vmatprep.subr.bf16.mxu0 0
      %5384 = vmatpush1.bf16.msra.mxu0 0
      %5385 = vmatprep.subr.bf16.mxu0 0
      %5386 = vmatpush1.bf16.msra.mxu0 0
      %5387 = vmatprep.subr.bf16.mxu0 0
      %5388 = vmatpush1.bf16.msra.mxu0 0
      %5389 = vmatprep.subr.bf16.mxu0 0
      %5390 = vmatpush1.bf16.msra.mxu0 0
      %5391 = vmatprep.subr.bf16.mxu0 0
      %5392 = vmatpush1.bf16.msra.mxu0 0
      %5393 = vmatprep.subr.bf16.mxu0 0
      %5394 = vmatpush1.bf16.msra.mxu0 0
      %5395 = vmatprep.subr.bf16.mxu0 0
      %5396 = vmatpush1.bf16.msra.mxu0 0
      %5397 = vmatprep.mubr.bf16.mxu0 0
      %5398 = vmatmul.mubr.bf16.gmra.mrb[0].mxu0 %v5196
      %v5399 = vpop.f32.mrb[0].mxu0
      %v5400 = vadd.f32 %v5312, %v5399
      %v5401 = vpop.f32.mrb[0].mxu0
      %v5402 = vpop.f32.mrb[0].mxu0
      %v5403 = vpop.f32.mrb[0].mxu0
      %5404 = vdwg.mxu0
      %v5405 = vld [vmem:[%s15] sm:$0x1]
      %v5407 = vlaneseq
      %v5408 = vshrl.u32 %v5407, 7
      %v5409 = vsub.s32 0, %v5408
      %v5410 = vrot.slane %v5405, %v5409
      %v5412 = vadd.f32 %v5400, %v5410
      %v5413 = vmax.f32 %v5412, 0.0
      %v5414 = vpack.c.bf16 %v5413, %v5413
      %v5415 = vld [vmem:[%s16] sm:$0xf]
      %v5416 = vld [vmem:[%s16 + $0x4] sm:$0xf]
      %v5417 = vld [vmem:[%s16 + $0x8] sm:$0xf]
      %v5418 = vld [vmem:[%s16 + $0xc] sm:$0xf]
      %v5419 = vld [vmem:[%s16 + $0x10] sm:$0xf]
      %v5420 = vld [vmem:[%s16 + $0x14] sm:$0xf]
      %v5421 = vld [vmem:[%s16 + $0x18] sm:$0xf]
      %v5422 = vld [vmem:[%s16 + $0x1c] sm:$0xf]
      %v5423 = vld [vmem:[%s16 + $0x20] sm:$0xf]
      %v5424 = vld [vmem:[%s16 + $0x24] sm:$0xf]
      %v5425 = vld [vmem:[%s16 + $0x28] sm:$0xf]
      %v5426 = vld [vmem:[%s16 + $0x2c] sm:$0xf]
      %v5427 = vld [vmem:[%s16 + $0x30] sm:$0xf]
      %v5428 = vld [vmem:[%s16 + $0x34] sm:$0xf]
      %v5429 = vld [vmem:[%s16 + $0x38] sm:$0xf]
      %v5430 = vld [vmem:[%s16 + $0x3c] sm:$0xf]
      %v5431 = vld [vmem:[%s17] sm:$0x1]
      %v5433 = vlaneseq
      %v5434 = vshrl.u32 %v5433, 7
      %v5435 = vsub.s32 0, %v5434
      %v5436 = vrot.slane %v5431, %v5435
      %v5454 = vunpack.c.l.b16 %v5415
      %v5455 = vunpack.c.l.b16 %v5416
      %v5456 = vunpack.c.l.b16 %v5417
      %v5457 = vunpack.c.l.b16 %v5418
      %v5458 = vunpack.c.l.b16 %v5419
      %v5459 = vunpack.c.l.b16 %v5420
      %v5460 = vunpack.c.l.b16 %v5421
      %v5461 = vunpack.c.l.b16 %v5422
      %v5462 = vunpack.c.l.b16 %v5423
      %v5463 = vunpack.c.l.b16 %v5424
      %v5464 = vunpack.c.l.b16 %v5425
      %v5465 = vunpack.c.l.b16 %v5426
      %v5466 = vunpack.c.l.b16 %v5427
      %v5467 = vunpack.c.l.b16 %v5428
      %v5468 = vunpack.c.l.b16 %v5429
      %v5469 = vunpack.c.l.b16 %v5430
      %v5470 = vpack.c.b16 %v5455, %v5454
      %v5471 = vpack.c.b16 %v5457, %v5456
      %v5472 = vpack.c.b16 %v5459, %v5458
      %v5473 = vpack.c.b16 %v5461, %v5460
      %v5474 = vpack.c.b16 %v5463, %v5462
      %v5475 = vpack.c.b16 %v5465, %v5464
      %v5476 = vpack.c.b16 %v5467, %v5466
      %v5477 = vpack.c.b16 %v5469, %v5468
      %5486 = vmatprep.subr.bf16.mxu0 0
      %5487 = vmatpush1.bf16.msra.mxu0 %v5470
      %5488 = vmatprep.subr.bf16.mxu0 0
      %5489 = vmatpush1.bf16.msra.mxu0 %v5471
      %5490 = vmatprep.subr.bf16.mxu0 0
      %5491 = vmatpush1.bf16.msra.mxu0 %v5472
      %5492 = vmatprep.subr.bf16.mxu0 0
      %5493 = vmatpush1.bf16.msra.mxu0 %v5473
      %5494 = vmatprep.subr.bf16.mxu0 0
      %5495 = vmatpush1.bf16.msra.mxu0 %v5474
      %5496 = vmatprep.subr.bf16.mxu0 0
      %5497 = vmatpush1.bf16.msra.mxu0 %v5475
      %5498 = vmatprep.subr.bf16.mxu0 0
      %5499 = vmatpush1.bf16.msra.mxu0 %v5476
      %5500 = vmatprep.subr.bf16.mxu0 0
      %5501 = vmatpush1.bf16.msra.mxu0 %v5477
      %5502 = vmatprep.subr.bf16.mxu0 0
      %5503 = vmatpush1.bf16.msra.mxu0 0
      %5504 = vmatprep.subr.bf16.mxu0 0
      %5505 = vmatpush1.bf16.msra.mxu0 0
      %5506 = vmatprep.subr.bf16.mxu0 0
      %5507 = vmatpush1.bf16.msra.mxu0 0
      %5508 = vmatprep.subr.bf16.mxu0 0
      %5509 = vmatpush1.bf16.msra.mxu0 0
      %5510 = vmatprep.subr.bf16.mxu0 0
      %5511 = vmatpush1.bf16.msra.mxu0 0
      %5512 = vmatprep.subr.bf16.mxu0 0
      %5513 = vmatpush1.bf16.msra.mxu0 0
      %5514 = vmatprep.subr.bf16.mxu0 0
      %5515 = vmatpush1.bf16.msra.mxu0 0
      %5516 = vmatprep.subr.bf16.mxu0 0
      %5517 = vmatpush1.bf16.msra.mxu0 0
      %5518 = vmatprep.mubr.bf16.mxu0 0
      %5519 = vmatmul.mubr.bf16.gmra.mrb[0].mxu0 %v5414
      %v5520 = vpop.f32.mrb[0].mxu0
      %v5521 = vadd.f32 %v5436, %v5520
      %v5522 = vpop.f32.mrb[0].mxu0
      %v5523 = vpop.f32.mrb[0].mxu0
      %v5524 = vpop.f32.mrb[0].mxu0
      %5525 = vdwg.mxu0
      %5526 = vst [vmem:[%s592] sm:$0xff] %v5521
      %p5527 = scmp.lt.s32.totalorder %s29, 1
      %s5528 = scalar_select %p5527, %s29, 1
      %s5529 = smul.addr %s5528, 8
      %s5530 = scalar_lea.vmem %s18, %s5529
      // Predicated region
      $region93: #{multimodal_regnet_forward.1} parent=91 // pred_check
        %p5531 = pneg %p435
      $region94: #{multimodal_regnet_forward.1} parent=91 // pred_check_branch
        %5533 = sbr.rel (%p5531) target = $region96
      $region95: #{multimodal_regnet_forward.1} parent=91 // pred_region
        _
      $region96: #{multimodal_regnet_forward.1} parent=91 // pred_fallthru
        _
    $region92: #{multimodal_regnet_forward.1} parent=5 // pred_fallthru
      _
    %p5534 = scmp.le.s32.totalorder 2, %s24
    // Predicated region
    $region97: #{multimodal_regnet_forward.1} parent=5 // pred_check
      %p5535 = pneg %p5534
    $region98: #{multimodal_regnet_forward.1} parent=5 // pred_check_branch
      %5537 = sbr.rel (%p5535) target = $region100
    $region99: #{multimodal_regnet_forward.1} parent=5 // pred_region
      %s5538 = ssub.s32 %s24, 2
      // Predicated region
      $region101: #{multimodal_regnet_forward.1} parent=99 // pred_check
        %p5539 = pneg %p441
      $region102: #{multimodal_regnet_forward.1} parent=99 // pred_check_branch
        %5541 = sbr.rel (%p5539) target = $region104
      $region103: #{multimodal_regnet_forward.1} parent=99 // pred_region
        %p5542 = scmp.lt.s32.totalorder %s30, 1
        %s5543 = scalar_select %p5542, %s30, 1
        %s5544 = smul.addr %s5543, 8
        %s5545 = scalar_lea.vmem %s18, %s5544
      $region104: #{multimodal_regnet_forward.1} parent=99 // pred_fallthru
        _
    $region100: #{multimodal_regnet_forward.1} parent=5 // pred_fallthru
      _
  $region6: #{multimodal_regnet_forward.1} parent=0 // loop_footer
    %s28 = sadd.s32 1, %s24
  $region7: #{multimodal_regnet_forward.1} parent=0 // loop_footer_branch
    %23 = sbr.rel target = $region3
  $region8: #{multimodal_regnet_forward.1} parent=0 // loop_exit
    _

</llo_original>
